<compile_context>
chip_gen: v7x
topology: tpu7x:2x2x1
jax: 0.10.0
libtpu: 0.0.40
codegen_flags: <defaults>
</compile_context>

<pallas_src>
import math
import functools

import jax
import jax.numpy as jnp
from jax import lax
from jax.experimental import pallas as pl
from jax.experimental.pallas import tpu as pltpu


# ---------------------------------------------------------------------------
# In-kernel helpers (f32 math)
# ---------------------------------------------------------------------------
def _gelu(x):
    return 0.5 * x * (1.0 + jnp.tanh(math.sqrt(2.0 / math.pi) * (x + 0.044715 * x ** 3)))


def _layernorm(x, g, b, eps):
    u = jnp.mean(x, axis=-1, keepdims=True)
    s = jnp.mean((x - u) ** 2, axis=-1, keepdims=True)
    return g * ((x - u) * lax.rsqrt(s + eps)) + b


# ---------------------------------------------------------------------------
# Fused whole-model kernel: grid over layers, h resident in VMEM scratch.
# ---------------------------------------------------------------------------
def _elm_fused_kernel(h0_ref, wqkvt_ref, bqkvt_ref, wpr_ref, bpr_ref,
                      ln1g_ref, ln1b_ref, wfc_ref, bfc_ref,
                      wpr2_ref, bpr2_ref, ln2g_ref, ln2b_ref,
                      decwt_ref, es_ref, el_ref, vswt_ref, vlwt_ref, sel_ref,
                      sts_ref, logits_ref,
                      h_scr,
                      *, B, T, n_head, eps, beta):
    layer = pl.program_id(0)
    BT, D = h_scr.shape
    H = n_head
    hd = D // H
    scale = 1.0 / math.sqrt(hd)

    # Initialize the resident residual stream from the embedding sum.
    @pl.when(layer == 0)
    def _():
        h_scr[...] = h0_ref[...].astype(jnp.float32)

    x2 = h_scr[...]                                                    # [BT, D] f32

    # ---- attention ---------------------------------------------------------
    # qkv in feature-major (transposed) form: row j = feature h*hd+d, col = token.
    # trans-B dot_general -> no in-kernel weight/activation transpose needed.
    qkvt = lax.dot_general(wqkvt_ref[0], x2, (((1,), (1,)), ((), ())),
                           preferred_element_type=jnp.float32) + bqkvt_ref[0]   # [3D, BT]

    row = lax.broadcasted_iota(jnp.int32, (T, T), 0)
    col = lax.broadcasted_iota(jnp.int32, (T, T), 1)
    causal = (col <= row)[None, :, :]                                  # [1, T, T]

    at_parts = []
    for b in range(B):                                                 # static unroll over batch
        blk = qkvt[:, b * T:(b + 1) * T]                               # [3D, T]
        q_t = blk[0 * D:1 * D, :].reshape(H, hd, T)                    # aligned 8-sublane head slabs
        k_t = blk[1 * D:2 * D, :].reshape(H, hd, T)
        v_t = blk[2 * D:3 * D, :].reshape(H, hd, T)
        q = jnp.transpose(q_t, (0, 2, 1))                              # [H, T, hd]
        s = jnp.einsum('htd,hds->hts', q, k_t,
                       preferred_element_type=jnp.float32) * scale     # [H, T, T]
        s = jnp.where(causal, s, -1e9)
        s = s - jnp.max(s, axis=-1, keepdims=True)
        p = jnp.exp(s)
        p = p / jnp.sum(p, axis=-1, keepdims=True)                     # exact softmax
        a_t = jnp.einsum('hds,hts->hdt', v_t, p,
                         preferred_element_type=jnp.float32)           # [H, hd, T]
        at_parts.append(a_t.reshape(D, T))                             # merged heads (transposed)
    a_all = jnp.concatenate(at_parts, axis=1).T                        # [BT, D]

    a_all = jnp.dot(a_all, wpr_ref[0], preferred_element_type=jnp.float32) + bpr_ref[0]

    # ---- residual + ln_1, MLP (gelu), residual + ln_2 ------------------------
    n = _layernorm(x2 + a_all, ln1g_ref[0], ln1b_ref[0], eps)
    m = jnp.dot(n, wfc_ref[0], preferred_element_type=jnp.float32) + bfc_ref[0]
    m = _gelu(m)
    m = jnp.dot(m, wpr2_ref[0], preferred_element_type=jnp.float32) + bpr2_ref[0]
    h_new = _layernorm(n + m, ln2g_ref[0], ln2b_ref[0], eps)

    h_scr[...] = h_new
    sts_ref[0] = h_new.astype(sts_ref.dtype)

    # ---- fused tied LM head + emotion bias (last layer only) -----------------
    @pl.when(layer == pl.num_programs(0) - 1)
    def _():
        logits = jnp.dot(h_new, decwt_ref[...],
                         preferred_element_type=jnp.float32)           # [BT, Vp] (lane-dense Vp)
        bias_s = jnp.dot(es_ref[...], vswt_ref[...],
                         preferred_element_type=jnp.float32)           # [B, Vp]
        bias_l = jnp.dot(el_ref[...], vlwt_ref[...],
                         preferred_element_type=jnp.float32)           # [B, Vp]
        biases = jnp.concatenate([bias_s, bias_l], axis=0)             # [2B, Vp]
        em = jnp.dot(sel_ref[...], biases,
                     preferred_element_type=jnp.float32)               # [BT, Vp]
        logits_ref[...] = (logits + beta * em).astype(logits_ref.dtype)


# ---------------------------------------------------------------------------
# Parameter initialization (deterministic, matches reference init scheme)
# ---------------------------------------------------------------------------
def init_params(key, *, n_embd, n_layer, n_indexs, n_vocab, n_emo, n_emo_embd,
                init_std=0.02):
    D = n_embd
    keys = iter(jax.random.split(key, 8 + 5 * n_layer))
    params = {}
    params["embed"] = init_std * jax.random.normal(next(keys), (n_indexs, D), jnp.float32)

    layers = []
    for _ in range(n_layer):
        layers.append({
            "c_attn_w": init_std * jax.random.normal(next(keys), (D, 3 * D), jnp.float32),
            "c_attn_b": jnp.zeros((3 * D,), jnp.float32),
            "c_proj_w": init_std * jax.random.normal(next(keys), (D, D), jnp.float32),
            "c_proj_b": jnp.zeros((D,), jnp.float32),
            "ln1_g": jnp.ones((D,), jnp.float32),
            "ln1_b": jnp.zeros((D,), jnp.float32),
            "c_fc_w": init_std * jax.random.normal(next(keys), (D, 4 * D), jnp.float32),
            "c_fc_b": jnp.zeros((4 * D,), jnp.float32),
            "c_proj2_w": init_std * jax.random.normal(next(keys), (4 * D, D), jnp.float32),
            "c_proj2_b": jnp.zeros((D,), jnp.float32),
            "ln2_g": jnp.ones((D,), jnp.float32),
            "ln2_b": jnp.zeros((D,), jnp.float32),
        })
    params["layers"] = layers

    V2 = n_vocab + 2
    params["ES"] = init_std * jax.random.normal(next(keys), (n_emo, n_emo_embd), jnp.float32)
    params["EL"] = init_std * jax.random.normal(next(keys), (n_emo, n_emo_embd), jnp.float32)
    params["VS"] = init_std * jax.random.normal(next(keys), (V2, n_emo_embd), jnp.float32)
    params["VL"] = init_std * jax.random.normal(next(keys), (V2, n_emo_embd), jnp.float32)
    return params


# ---------------------------------------------------------------------------
# ELMModel forward (pre_sts=None, last_only=False path)
# ---------------------------------------------------------------------------
def elm_forward(params, emotions, x, *, n_head, n_vocab, beta, spk_idx, lst_idx,
                eps=1e-5):
    """
    emotions: [B] int32 emotion ids
    x:        [B, T, K] int32 token indices (embedded then summed over K);
              channel 2 is the dialog-state channel used for the emotion bias.
    returns (aug_logits [B, T, n_vocab+2], sts list of hidden states)
    """
    B, T, K = x.shape
    embed_W = params["embed"]
    D = embed_W.shape[1]
    layers = params["layers"]
    L = len(layers)
    BT = B * T

    # Embedding lookup + sum over K channels (gather: plain JAX glue), folded batch.
    h0 = jnp.sum(embed_W[x], axis=2).reshape(BT, D)                    # [BT, D]

    # ---- host-side weight plumbing: stack per-layer params, pre-transpose ----
    wqkvt = jnp.stack([lp["c_attn_w"].T for lp in layers])             # [L, 3D, D]
    bqkvt = jnp.stack([lp["c_attn_b"].reshape(-1, 1) for lp in layers])  # [L, 3D, 1]
    wpr = jnp.stack([lp["c_proj_w"] for lp in layers])                 # [L, D, D]
    bpr = jnp.stack([lp["c_proj_b"].reshape(1, -1) for lp in layers])  # [L, 1, D]
    ln1g = jnp.stack([lp["ln1_g"].reshape(1, -1) for lp in layers])
    ln1b = jnp.stack([lp["ln1_b"].reshape(1, -1) for lp in layers])
    wfc = jnp.stack([lp["c_fc_w"] for lp in layers])                   # [L, D, 4D]
    bfc = jnp.stack([lp["c_fc_b"].reshape(1, -1) for lp in layers])
    wpr2 = jnp.stack([lp["c_proj2_w"] for lp in layers])               # [L, 4D, D]
    bpr2 = jnp.stack([lp["c_proj2_b"].reshape(1, -1) for lp in layers])
    ln2g = jnp.stack([lp["ln2_g"].reshape(1, -1) for lp in layers])
    ln2b = jnp.stack([lp["ln2_b"].reshape(1, -1) for lp in layers])

    # Tied decoder + emotion projections: pre-transposed, zero-padded to a
    # lane-dense (multiple of 128) vocab width.
    V2 = n_vocab + 2
    Vp = ((V2 + 127) // 128) * 128
    dec_wt = jnp.zeros((D, Vp), jnp.float32).at[:, :V2].set(embed_W[:V2].T)
    E = params["VS"].shape[1]
    vs_wt = jnp.zeros((E, Vp), jnp.float32).at[:, :V2].set(params["VS"].T)
    vl_wt = jnp.zeros((E, Vp), jnp.float32).at[:, :V2].set(params["VL"].T)

    es_sel = params["ES"][emotions]                                    # [B, E]
    el_sel = params["EL"][emotions]                                    # [B, E]

    # One-hot speaker/listener-per-batch selector (input-dependent glue):
    # em[b*T+t] = spk? bias_s[b] : (lst? bias_l[b] : 0) == sel @ [bias_s; bias_l]
    x_ds = x[:, :, 2]                                                  # [B, T]
    spk_m = (x_ds == spk_idx).astype(jnp.float32)
    lst_m = (x_ds == lst_idx).astype(jnp.float32)
    eye_b = jnp.eye(B, dtype=jnp.float32)
    sel = jnp.concatenate([spk_m[:, :, None] * eye_b[:, None, :],
                           lst_m[:, :, None] * eye_b[:, None, :]],
                          axis=2).reshape(BT, 2 * B)                   # [BT, 2B]

    # ---- single fused pallas_call --------------------------------------------
    def per_layer_spec(shape):
        nd = len(shape)
        return pl.BlockSpec((1,) + tuple(shape[1:]),
                            lambda l, _nd=nd: (l,) + (0,) * (_nd - 1))

    def const_spec(shape):
        nd = len(shape)
        return pl.BlockSpec(tuple(shape), lambda l, _nd=nd: (0,) * _nd)

    in_specs = [
        const_spec(h0.shape),
        per_layer_spec(wqkvt.shape), per_layer_spec(bqkvt.shape),
        per_layer_spec(wpr.shape), per_layer_spec(bpr.shape),
        per_layer_spec(ln1g.shape), per_layer_spec(ln1b.shape),
        per_layer_spec(wfc.shape), per_layer_spec(bfc.shape),
        per_layer_spec(wpr2.shape), per_layer_spec(bpr2.shape),
        per_layer_spec(ln2g.shape), per_layer_spec(ln2b.shape),
        const_spec(dec_wt.shape), const_spec(es_sel.shape), const_spec(el_sel.shape),
        const_spec(vs_wt.shape), const_spec(vl_wt.shape), const_spec(sel.shape),
    ]
    out_specs = (
        pl.BlockSpec((1, BT, D), lambda l: (l, 0, 0)),     # stacked per-layer h
        pl.BlockSpec((BT, Vp), lambda l: (0, 0)),          # logits (written at last layer)
    )
    out_shapes = (
        jax.ShapeDtypeStruct((L, BT, D), jnp.float32),
        jax.ShapeDtypeStruct((BT, Vp), jnp.float32),
    )

    kernel = functools.partial(_elm_fused_kernel, B=B, T=T, n_head=n_head,
                               eps=eps, beta=beta)

    # TODO(synk): on v7x (2 TensorCores) add a leading "parallel" batch axis for
    # core-level parallelism; at these toy shapes a single sequential grid wins.
    sts_stacked, logits_pad = pl.pallas_call(
        kernel,
        out_shape=out_shapes,
        grid=(L,),
        in_specs=in_specs,
        out_specs=out_specs,
        scratch_shapes=[pltpu.VMEM((BT, D), jnp.float32)],
        compiler_params=pltpu.CompilerParams(
            dimension_semantics=("arbitrary",),
            vmem_limit_bytes=32 * 1024 * 1024),
    )(h0, wqkvt, bqkvt, wpr, bpr, ln1g, ln1b, wfc, bfc, wpr2, bpr2, ln2g, ln2b,
      dec_wt, es_sel, el_sel, vs_wt, vl_wt, sel)

    aug_logits = logits_pad[:, :V2].reshape(B, T, V2)
    # TODO(synk): reference sts also carries per-layer (K, V) for the pre_sts
    # incremental-decoding cache; not emitted here (pre_sts=None path only).
    sts = [h0.reshape(B, T, D)] + [sts_stacked[i].reshape(B, T, D) for i in range(L)]
    return aug_logits, sts


# ---------------------------------------------------------------------------
# Main
# ---------------------------------------------------------------------------
if __name__ == "__main__":
    # Small synthetic config
    n_embd = 32
    n_head = 4
    n_layer = 2
    n_vocab = 40
    n_special = 3
    n_ctx = 16
    n_indexs = n_vocab + n_special + n_ctx          # 59
    n_emo_embd = 16
    EMOTION_CATES = ["joy", "sad", "anger", "fear", "surprise", "disgust", "neutral"]
    n_emo = len(EMOTION_CATES)
    DS_SPEAKER_IDX = n_vocab                        # 40
    DS_LISTENER_IDX = n_vocab + 1                   # 41
    beta = 1.0

    B, T, K = 2, 8, 3

    key = jax.random.PRNGKey(0)
    pkey, tkey, dkey, ekey = jax.random.split(key, 4)
    params = init_params(pkey, n_embd=n_embd, n_layer=n_layer, n_indexs=n_indexs,
                         n_vocab=n_vocab, n_emo=n_emo, n_emo_embd=n_emo_embd)

    tok = jax.random.randint(tkey, (B, T, 2), 0, n_indexs, dtype=jnp.int32)
    ds_choice = jax.random.randint(dkey, (B, T), 0, 3, dtype=jnp.int32)
    ds_vals = jnp.array([DS_SPEAKER_IDX, DS_LISTENER_IDX, 5], jnp.int32)[ds_choice]
    x = jnp.concatenate([tok, ds_vals[:, :, None]], axis=-1)           # [B, T, 3]
    emotions = jax.random.randint(ekey, (B,), 0, n_emo, dtype=jnp.int32)

    fwd = jax.jit(functools.partial(
        elm_forward, n_head=n_head, n_vocab=n_vocab, beta=beta,
        spk_idx=DS_SPEAKER_IDX, lst_idx=DS_LISTENER_IDX))

    aug_logits, sts = fwd(params, emotions, x)
    jax.block_until_ready((aug_logits, sts))

    assert aug_logits.shape == (B, T, n_vocab + 2)
    assert len(sts) == n_layer + 1
    assert sts[-1].shape == (B, T, n_embd)
    assert bool(jnp.all(jnp.isfinite(aug_logits)))
    print("KERNEL_OK")
</pallas_src>

<mosaic_0001>
module attributes {stable_mosaic.version = 11 : i64} {
  func.func @_elm_fused_kernel(%arg0: i32, %arg1: memref<16x32xf32, #tpu.memory_space<vmem>>, %arg2: memref<1x96x32xf32, #tpu.memory_space<vmem>>, %arg3: memref<1x96x1xf32, #tpu.memory_space<vmem>>, %arg4: memref<1x32x32xf32, #tpu.memory_space<vmem>>, %arg5: memref<1x1x32xf32, #tpu.memory_space<vmem>>, %arg6: memref<1x1x32xf32, #tpu.memory_space<vmem>>, %arg7: memref<1x1x32xf32, #tpu.memory_space<vmem>>, %arg8: memref<1x32x128xf32, #tpu.memory_space<vmem>>, %arg9: memref<1x1x128xf32, #tpu.memory_space<vmem>>, %arg10: memref<1x128x32xf32, #tpu.memory_space<vmem>>, %arg11: memref<1x1x32xf32, #tpu.memory_space<vmem>>, %arg12: memref<1x1x32xf32, #tpu.memory_space<vmem>>, %arg13: memref<1x1x32xf32, #tpu.memory_space<vmem>>, %arg14: memref<32x128xf32, #tpu.memory_space<vmem>>, %arg15: memref<2x16xf32, #tpu.memory_space<vmem>>, %arg16: memref<2x16xf32, #tpu.memory_space<vmem>>, %arg17: memref<16x128xf32, #tpu.memory_space<vmem>>, %arg18: memref<16x128xf32, #tpu.memory_space<vmem>>, %arg19: memref<16x4xf32, #tpu.memory_space<vmem>>, %arg20: memref<1x16x32xf32, #tpu.memory_space<vmem>>, %arg21: memref<16x128xf32, #tpu.memory_space<vmem>>, %arg22: memref<16x32xf32, #tpu.memory_space<vmem>>) attributes {dimension_semantics = [#tpu.dimension_semantics<arbitrary>], iteration_bounds = array<i64: 2>, scalar_prefetch = 0 : i64, scratch_operands = 1 : i64, tpu.core_type = #tpu.core_type<tc>, window_params = [{pipeline_mode = #tpu.pipeline_mode<synchronous>, transform_indices = @transform_0, window_bounds = array<i64: 16, 32>}, {transform_indices = @transform_1, window_bounds = array<i64: 1, 96, 32>}, {transform_indices = @transform_2, window_bounds = array<i64: 1, 96, 1>}, {transform_indices = @transform_3, window_bounds = array<i64: 1, 32, 32>}, {transform_indices = @transform_4, window_bounds = array<i64: 1, 1, 32>}, {transform_indices = @transform_5, window_bounds = array<i64: 1, 1, 32>}, {transform_indices = @transform_6, window_bounds = array<i64: 1, 1, 32>}, {transform_indices = @transform_7, window_bounds = array<i64: 1, 32, 128>}, {transform_indices = @transform_8, window_bounds = array<i64: 1, 1, 128>}, {transform_indices = @transform_9, window_bounds = array<i64: 1, 128, 32>}, {transform_indices = @transform_10, window_bounds = array<i64: 1, 1, 32>}, {transform_indices = @transform_11, window_bounds = array<i64: 1, 1, 32>}, {transform_indices = @transform_12, window_bounds = array<i64: 1, 1, 32>}, {pipeline_mode = #tpu.pipeline_mode<synchronous>, transform_indices = @transform_13, window_bounds = array<i64: 32, 128>}, {pipeline_mode = #tpu.pipeline_mode<synchronous>, transform_indices = @transform_14, window_bounds = array<i64: 2, 16>}, {pipeline_mode = #tpu.pipeline_mode<synchronous>, transform_indices = @transform_15, window_bounds = array<i64: 2, 16>}, {pipeline_mode = #tpu.pipeline_mode<synchronous>, transform_indices = @transform_16, window_bounds = array<i64: 16, 128>}, {pipeline_mode = #tpu.pipeline_mode<synchronous>, transform_indices = @transform_17, window_bounds = array<i64: 16, 128>}, {pipeline_mode = #tpu.pipeline_mode<synchronous>, transform_indices = @transform_18, window_bounds = array<i64: 16, 4>}, {transform_indices = @transform_19, window_bounds = array<i64: 1, 16, 32>}, {pipeline_mode = #tpu.pipeline_mode<synchronous>, transform_indices = @transform_20, window_bounds = array<i64: 16, 128>}]} {
    %c0_i32 = arith.constant 0 : i32
    %0 = arith.cmpi eq, %arg0, %c0_i32 : i32
    %1 = arith.extui %0 : i1 to i32
    %c0_i32_0 = arith.constant 0 : i32
    %2 = arith.cmpi ne, %1, %c0_i32_0 : i32
    scf.if %2 {
      %c0_73 = arith.constant 0 : index
      %c0_74 = arith.constant 0 : index
      %164 = vector.load %arg1[%c0_73, %c0_74] : memref<16x32xf32, #tpu.memory_space<vmem>>, vector<16x32xf32>
      %c0_75 = arith.constant 0 : index
      %c0_76 = arith.constant 0 : index
      %165 = vector.load %arg22[%c0_75, %c0_76] : memref<16x32xf32, #tpu.memory_space<vmem>>, vector<16x32xf32>
      tpu.vector_store %arg22[%c0_75, %c0_76], %164 {strides = array<i32>} : memref<16x32xf32, #tpu.memory_space<vmem>>, vector<16x32xf32>,
    } else {
    }
    %c0 = arith.constant 0 : index
    %c0_1 = arith.constant 0 : index
    %3 = vector.load %arg22[%c0, %c0_1] : memref<16x32xf32, #tpu.memory_space<vmem>>, vector<16x32xf32>
    %c0_2 = arith.constant 0 : index
    %c0_3 = arith.constant 0 : index
    %c0_4 = arith.constant 0 : index
    %4 = vector.load %arg2[%c0_2, %c0_3, %c0_4] : memref<1x96x32xf32, #tpu.memory_space<vmem>>, vector<1x96x32xf32>
    %5 = vector.shape_cast %4 : vector<1x96x32xf32> to vector<96x32xf32>
    %cst = arith.constant dense<0.000000e+00> : vector<96x16xf32>
    %6 = tpu.matmul %5, %3, %cst {dimension_numbers = #tpu.dot_dimension_numbers<[1], [1], [0], [0], [0, 0, 1, 0], [], []>} : vector<96x32xf32>, vector<16x32xf32>, vector<96x16xf32> -> vector<96x16xf32>
    %c0_5 = arith.constant 0 : index
    %c0_6 = arith.constant 0 : index
    %c0_7 = arith.constant 0 : index
    %7 = vector.load %arg3[%c0_5, %c0_6, %c0_7] : memref<1x96x1xf32, #tpu.memory_space<vmem>>, vector<1x96x1xf32>
    %8 = vector.shape_cast %7 : vector<1x96x1xf32> to vector<96x1xf32>
    %9 = vector.broadcast %8 : vector<96x1xf32> to vector<96x16xf32>
    %10 = arith.addf %6, %9 : vector<96x16xf32>
    %11 = tpu.iota {dimensions = array<i32: 0>} : vector<8x8xi32>
    %12 = tpu.iota {dimensions = array<i32: 1>} : vector<8x8xi32>
    %13 = arith.cmpi sle, %12, %11 : vector<8x8xi32>
    %14 = vector.shape_cast %13 : vector<8x8xi1> to vector<1x8x8xi1>
    %15 = vector.extract_strided_slice %10 {offsets = [0, 0], sizes = [96, 8], strides = [1, 1]} : vector<96x16xf32> to vector<96x8xf32>
    %16 = vector.extract_strided_slice %15 {offsets = [0, 0], sizes = [32, 8], strides = [1, 1]} : vector<96x8xf32> to vector<32x8xf32>
    %17 = vector.shape_cast %16 : vector<32x8xf32> to vector<4x8x8xf32>
    %18 = vector.extract_strided_slice %15 {offsets = [32, 0], sizes = [32, 8], strides = [1, 1]} : vector<96x8xf32> to vector<32x8xf32>
    %19 = vector.shape_cast %18 : vector<32x8xf32> to vector<4x8x8xf32>
    %20 = vector.extract_strided_slice %15 {offsets = [64, 0], sizes = [32, 8], strides = [1, 1]} : vector<96x8xf32> to vector<32x8xf32>
    %21 = vector.shape_cast %20 : vector<32x8xf32> to vector<4x8x8xf32>
    %22 = tpu.transpose %17, [0, 2, 1] : vector<4x8x8xf32> -> vector<4x8x8xf32>
    "tpu.trace_start"() <{level = 10 : i32, message = "htd,hds->hts"}> : () -> ()
    %cst_8 = arith.constant dense<0.000000e+00> : vector<4x8x8xf32>
    %23 = tpu.matmul %22, %19, %cst_8 {dimension_numbers = #tpu.dot_dimension_numbers<[2], [1], [1], [2], [0, 0, 0, 1, 1, 2], [0], [0]>} : vector<4x8x8xf32>, vector<4x8x8xf32>, vector<4x8x8xf32> -> vector<4x8x8xf32>
    "tpu.trace_stop"() : () -> ()
    %cst_9 = arith.constant 0.353553385 : f32
    %24 = vector.broadcast %cst_9 : f32 to vector<4x8x8xf32>
    %25 = arith.mulf %23, %24 : vector<4x8x8xf32>
    %cst_10 = arith.constant -1.000000e+09 : f32
    %26 = vector.shape_cast %14 : vector<1x8x8xi1> to vector<1x8x8xi1>
    %27 = vector.broadcast %26 : vector<1x8x8xi1> to vector<4x8x8xi1>
    %28 = vector.broadcast %cst_10 : f32 to vector<4x8x8xf32>
    %29 = arith.select %27, %25, %28 : vector<4x8x8xi1>, vector<4x8x8xf32>
    %cst_11 = arith.constant dense<0xFF800000> : vector<4x8xf32>
    %30 = vector.multi_reduction <maximumf>, %29, %cst_11 [2] : vector<4x8x8xf32> to vector<4x8xf32>
    %31 = vector.shape_cast %30 : vector<4x8xf32> to vector<4x8x1xf32>
    %32 = vector.broadcast %31 : vector<4x8x1xf32> to vector<4x8x8xf32>
    %33 = arith.subf %29, %32 : vector<4x8x8xf32>
    %34 = math.exp %33 : vector<4x8x8xf32>
    %cst_12 = arith.constant dense<0.000000e+00> : vector<4x8xf32>
    %35 = vector.multi_reduction <add>, %34, %cst_12 [2] : vector<4x8x8xf32> to vector<4x8xf32>
    %36 = vector.shape_cast %35 : vector<4x8xf32> to vector<4x8x1xf32>
    %37 = vector.broadcast %36 : vector<4x8x1xf32> to vector<4x8x8xf32>
    %38 = arith.divf %34, %37 : vector<4x8x8xf32>
    "tpu.trace_start"() <{level = 10 : i32, message = "hds,hts->hdt"}> : () -> ()
    %cst_13 = arith.constant dense<0.000000e+00> : vector<4x8x8xf32>
    %39 = tpu.matmul %21, %38, %cst_13 {dimension_numbers = #tpu.dot_dimension_numbers<[2], [2], [1], [1], [0, 0, 0, 1, 1, 1], [0], [0]>} : vector<4x8x8xf32>, vector<4x8x8xf32>, vector<4x8x8xf32> -> vector<4x8x8xf32>
    "tpu.trace_stop"() : () -> ()
    %40 = vector.shape_cast %39 : vector<4x8x8xf32> to vector<32x8xf32>
    %41 = vector.extract_strided_slice %10 {offsets = [0, 8], sizes = [96, 8], strides = [1, 1]} : vector<96x16xf32> to vector<96x8xf32>
    %42 = vector.extract_strided_slice %41 {offsets = [0, 0], sizes = [32, 8], strides = [1, 1]} : vector<96x8xf32> to vector<32x8xf32>
    %43 = vector.shape_cast %42 : vector<32x8xf32> to vector<4x8x8xf32>
    %44 = vector.extract_strided_slice %41 {offsets = [32, 0], sizes = [32, 8], strides = [1, 1]} : vector<96x8xf32> to vector<32x8xf32>
    %45 = vector.shape_cast %44 : vector<32x8xf32> to vector<4x8x8xf32>
    %46 = vector.extract_strided_slice %41 {offsets = [64, 0], sizes = [32, 8], strides = [1, 1]} : vector<96x8xf32> to vector<32x8xf32>
    %47 = vector.shape_cast %46 : vector<32x8xf32> to vector<4x8x8xf32>
    %48 = tpu.transpose %43, [0, 2, 1] : vector<4x8x8xf32> -> vector<4x8x8xf32>
    "tpu.trace_start"() <{level = 10 : i32, message = "htd,hds->hts"}> : () -> ()
    %cst_14 = arith.constant dense<0.000000e+00> : vector<4x8x8xf32>
    %49 = tpu.matmul %48, %45, %cst_14 {dimension_numbers = #tpu.dot_dimension_numbers<[2], [1], [1], [2], [0, 0, 0, 1, 1, 2], [0], [0]>} : vector<4x8x8xf32>, vector<4x8x8xf32>, vector<4x8x8xf32> -> vector<4x8x8xf32>
    "tpu.trace_stop"() : () -> ()
    %cst_15 = arith.constant 0.353553385 : f32
    %50 = vector.broadcast %cst_15 : f32 to vector<4x8x8xf32>
    %51 = arith.mulf %49, %50 : vector<4x8x8xf32>
    %cst_16 = arith.constant -1.000000e+09 : f32
    %52 = vector.shape_cast %14 : vector<1x8x8xi1> to vector<1x8x8xi1>
    %53 = vector.broadcast %52 : vector<1x8x8xi1> to vector<4x8x8xi1>
    %54 = vector.broadcast %cst_16 : f32 to vector<4x8x8xf32>
    %55 = arith.select %53, %51, %54 : vector<4x8x8xi1>, vector<4x8x8xf32>
    %cst_17 = arith.constant dense<0xFF800000> : vector<4x8xf32>
    %56 = vector.multi_reduction <maximumf>, %55, %cst_17 [2] : vector<4x8x8xf32> to vector<4x8xf32>
    %57 = vector.shape_cast %56 : vector<4x8xf32> to vector<4x8x1xf32>
    %58 = vector.broadcast %57 : vector<4x8x1xf32> to vector<4x8x8xf32>
    %59 = arith.subf %55, %58 : vector<4x8x8xf32>
    %60 = math.exp %59 : vector<4x8x8xf32>
    %cst_18 = arith.constant dense<0.000000e+00> : vector<4x8xf32>
    %61 = vector.multi_reduction <add>, %60, %cst_18 [2] : vector<4x8x8xf32> to vector<4x8xf32>
    %62 = vector.shape_cast %61 : vector<4x8xf32> to vector<4x8x1xf32>
    %63 = vector.broadcast %62 : vector<4x8x1xf32> to vector<4x8x8xf32>
    %64 = arith.divf %60, %63 : vector<4x8x8xf32>
    "tpu.trace_start"() <{level = 10 : i32, message = "hds,hts->hdt"}> : () -> ()
    %cst_19 = arith.constant dense<0.000000e+00> : vector<4x8x8xf32>
    %65 = tpu.matmul %47, %64, %cst_19 {dimension_numbers = #tpu.dot_dimension_numbers<[2], [2], [1], [1], [0, 0, 0, 1, 1, 1], [0], [0]>} : vector<4x8x8xf32>, vector<4x8x8xf32>, vector<4x8x8xf32> -> vector<4x8x8xf32>
    "tpu.trace_stop"() : () -> ()
    %66 = vector.shape_cast %65 : vector<4x8x8xf32> to vector<32x8xf32>
    %67 = tpu.concatenate %40, %66 in 1 : vector<32x8xf32>, vector<32x8xf32> -> vector<32x16xf32>
    %68 = tpu.transpose %67, [1, 0] : vector<32x16xf32> -> vector<16x32xf32>
    %c0_20 = arith.constant 0 : index
    %c0_21 = arith.constant 0 : index
    %c0_22 = arith.constant 0 : index
    %69 = vector.load %arg4[%c0_20, %c0_21, %c0_22] : memref<1x32x32xf32, #tpu.memory_space<vmem>>, vector<1x32x32xf32>
    %70 = vector.shape_cast %69 : vector<1x32x32xf32> to vector<32x32xf32>
    %cst_23 = arith.constant dense<0.000000e+00> : vector<16x32xf32>
    %71 = tpu.matmul %68, %70, %cst_23 {dimension_numbers = #tpu.dot_dimension_numbers<[1], [0], [0], [1], [0, 0, 1, 1], [], []>} : vector<16x32xf32>, vector<32x32xf32>, vector<16x32xf32> -> vector<16x32xf32>
    %c0_24 = arith.constant 0 : index
    %c0_25 = arith.constant 0 : index
    %c0_26 = arith.constant 0 : index
    %72 = vector.load %arg5[%c0_24, %c0_25, %c0_26] : memref<1x1x32xf32, #tpu.memory_space<vmem>>, vector<1x1x32xf32>
    %73 = vector.shape_cast %72 : vector<1x1x32xf32> to vector<1x32xf32>
    %74 = vector.broadcast %73 : vector<1x32xf32> to vector<16x32xf32>
    %75 = arith.addf %71, %74 : vector<16x32xf32>
    %76 = arith.addf %3, %75 : vector<16x32xf32>
    %c0_27 = arith.constant 0 : index
    %c0_28 = arith.constant 0 : index
    %c0_29 = arith.constant 0 : index
    %77 = vector.load %arg6[%c0_27, %c0_28, %c0_29] : memref<1x1x32xf32, #tpu.memory_space<vmem>>, vector<1x1x32xf32>
    %78 = vector.shape_cast %77 : vector<1x1x32xf32> to vector<1x32xf32>
    %c0_30 = arith.constant 0 : index
    %c0_31 = arith.constant 0 : index
    %c0_32 = arith.constant 0 : index
    %79 = vector.load %arg7[%c0_30, %c0_31, %c0_32] : memref<1x1x32xf32, #tpu.memory_space<vmem>>, vector<1x1x32xf32>
    %80 = vector.shape_cast %79 : vector<1x1x32xf32> to vector<1x32xf32>
    %cst_33 = arith.constant dense<0.000000e+00> : vector<16xf32>
    %81 = vector.multi_reduction <add>, %76, %cst_33 [1] : vector<16x32xf32> to vector<16xf32>
    %82 = vector.shape_cast %81 : vector<16xf32> to vector<16x1xf32>
    %cst_34 = arith.constant 3.200000e+01 : f32
    %83 = vector.broadcast %cst_34 : f32 to vector<16x1xf32>
    %84 = arith.divf %82, %83 : vector<16x1xf32>
    %85 = vector.broadcast %84 : vector<16x1xf32> to vector<16x32xf32>
    %86 = arith.subf %76, %85 : vector<16x32xf32>
    %87 = arith.mulf %86, %86 : vector<16x32xf32>
    %cst_35 = arith.constant dense<0.000000e+00> : vector<16xf32>
    %88 = vector.multi_reduction <add>, %87, %cst_35 [1] : vector<16x32xf32> to vector<16xf32>
    %89 = vector.shape_cast %88 : vector<16xf32> to vector<16x1xf32>
    %cst_36 = arith.constant 3.200000e+01 : f32
    %90 = vector.broadcast %cst_36 : f32 to vector<16x1xf32>
    %91 = arith.divf %89, %90 : vector<16x1xf32>
    %92 = vector.broadcast %84 : vector<16x1xf32> to vector<16x32xf32>
    %93 = arith.subf %76, %92 : vector<16x32xf32>
    %cst_37 = arith.constant 9.99999974E-6 : f32
    %94 = vector.broadcast %cst_37 : f32 to vector<16x1xf32>
    %95 = arith.addf %91, %94 : vector<16x1xf32>
    %96 = math.rsqrt %95 : vector<16x1xf32>
    %97 = vector.broadcast %96 : vector<16x1xf32> to vector<16x32xf32>
    %98 = arith.mulf %93, %97 : vector<16x32xf32>
    %99 = vector.broadcast %78 : vector<1x32xf32> to vector<16x32xf32>
    %100 = arith.mulf %99, %98 : vector<16x32xf32>
    %101 = vector.broadcast %80 : vector<1x32xf32> to vector<16x32xf32>
    %102 = arith.addf %100, %101 : vector<16x32xf32>
    %c0_38 = arith.constant 0 : index
    %c0_39 = arith.constant 0 : index
    %c0_40 = arith.constant 0 : index
    %103 = vector.load %arg8[%c0_38, %c0_39, %c0_40] : memref<1x32x128xf32, #tpu.memory_space<vmem>>, vector<1x32x128xf32>
    %104 = vector.shape_cast %103 : vector<1x32x128xf32> to vector<32x128xf32>
    %cst_41 = arith.constant dense<0.000000e+00> : vector<16x128xf32>
    %105 = tpu.matmul %102, %104, %cst_41 {dimension_numbers = #tpu.dot_dimension_numbers<[1], [0], [0], [1], [0, 0, 1, 1], [], []>} : vector<16x32xf32>, vector<32x128xf32>, vector<16x128xf32> -> vector<16x128xf32>
    %c0_42 = arith.constant 0 : index
    %c0_43 = arith.constant 0 : index
    %c0_44 = arith.constant 0 : index
    %106 = vector.load %arg9[%c0_42, %c0_43, %c0_44] : memref<1x1x128xf32, #tpu.memory_space<vmem>>, vector<1x1x128xf32>
    %107 = vector.shape_cast %106 : vector<1x1x128xf32> to vector<1x128xf32>
    %108 = vector.broadcast %107 : vector<1x128xf32> to vector<16x128xf32>
    %109 = arith.addf %105, %108 : vector<16x128xf32>
    %cst_45 = arith.constant 5.000000e-01 : f32
    %110 = vector.broadcast %cst_45 : f32 to vector<16x128xf32>
    %111 = arith.mulf %110, %109 : vector<16x128xf32>
    %112 = arith.mulf %109, %109 : vector<16x128xf32>
    %113 = arith.mulf %109, %112 : vector<16x128xf32>
    %cst_46 = arith.constant 4.471500e-02 : f32
    %114 = vector.broadcast %cst_46 : f32 to vector<16x128xf32>
    %115 = arith.mulf %114, %113 : vector<16x128xf32>
    %116 = arith.addf %109, %115 : vector<16x128xf32>
    %cst_47 = arith.constant 0.797884583 : f32
    %117 = vector.broadcast %cst_47 : f32 to vector<16x128xf32>
    %118 = arith.mulf %117, %116 : vector<16x128xf32>
    %119 = math.tanh %118 : vector<16x128xf32>
    %cst_48 = arith.constant 1.000000e+00 : f32
    %120 = vector.broadcast %cst_48 : f32 to vector<16x128xf32>
    %121 = arith.addf %120, %119 : vector<16x128xf32>
    %122 = arith.mulf %111, %121 : vector<16x128xf32>
    %c0_49 = arith.constant 0 : index
    %c0_50 = arith.constant 0 : index
    %c0_51 = arith.constant 0 : index
    %123 = vector.load %arg10[%c0_49, %c0_50, %c0_51] : memref<1x128x32xf32, #tpu.memory_space<vmem>>, vector<1x128x32xf32>
    %124 = vector.shape_cast %123 : vector<1x128x32xf32> to vector<128x32xf32>
    %cst_52 = arith.constant dense<0.000000e+00> : vector<16x32xf32>
    %125 = tpu.matmul %122, %124, %cst_52 {dimension_numbers = #tpu.dot_dimension_numbers<[1], [0], [0], [1], [0, 0, 1, 1], [], []>} : vector<16x128xf32>, vector<128x32xf32>, vector<16x32xf32> -> vector<16x32xf32>
    %c0_53 = arith.constant 0 : index
    %c0_54 = arith.constant 0 : index
    %c0_55 = arith.constant 0 : index
    %126 = vector.load %arg11[%c0_53, %c0_54, %c0_55] : memref<1x1x32xf32, #tpu.memory_space<vmem>>, vector<1x1x32xf32>
    %127 = vector.shape_cast %126 : vector<1x1x32xf32> to vector<1x32xf32>
    %128 = vector.broadcast %127 : vector<1x32xf32> to vector<16x32xf32>
    %129 = arith.addf %125, %128 : vector<16x32xf32>
    %130 = arith.addf %102, %129 : vector<16x32xf32>
    %c0_56 = arith.constant 0 : index
    %c0_57 = arith.constant 0 : index
    %c0_58 = arith.constant 0 : index
    %131 = vector.load %arg12[%c0_56, %c0_57, %c0_58] : memref<1x1x32xf32, #tpu.memory_space<vmem>>, vector<1x1x32xf32>
    %132 = vector.shape_cast %131 : vector<1x1x32xf32> to vector<1x32xf32>
    %c0_59 = arith.constant 0 : index
    %c0_60 = arith.constant 0 : index
    %c0_61 = arith.constant 0 : index
    %133 = vector.load %arg13[%c0_59, %c0_60, %c0_61] : memref<1x1x32xf32, #tpu.memory_space<vmem>>, vector<1x1x32xf32>
    %134 = vector.shape_cast %133 : vector<1x1x32xf32> to vector<1x32xf32>
    %cst_62 = arith.constant dense<0.000000e+00> : vector<16xf32>
    %135 = vector.multi_reduction <add>, %130, %cst_62 [1] : vector<16x32xf32> to vector<16xf32>
    %136 = vector.shape_cast %135 : vector<16xf32> to vector<16x1xf32>
    %cst_63 = arith.constant 3.200000e+01 : f32
    %137 = vector.broadcast %cst_63 : f32 to vector<16x1xf32>
    %138 = arith.divf %136, %137 : vector<16x1xf32>
    %139 = vector.broadcast %138 : vector<16x1xf32> to vector<16x32xf32>
    %140 = arith.subf %130, %139 : vector<16x32xf32>
    %141 = arith.mulf %140, %140 : vector<16x32xf32>
    %cst_64 = arith.constant dense<0.000000e+00> : vector<16xf32>
    %142 = vector.multi_reduction <add>, %141, %cst_64 [1] : vector<16x32xf32> to vector<16xf32>
    %143 = vector.shape_cast %142 : vector<16xf32> to vector<16x1xf32>
    %cst_65 = arith.constant 3.200000e+01 : f32
    %144 = vector.broadcast %cst_65 : f32 to vector<16x1xf32>
    %145 = arith.divf %143, %144 : vector<16x1xf32>
    %146 = vector.broadcast %138 : vector<16x1xf32> to vector<16x32xf32>
    %147 = arith.subf %130, %146 : vector<16x32xf32>
    %cst_66 = arith.constant 9.99999974E-6 : f32
    %148 = vector.broadcast %cst_66 : f32 to vector<16x1xf32>
    %149 = arith.addf %145, %148 : vector<16x1xf32>
    %150 = math.rsqrt %149 : vector<16x1xf32>
    %151 = vector.broadcast %150 : vector<16x1xf32> to vector<16x32xf32>
    %152 = arith.mulf %147, %151 : vector<16x32xf32>
    %153 = vector.broadcast %132 : vector<1x32xf32> to vector<16x32xf32>
    %154 = arith.mulf %153, %152 : vector<16x32xf32>
    %155 = vector.broadcast %134 : vector<1x32xf32> to vector<16x32xf32>
    %156 = arith.addf %154, %155 : vector<16x32xf32>
    %c0_67 = arith.constant 0 : index
    %c0_68 = arith.constant 0 : index
    %157 = vector.load %arg22[%c0_67, %c0_68] : memref<16x32xf32, #tpu.memory_space<vmem>>, vector<16x32xf32>
    tpu.vector_store %arg22[%c0_67, %c0_68], %156 {strides = array<i32>} : memref<16x32xf32, #tpu.memory_space<vmem>>, vector<16x32xf32>,
    %c0_69 = arith.constant 0 : index
    %c0_70 = arith.constant 0 : index
    %c0_71 = arith.constant 0 : index
    %158 = vector.load %arg20[%c0_69, %c0_70, %c0_71] : memref<1x16x32xf32, #tpu.memory_space<vmem>>, vector<1x16x32xf32>
    %159 = vector.shape_cast %158 : vector<1x16x32xf32> to vector<16x32xf32>
    %160 = vector.shape_cast %156 : vector<16x32xf32> to vector<1x16x32xf32>
    tpu.vector_store %arg20[%c0_69, %c0_70, %c0_71], %160 {strides = array<i32>} : memref<1x16x32xf32, #tpu.memory_space<vmem>>, vector<1x16x32xf32>,
    %c1_i32 = arith.constant 1 : i32
    %161 = arith.cmpi eq, %arg0, %c1_i32 : i32
    %162 = arith.extui %161 : i1 to i32
    %c0_i32_72 = arith.constant 0 : i32
    %163 = arith.cmpi ne, %162, %c0_i32_72 : i32
    scf.if %163 {
      %c0_73 = arith.constant 0 : index
      %c0_74 = arith.constant 0 : index
      %164 = vector.load %arg14[%c0_73, %c0_74] : memref<32x128xf32, #tpu.memory_space<vmem>>, vector<32x128xf32>
      %cst_75 = arith.constant dense<0.000000e+00> : vector<16x128xf32>
      %165 = tpu.matmul %156, %164, %cst_75 {dimension_numbers = #tpu.dot_dimension_numbers<[1], [0], [0], [1], [0, 0, 1, 1], [], []>} : vector<16x32xf32>, vector<32x128xf32>, vector<16x128xf32> -> vector<16x128xf32>
      %c0_76 = arith.constant 0 : index
      %c0_77 = arith.constant 0 : index
      %166 = vector.load %arg15[%c0_76, %c0_77] : memref<2x16xf32, #tpu.memory_space<vmem>>, vector<2x16xf32>
      %c0_78 = arith.constant 0 : index
      %c0_79 = arith.constant 0 : index
      %167 = vector.load %arg17[%c0_78, %c0_79] : memref<16x128xf32, #tpu.memory_space<vmem>>, vector<16x128xf32>
      %cst_80 = arith.constant dense<0.000000e+00> : vector<2x128xf32>
      %168 = tpu.matmul %166, %167, %cst_80 {dimension_numbers = #tpu.dot_dimension_numbers<[1], [0], [0], [1], [0, 0, 1, 1], [], []>} : vector<2x16xf32>, vector<16x128xf32>, vector<2x128xf32> -> vector<2x128xf32>
      %c0_81 = arith.constant 0 : index
      %c0_82 = arith.constant 0 : index
      %169 = vector.load %arg16[%c0_81, %c0_82] : memref<2x16xf32, #tpu.memory_space<vmem>>, vector<2x16xf32>
      %c0_83 = arith.constant 0 : index
      %c0_84 = arith.constant 0 : index
      %170 = vector.load %arg18[%c0_83, %c0_84] : memref<16x128xf32, #tpu.memory_space<vmem>>, vector<16x128xf32>
      %cst_85 = arith.constant dense<0.000000e+00> : vector<2x128xf32>
      %171 = tpu.matmul %169, %170, %cst_85 {dimension_numbers = #tpu.dot_dimension_numbers<[1], [0], [0], [1], [0, 0, 1, 1], [], []>} : vector<2x16xf32>, vector<16x128xf32>, vector<2x128xf32> -> vector<2x128xf32>
      %172 = tpu.concatenate %168, %171 in 0 : vector<2x128xf32>, vector<2x128xf32> -> vector<4x128xf32>
      %c0_86 = arith.constant 0 : index
      %c0_87 = arith.constant 0 : index
      %173 = vector.load %arg19[%c0_86, %c0_87] : memref<16x4xf32, #tpu.memory_space<vmem>>, vector<16x4xf32>
      %cst_88 = arith.constant dense<0.000000e+00> : vector<16x128xf32>
      %174 = tpu.matmul %173, %172, %cst_88 {dimension_numbers = #tpu.dot_dimension_numbers<[1], [0], [0], [1], [0, 0, 1, 1], [], []>} : vector<16x4xf32>, vector<4x128xf32>, vector<16x128xf32> -> vector<16x128xf32>
      %cst_89 = arith.constant 1.000000e+00 : f32
      %175 = vector.broadcast %cst_89 : f32 to vector<16x128xf32>
      %176 = arith.mulf %175, %174 : vector<16x128xf32>
      %177 = arith.addf %165, %176 : vector<16x128xf32>
      %c0_90 = arith.constant 0 : index
      %c0_91 = arith.constant 0 : index
      %178 = vector.load %arg21[%c0_90, %c0_91] : memref<16x128xf32, #tpu.memory_space<vmem>>, vector<16x128xf32>
      tpu.vector_store %arg21[%c0_90, %c0_91], %177 {strides = array<i32>} : memref<16x128xf32, #tpu.memory_space<vmem>>, vector<16x128xf32>,
    } else {
    }
    return
  }
  func.func @transform_0(%arg0: i32) -> (i32, i32) {
    %c0_i32 = arith.constant 0 : i32
    %c0_i32_0 = arith.constant 0 : i32
    %c0_i32_1 = arith.constant 0 : i32
    return %c0_i32, %c0_i32_0 : i32, i32
  }
  func.func @transform_1(%arg0: i32) -> (i32, i32, i32) {
    %c0_i32 = arith.constant 0 : i32
    %c0_i32_0 = arith.constant 0 : i32
    %c0_i32_1 = arith.constant 0 : i32
    return %arg0, %c0_i32, %c0_i32_0 : i32, i32, i32
  }
  func.func @transform_2(%arg0: i32) -> (i32, i32, i32) {
    %c0_i32 = arith.constant 0 : i32
    %c0_i32_0 = arith.constant 0 : i32
    %c0_i32_1 = arith.constant 0 : i32
    return %arg0, %c0_i32, %c0_i32_0 : i32, i32, i32
  }
  func.func @transform_3(%arg0: i32) -> (i32, i32, i32) {
    %c0_i32 = arith.constant 0 : i32
    %c0_i32_0 = arith.constant 0 : i32
    %c0_i32_1 = arith.constant 0 : i32
    return %arg0, %c0_i32, %c0_i32_0 : i32, i32, i32
  }
  func.func @transform_4(%arg0: i32) -> (i32, i32, i32) {
    %c0_i32 = arith.constant 0 : i32
    %c0_i32_0 = arith.constant 0 : i32
    %c0_i32_1 = arith.constant 0 : i32
    return %arg0, %c0_i32, %c0_i32_0 : i32, i32, i32
  }
  func.func @transform_5(%arg0: i32) -> (i32, i32, i32) {
    %c0_i32 = arith.constant 0 : i32
    %c0_i32_0 = arith.constant 0 : i32
    %c0_i32_1 = arith.constant 0 : i32
    return %arg0, %c0_i32, %c0_i32_0 : i32, i32, i32
  }
  func.func @transform_6(%arg0: i32) -> (i32, i32, i32) {
    %c0_i32 = arith.constant 0 : i32
    %c0_i32_0 = arith.constant 0 : i32
    %c0_i32_1 = arith.constant 0 : i32
    return %arg0, %c0_i32, %c0_i32_0 : i32, i32, i32
  }
  func.func @transform_7(%arg0: i32) -> (i32, i32, i32) {
    %c0_i32 = arith.constant 0 : i32
    %c0_i32_0 = arith.constant 0 : i32
    %c0_i32_1 = arith.constant 0 : i32
    return %arg0, %c0_i32, %c0_i32_0 : i32, i32, i32
  }
  func.func @transform_8(%arg0: i32) -> (i32, i32, i32) {
    %c0_i32 = arith.constant 0 : i32
    %c0_i32_0 = arith.constant 0 : i32
    %c0_i32_1 = arith.constant 0 : i32
    return %arg0, %c0_i32, %c0_i32_0 : i32, i32, i32
  }
  func.func @transform_9(%arg0: i32) -> (i32, i32, i32) {
    %c0_i32 = arith.constant 0 : i32
    %c0_i32_0 = arith.constant 0 : i32
    %c0_i32_1 = arith.constant 0 : i32
    return %arg0, %c0_i32, %c0_i32_0 : i32, i32, i32
  }
  func.func @transform_10(%arg0: i32) -> (i32, i32, i32) {
    %c0_i32 = arith.constant 0 : i32
    %c0_i32_0 = arith.constant 0 : i32
    %c0_i32_1 = arith.constant 0 : i32
    return %arg0, %c0_i32, %c0_i32_0 : i32, i32, i32
  }
  func.func @transform_11(%arg0: i32) -> (i32, i32, i32) {
    %c0_i32 = arith.constant 0 : i32
    %c0_i32_0 = arith.constant 0 : i32
    %c0_i32_1 = arith.constant 0 : i32
    return %arg0, %c0_i32, %c0_i32_0 : i32, i32, i32
  }
  func.func @transform_12(%arg0: i32) -> (i32, i32, i32) {
    %c0_i32 = arith.constant 0 : i32
    %c0_i32_0 = arith.constant 0 : i32
    %c0_i32_1 = arith.constant 0 : i32
    return %arg0, %c0_i32, %c0_i32_0 : i32, i32, i32
  }
  func.func @transform_13(%arg0: i32) -> (i32, i32) {
    %c0_i32 = arith.constant 0 : i32
    %c0_i32_0 = arith.constant 0 : i32
    %c0_i32_1 = arith.constant 0 : i32
    return %c0_i32, %c0_i32_0 : i32, i32
  }
  func.func @transform_14(%arg0: i32) -> (i32, i32) {
    %c0_i32 = arith.constant 0 : i32
    %c0_i32_0 = arith.constant 0 : i32
    %c0_i32_1 = arith.constant 0 : i32
    return %c0_i32, %c0_i32_0 : i32, i32
  }
  func.func @transform_15(%arg0: i32) -> (i32, i32) {
    %c0_i32 = arith.constant 0 : i32
    %c0_i32_0 = arith.constant 0 : i32
    %c0_i32_1 = arith.constant 0 : i32
    return %c0_i32, %c0_i32_0 : i32, i32
  }
  func.func @transform_16(%arg0: i32) -> (i32, i32) {
    %c0_i32 = arith.constant 0 : i32
    %c0_i32_0 = arith.constant 0 : i32
    %c0_i32_1 = arith.constant 0 : i32
    return %c0_i32, %c0_i32_0 : i32, i32
  }
  func.func @transform_17(%arg0: i32) -> (i32, i32) {
    %c0_i32 = arith.constant 0 : i32
    %c0_i32_0 = arith.constant 0 : i32
    %c0_i32_1 = arith.constant 0 : i32
    return %c0_i32, %c0_i32_0 : i32, i32
  }
  func.func @transform_18(%arg0: i32) -> (i32, i32) {
    %c0_i32 = arith.constant 0 : i32
    %c0_i32_0 = arith.constant 0 : i32
    %c0_i32_1 = arith.constant 0 : i32
    return %c0_i32, %c0_i32_0 : i32, i32
  }
  func.func @transform_19(%arg0: i32) -> (i32, i32, i32) {
    %c0_i32 = arith.constant 0 : i32
    %c0_i32_0 = arith.constant 0 : i32
    %c0_i32_1 = arith.constant 0 : i32
    return %arg0, %c0_i32, %c0_i32_0 : i32, i32, i32
  }
  func.func @transform_20(%arg0: i32) -> (i32, i32) {
    %c0_i32 = arith.constant 0 : i32
    %c0_i32_0 = arith.constant 0 : i32
    %c0_i32_1 = arith.constant 0 : i32
    return %c0_i32, %c0_i32_0 : i32, i32
  }
}

</mosaic_0001>

<llo_original>
// kernel: elm_forward.1
$region0: #{elm_forward.1}
  #allocation0 [shape = 'u32[]', space=smem, size = 0x4, offset = 0x4, fixed_abs, tag = 'smem constant byte address 0x4 - core index']
  #allocation1 [shape = 'u32[144,128]{1,0:T(1,128)}', space=vmem, size = 0x12000, scoped, tag = 'internal scratch']
  #allocation2 [shape = 'f32[16,32]{1,0:T(8,128)}', space=vmem, size = 0x2000, scoped, tag = 'scratch operand']
  %s0 = inlined_call_operand.vmem [shape: f32[16,32], index: 0, kind: input, shape index: {}]
  %s1 = inlined_call_operand.vmem [shape: f32[2,96,32], index: 1, kind: input, shape index: {}]
  %s2 = inlined_call_operand.vmem [shape: f32[2,96,1], index: 2, kind: input, shape index: {}]
  %s3 = inlined_call_operand.vmem [shape: f32[2,32,32], index: 3, kind: input, shape index: {}]
  %s4 = inlined_call_operand.vmem [shape: f32[2,1,32], index: 4, kind: input, shape index: {}]
  %s5 = inlined_call_operand.vmem [shape: f32[2,1,32], index: 5, kind: input, shape index: {}]
  %s6 = inlined_call_operand.vmem [shape: f32[2,1,32], index: 6, kind: input, shape index: {}]
  %s7 = inlined_call_operand.vmem [shape: f32[2,32,128], index: 7, kind: input, shape index: {}]
  %s8 = inlined_call_operand.vmem [shape: f32[2,1,128], index: 8, kind: input, shape index: {}]
  %s9 = inlined_call_operand.vmem [shape: f32[2,128,32], index: 9, kind: input, shape index: {}]
  %s10 = inlined_call_operand.vmem [shape: f32[2,1,32], index: 10, kind: input, shape index: {}]
  %s11 = inlined_call_operand.vmem [shape: f32[2,1,32], index: 11, kind: input, shape index: {}]
  %s12 = inlined_call_operand.vmem [shape: f32[2,1,32], index: 12, kind: input, shape index: {}]
  %s13 = inlined_call_operand.vmem [shape: f32[32,128], index: 13, kind: input, shape index: {}]
  %s14 = inlined_call_operand.vmem [shape: f32[2,16], index: 14, kind: input, shape index: {}]
  %s15 = inlined_call_operand.vmem [shape: f32[2,16], index: 15, kind: input, shape index: {}]
  %s16 = inlined_call_operand.vmem [shape: f32[16,128], index: 16, kind: input, shape index: {}]
  %s17 = inlined_call_operand.vmem [shape: f32[16,128], index: 17, kind: input, shape index: {}]
  %s18 = inlined_call_operand.vmem [shape: f32[16,4], index: 18, kind: input, shape index: {}]
  %s19 = inlined_call_operand.vmem [shape: f32[2,16,32], index: 19, kind: output, shape index: {0}]
  %s20 = inlined_call_operand.vmem [shape: f32[16,128], index: 20, kind: output, shape index: {1}]
  %21 = xla_tuple %s19, %s20
  %s22 = sld [smem:[#allocation0]]
  $region125: #{elm_forward.1} parent=0
    _
  %s24 = ssub.s32 1, %s22
  %s25 = scalar_select 0, %s24, %s22
  loop: start=0, step=1, limit=4
  $region2: #{elm_forward.1} parent=0 // loop_pre_header
    _
  $region3: #{elm_forward.1} parent=0 // loop_header
    %s27 = sphi 0, %s31
    %p28 = scmp.ge.s32.totalorder %s27, 4
    %s35 = sphi 0, %s35
    %s37 = sphi 0, %s35
    %s38 = sphi 0, %s37
    %s52 = sphi 0, %s38
    %s58 = sphi 0, %s60
    %s61 = sphi 0, %s58
    %s62 = sphi 0, %s61
    %s78 = sphi 0, %s62
    %s84 = sphi 0, %s86
    %s87 = sphi 0, %s84
    %s88 = sphi 0, %s87
    %s104 = sphi 0, %s88
    %s110 = sphi 0, %s112
    %s113 = sphi 0, %s110
    %s114 = sphi 0, %s113
    %s130 = sphi 0, %s114
    %s136 = sphi 0, %s138
    %s139 = sphi 0, %s136
    %s140 = sphi 0, %s139
    %s156 = sphi 0, %s140
    %s162 = sphi 0, %s164
    %s165 = sphi 0, %s162
    %s166 = sphi 0, %s165
    %s182 = sphi 0, %s166
    %s188 = sphi 0, %s190
    %s191 = sphi 0, %s188
    %s192 = sphi 0, %s191
    %s208 = sphi 0, %s192
    %s214 = sphi 0, %s216
    %s217 = sphi 0, %s214
    %s218 = sphi 0, %s217
    %s234 = sphi 0, %s218
    %s240 = sphi 0, %s242
    %s243 = sphi 0, %s240
    %s244 = sphi 0, %s243
    %s260 = sphi 0, %s244
    %s266 = sphi 0, %s268
    %s269 = sphi 0, %s266
    %s270 = sphi 0, %s269
    %s286 = sphi 0, %s270
    %s292 = sphi 0, %s294
    %s295 = sphi 0, %s292
    %s296 = sphi 0, %s295
    %s312 = sphi 0, %s296
    %s318 = sphi 0, %s320
    %s321 = sphi 0, %s318
    %s322 = sphi 0, %s321
    %s338 = sphi 0, %s322
    %s344 = sphi 0, %s346
    %s347 = sphi 0, %s344
    %s348 = sphi 0, %s347
    %s364 = sphi 0, %s348
    %s368 = sphi 0, %s368
    %s370 = sphi 0, %s368
    %s371 = sphi 0, %s370
    %s385 = sphi 0, %s371
    %s389 = sphi 0, %s389
    %s391 = sphi 0, %s389
    %s392 = sphi 0, %s391
    %s406 = sphi 0, %s392
    %s410 = sphi 0, %s410
    %s412 = sphi 0, %s410
    %s413 = sphi 0, %s412
    %s427 = sphi 0, %s413
    %s431 = sphi 0, %s431
    %s433 = sphi 0, %s431
    %s434 = sphi 0, %s433
    %s448 = sphi 0, %s434
    %s452 = sphi 0, %s452
    %s454 = sphi 0, %s452
    %s455 = sphi 0, %s454
    %s469 = sphi 0, %s455
    %s473 = sphi 0, %s473
    %s475 = sphi 0, %s473
    %s476 = sphi 0, %s475
    %s490 = sphi 0, %s476
    %s496 = sphi 0, %s498
    %s499 = sphi 0, %s496
    %s500 = sphi 0, %s499
    %s516 = sphi 0, %s500
    %s520 = sphi 0, %s520
    %s522 = sphi 0, %s520
    %s523 = sphi 0, %s522
    %s537 = sphi 0, %s523
  $region4: #{elm_forward.1} parent=0 // loop_header_branch
    %30 = sbr.rel (%p28) target = $region8
  $region5: #{elm_forward.1} parent=0 // loop_body
    %s32 = ssub.s32 %s27, 1
    %s33 = ssub.s32 %s27, 2
    %s34 = sadd.s32 %s27, 1
    %s36 = sadd.s32 %s35, 1
    %p39 = scmp.eq.s32.totalorder %s27, 1
    %p40 = scmp.ne.s32.totalorder %s35, %s37
    %p41 = scmp.eq.s32.totalorder %s27, 0
    %p42 = por %p40, %p41
    %p43 = scmp.ne.s32.totalorder %s35, %s37
    %p44 = scmp.eq.s32.totalorder %s32, 1
    %p45 = por %p43, %p44
    %p46 = scmp.ne.s32.totalorder %s37, %s38
    %p47 = scmp.eq.s32.totalorder %s32, 0
    %p48 = por %p46, %p47
    %p49 = scmp.ne.s32.totalorder %s37, %s38
    %p50 = scmp.eq.s32.totalorder %s33, 1
    %p51 = por %p49, %p50
    %p53 = scmp.ne.s32.totalorder %s38, %s52
    %p54 = scmp.eq.s32.totalorder %s33, 0
    %p55 = por %p53, %p54
    %s56 = ssub.s32 %s27, %s34
    %p57 = scmp.eq.s32.totalorder %s56, 0
    %s59 = sadd.s32 %s58, 1
    %s60 = scalar_select %p57, %s58, %s59
    %p63 = pneg %p57
    %p64 = scmp.eq.s32.totalorder %s27, 1
    %p65 = por %p63, %p64
    %p66 = scmp.ne.s32.totalorder %s58, %s61
    %p67 = scmp.eq.s32.totalorder %s27, 0
    %p68 = por %p66, %p67
    %p69 = scmp.ne.s32.totalorder %s58, %s61
    %p70 = scmp.eq.s32.totalorder %s32, 1
    %p71 = por %p69, %p70
    %p72 = scmp.ne.s32.totalorder %s61, %s62
    %p73 = scmp.eq.s32.totalorder %s32, 0
    %p74 = por %p72, %p73
    %p75 = scmp.ne.s32.totalorder %s61, %s62
    %p76 = scmp.eq.s32.totalorder %s33, 1
    %p77 = por %p75, %p76
    %p79 = scmp.ne.s32.totalorder %s62, %s78
    %p80 = scmp.eq.s32.totalorder %s33, 0
    %p81 = por %p79, %p80
    %s82 = ssub.s32 %s27, %s34
    %p83 = scmp.eq.s32.totalorder %s82, 0
    %s85 = sadd.s32 %s84, 1
    %s86 = scalar_select %p83, %s84, %s85
    %p89 = pneg %p83
    %p90 = scmp.eq.s32.totalorder %s27, 1
    %p91 = por %p89, %p90
    %p92 = scmp.ne.s32.totalorder %s84, %s87
    %p93 = scmp.eq.s32.totalorder %s27, 0
    %p94 = por %p92, %p93
    %p95 = scmp.ne.s32.totalorder %s84, %s87
    %p96 = scmp.eq.s32.totalorder %s32, 1
    %p97 = por %p95, %p96
    %p98 = scmp.ne.s32.totalorder %s87, %s88
    %p99 = scmp.eq.s32.totalorder %s32, 0
    %p100 = por %p98, %p99
    %p101 = scmp.ne.s32.totalorder %s87, %s88
    %p102 = scmp.eq.s32.totalorder %s33, 1
    %p103 = por %p101, %p102
    %p105 = scmp.ne.s32.totalorder %s88, %s104
    %p106 = scmp.eq.s32.totalorder %s33, 0
    %p107 = por %p105, %p106
    %s108 = ssub.s32 %s27, %s34
    %p109 = scmp.eq.s32.totalorder %s108, 0
    %s111 = sadd.s32 %s110, 1
    %s112 = scalar_select %p109, %s110, %s111
    %p115 = pneg %p109
    %p116 = scmp.eq.s32.totalorder %s27, 1
    %p117 = por %p115, %p116
    %p118 = scmp.ne.s32.totalorder %s110, %s113
    %p119 = scmp.eq.s32.totalorder %s27, 0
    %p120 = por %p118, %p119
    %p121 = scmp.ne.s32.totalorder %s110, %s113
    %p122 = scmp.eq.s32.totalorder %s32, 1
    %p123 = por %p121, %p122
    %p124 = scmp.ne.s32.totalorder %s113, %s114
    %p125 = scmp.eq.s32.totalorder %s32, 0
    %p126 = por %p124, %p125
    %p127 = scmp.ne.s32.totalorder %s113, %s114
    %p128 = scmp.eq.s32.totalorder %s33, 1
    %p129 = por %p127, %p128
    %p131 = scmp.ne.s32.totalorder %s114, %s130
    %p132 = scmp.eq.s32.totalorder %s33, 0
    %p133 = por %p131, %p132
    %s134 = ssub.s32 %s27, %s34
    %p135 = scmp.eq.s32.totalorder %s134, 0
    %s137 = sadd.s32 %s136, 1
    %s138 = scalar_select %p135, %s136, %s137
    %p141 = pneg %p135
    %p142 = scmp.eq.s32.totalorder %s27, 1
    %p143 = por %p141, %p142
    %p144 = scmp.ne.s32.totalorder %s136, %s139
    %p145 = scmp.eq.s32.totalorder %s27, 0
    %p146 = por %p144, %p145
    %p147 = scmp.ne.s32.totalorder %s136, %s139
    %p148 = scmp.eq.s32.totalorder %s32, 1
    %p149 = por %p147, %p148
    %p150 = scmp.ne.s32.totalorder %s139, %s140
    %p151 = scmp.eq.s32.totalorder %s32, 0
    %p152 = por %p150, %p151
    %p153 = scmp.ne.s32.totalorder %s139, %s140
    %p154 = scmp.eq.s32.totalorder %s33, 1
    %p155 = por %p153, %p154
    %p157 = scmp.ne.s32.totalorder %s140, %s156
    %p158 = scmp.eq.s32.totalorder %s33, 0
    %p159 = por %p157, %p158
    %s160 = ssub.s32 %s27, %s34
    %p161 = scmp.eq.s32.totalorder %s160, 0
    %s163 = sadd.s32 %s162, 1
    %s164 = scalar_select %p161, %s162, %s163
    %p167 = pneg %p161
    %p168 = scmp.eq.s32.totalorder %s27, 1
    %p169 = por %p167, %p168
    %p170 = scmp.ne.s32.totalorder %s162, %s165
    %p171 = scmp.eq.s32.totalorder %s27, 0
    %p172 = por %p170, %p171
    %p173 = scmp.ne.s32.totalorder %s162, %s165
    %p174 = scmp.eq.s32.totalorder %s32, 1
    %p175 = por %p173, %p174
    %p176 = scmp.ne.s32.totalorder %s165, %s166
    %p177 = scmp.eq.s32.totalorder %s32, 0
    %p178 = por %p176, %p177
    %p179 = scmp.ne.s32.totalorder %s165, %s166
    %p180 = scmp.eq.s32.totalorder %s33, 1
    %p181 = por %p179, %p180
    %p183 = scmp.ne.s32.totalorder %s166, %s182
    %p184 = scmp.eq.s32.totalorder %s33, 0
    %p185 = por %p183, %p184
    %s186 = ssub.s32 %s27, %s34
    %p187 = scmp.eq.s32.totalorder %s186, 0
    %s189 = sadd.s32 %s188, 1
    %s190 = scalar_select %p187, %s188, %s189
    %p193 = pneg %p187
    %p194 = scmp.eq.s32.totalorder %s27, 1
    %p195 = por %p193, %p194
    %p196 = scmp.ne.s32.totalorder %s188, %s191
    %p197 = scmp.eq.s32.totalorder %s27, 0
    %p198 = por %p196, %p197
    %p199 = scmp.ne.s32.totalorder %s188, %s191
    %p200 = scmp.eq.s32.totalorder %s32, 1
    %p201 = por %p199, %p200
    %p202 = scmp.ne.s32.totalorder %s191, %s192
    %p203 = scmp.eq.s32.totalorder %s32, 0
    %p204 = por %p202, %p203
    %p205 = scmp.ne.s32.totalorder %s191, %s192
    %p206 = scmp.eq.s32.totalorder %s33, 1
    %p207 = por %p205, %p206
    %p209 = scmp.ne.s32.totalorder %s192, %s208
    %p210 = scmp.eq.s32.totalorder %s33, 0
    %p211 = por %p209, %p210
    %s212 = ssub.s32 %s27, %s34
    %p213 = scmp.eq.s32.totalorder %s212, 0
    %s215 = sadd.s32 %s214, 1
    %s216 = scalar_select %p213, %s214, %s215
    %p219 = pneg %p213
    %p220 = scmp.eq.s32.totalorder %s27, 1
    %p221 = por %p219, %p220
    %p222 = scmp.ne.s32.totalorder %s214, %s217
    %p223 = scmp.eq.s32.totalorder %s27, 0
    %p224 = por %p222, %p223
    %p225 = scmp.ne.s32.totalorder %s214, %s217
    %p226 = scmp.eq.s32.totalorder %s32, 1
    %p227 = por %p225, %p226
    %p228 = scmp.ne.s32.totalorder %s217, %s218
    %p229 = scmp.eq.s32.totalorder %s32, 0
    %p230 = por %p228, %p229
    %p231 = scmp.ne.s32.totalorder %s217, %s218
    %p232 = scmp.eq.s32.totalorder %s33, 1
    %p233 = por %p231, %p232
    %p235 = scmp.ne.s32.totalorder %s218, %s234
    %p236 = scmp.eq.s32.totalorder %s33, 0
    %p237 = por %p235, %p236
    %s238 = ssub.s32 %s27, %s34
    %p239 = scmp.eq.s32.totalorder %s238, 0
    %s241 = sadd.s32 %s240, 1
    %s242 = scalar_select %p239, %s240, %s241
    %p245 = pneg %p239
    %p246 = scmp.eq.s32.totalorder %s27, 1
    %p247 = por %p245, %p246
    %p248 = scmp.ne.s32.totalorder %s240, %s243
    %p249 = scmp.eq.s32.totalorder %s27, 0
    %p250 = por %p248, %p249
    %p251 = scmp.ne.s32.totalorder %s240, %s243
    %p252 = scmp.eq.s32.totalorder %s32, 1
    %p253 = por %p251, %p252
    %p254 = scmp.ne.s32.totalorder %s243, %s244
    %p255 = scmp.eq.s32.totalorder %s32, 0
    %p256 = por %p254, %p255
    %p257 = scmp.ne.s32.totalorder %s243, %s244
    %p258 = scmp.eq.s32.totalorder %s33, 1
    %p259 = por %p257, %p258
    %p261 = scmp.ne.s32.totalorder %s244, %s260
    %p262 = scmp.eq.s32.totalorder %s33, 0
    %p263 = por %p261, %p262
    %s264 = ssub.s32 %s27, %s34
    %p265 = scmp.eq.s32.totalorder %s264, 0
    %s267 = sadd.s32 %s266, 1
    %s268 = scalar_select %p265, %s266, %s267
    %p271 = pneg %p265
    %p272 = scmp.eq.s32.totalorder %s27, 1
    %p273 = por %p271, %p272
    %p274 = scmp.ne.s32.totalorder %s266, %s269
    %p275 = scmp.eq.s32.totalorder %s27, 0
    %p276 = por %p274, %p275
    %p277 = scmp.ne.s32.totalorder %s266, %s269
    %p278 = scmp.eq.s32.totalorder %s32, 1
    %p279 = por %p277, %p278
    %p280 = scmp.ne.s32.totalorder %s269, %s270
    %p281 = scmp.eq.s32.totalorder %s32, 0
    %p282 = por %p280, %p281
    %p283 = scmp.ne.s32.totalorder %s269, %s270
    %p284 = scmp.eq.s32.totalorder %s33, 1
    %p285 = por %p283, %p284
    %p287 = scmp.ne.s32.totalorder %s270, %s286
    %p288 = scmp.eq.s32.totalorder %s33, 0
    %p289 = por %p287, %p288
    %s290 = ssub.s32 %s27, %s34
    %p291 = scmp.eq.s32.totalorder %s290, 0
    %s293 = sadd.s32 %s292, 1
    %s294 = scalar_select %p291, %s292, %s293
    %p297 = pneg %p291
    %p298 = scmp.eq.s32.totalorder %s27, 1
    %p299 = por %p297, %p298
    %p300 = scmp.ne.s32.totalorder %s292, %s295
    %p301 = scmp.eq.s32.totalorder %s27, 0
    %p302 = por %p300, %p301
    %p303 = scmp.ne.s32.totalorder %s292, %s295
    %p304 = scmp.eq.s32.totalorder %s32, 1
    %p305 = por %p303, %p304
    %p306 = scmp.ne.s32.totalorder %s295, %s296
    %p307 = scmp.eq.s32.totalorder %s32, 0
    %p308 = por %p306, %p307
    %p309 = scmp.ne.s32.totalorder %s295, %s296
    %p310 = scmp.eq.s32.totalorder %s33, 1
    %p311 = por %p309, %p310
    %p313 = scmp.ne.s32.totalorder %s296, %s312
    %p314 = scmp.eq.s32.totalorder %s33, 0
    %p315 = por %p313, %p314
    %s316 = ssub.s32 %s27, %s34
    %p317 = scmp.eq.s32.totalorder %s316, 0
    %s319 = sadd.s32 %s318, 1
    %s320 = scalar_select %p317, %s318, %s319
    %p323 = pneg %p317
    %p324 = scmp.eq.s32.totalorder %s27, 1
    %p325 = por %p323, %p324
    %p326 = scmp.ne.s32.totalorder %s318, %s321
    %p327 = scmp.eq.s32.totalorder %s27, 0
    %p328 = por %p326, %p327
    %p329 = scmp.ne.s32.totalorder %s318, %s321
    %p330 = scmp.eq.s32.totalorder %s32, 1
    %p331 = por %p329, %p330
    %p332 = scmp.ne.s32.totalorder %s321, %s322
    %p333 = scmp.eq.s32.totalorder %s32, 0
    %p334 = por %p332, %p333
    %p335 = scmp.ne.s32.totalorder %s321, %s322
    %p336 = scmp.eq.s32.totalorder %s33, 1
    %p337 = por %p335, %p336
    %p339 = scmp.ne.s32.totalorder %s322, %s338
    %p340 = scmp.eq.s32.totalorder %s33, 0
    %p341 = por %p339, %p340
    %s342 = ssub.s32 %s27, %s34
    %p343 = scmp.eq.s32.totalorder %s342, 0
    %s345 = sadd.s32 %s344, 1
    %s346 = scalar_select %p343, %s344, %s345
    %p349 = pneg %p343
    %p350 = scmp.eq.s32.totalorder %s27, 1
    %p351 = por %p349, %p350
    %p352 = scmp.ne.s32.totalorder %s344, %s347
    %p353 = scmp.eq.s32.totalorder %s27, 0
    %p354 = por %p352, %p353
    %p355 = scmp.ne.s32.totalorder %s344, %s347
    %p356 = scmp.eq.s32.totalorder %s32, 1
    %p357 = por %p355, %p356
    %p358 = scmp.ne.s32.totalorder %s347, %s348
    %p359 = scmp.eq.s32.totalorder %s32, 0
    %p360 = por %p358, %p359
    %p361 = scmp.ne.s32.totalorder %s347, %s348
    %p362 = scmp.eq.s32.totalorder %s33, 1
    %p363 = por %p361, %p362
    %p365 = scmp.ne.s32.totalorder %s348, %s364
    %p366 = scmp.eq.s32.totalorder %s33, 0
    %p367 = por %p365, %p366
    %s369 = sadd.s32 %s368, 1
    %p372 = scmp.eq.s32.totalorder %s27, 1
    %p373 = scmp.ne.s32.totalorder %s368, %s370
    %p374 = scmp.eq.s32.totalorder %s27, 0
    %p375 = por %p373, %p374
    %p376 = scmp.ne.s32.totalorder %s368, %s370
    %p377 = scmp.eq.s32.totalorder %s32, 1
    %p378 = por %p376, %p377
    %p379 = scmp.ne.s32.totalorder %s370, %s371
    %p380 = scmp.eq.s32.totalorder %s32, 0
    %p381 = por %p379, %p380
    %p382 = scmp.ne.s32.totalorder %s370, %s371
    %p383 = scmp.eq.s32.totalorder %s33, 1
    %p384 = por %p382, %p383
    %p386 = scmp.ne.s32.totalorder %s371, %s385
    %p387 = scmp.eq.s32.totalorder %s33, 0
    %p388 = por %p386, %p387
    %s390 = sadd.s32 %s389, 1
    %p393 = scmp.eq.s32.totalorder %s27, 1
    %p394 = scmp.ne.s32.totalorder %s389, %s391
    %p395 = scmp.eq.s32.totalorder %s27, 0
    %p396 = por %p394, %p395
    %p397 = scmp.ne.s32.totalorder %s389, %s391
    %p398 = scmp.eq.s32.totalorder %s32, 1
    %p399 = por %p397, %p398
    %p400 = scmp.ne.s32.totalorder %s391, %s392
    %p401 = scmp.eq.s32.totalorder %s32, 0
    %p402 = por %p400, %p401
    %p403 = scmp.ne.s32.totalorder %s391, %s392
    %p404 = scmp.eq.s32.totalorder %s33, 1
    %p405 = por %p403, %p404
    %p407 = scmp.ne.s32.totalorder %s392, %s406
    %p408 = scmp.eq.s32.totalorder %s33, 0
    %p409 = por %p407, %p408
    %s411 = sadd.s32 %s410, 1
    %p414 = scmp.eq.s32.totalorder %s27, 1
    %p415 = scmp.ne.s32.totalorder %s410, %s412
    %p416 = scmp.eq.s32.totalorder %s27, 0
    %p417 = por %p415, %p416
    %p418 = scmp.ne.s32.totalorder %s410, %s412
    %p419 = scmp.eq.s32.totalorder %s32, 1
    %p420 = por %p418, %p419
    %p421 = scmp.ne.s32.totalorder %s412, %s413
    %p422 = scmp.eq.s32.totalorder %s32, 0
    %p423 = por %p421, %p422
    %p424 = scmp.ne.s32.totalorder %s412, %s413
    %p425 = scmp.eq.s32.totalorder %s33, 1
    %p426 = por %p424, %p425
    %p428 = scmp.ne.s32.totalorder %s413, %s427
    %p429 = scmp.eq.s32.totalorder %s33, 0
    %p430 = por %p428, %p429
    %s432 = sadd.s32 %s431, 1
    %p435 = scmp.eq.s32.totalorder %s27, 1
    %p436 = scmp.ne.s32.totalorder %s431, %s433
    %p437 = scmp.eq.s32.totalorder %s27, 0
    %p438 = por %p436, %p437
    %p439 = scmp.ne.s32.totalorder %s431, %s433
    %p440 = scmp.eq.s32.totalorder %s32, 1
    %p441 = por %p439, %p440
    %p442 = scmp.ne.s32.totalorder %s433, %s434
    %p443 = scmp.eq.s32.totalorder %s32, 0
    %p444 = por %p442, %p443
    %p445 = scmp.ne.s32.totalorder %s433, %s434
    %p446 = scmp.eq.s32.totalorder %s33, 1
    %p447 = por %p445, %p446
    %p449 = scmp.ne.s32.totalorder %s434, %s448
    %p450 = scmp.eq.s32.totalorder %s33, 0
    %p451 = por %p449, %p450
    %s453 = sadd.s32 %s452, 1
    %p456 = scmp.eq.s32.totalorder %s27, 1
    %p457 = scmp.ne.s32.totalorder %s452, %s454
    %p458 = scmp.eq.s32.totalorder %s27, 0
    %p459 = por %p457, %p458
    %p460 = scmp.ne.s32.totalorder %s452, %s454
    %p461 = scmp.eq.s32.totalorder %s32, 1
    %p462 = por %p460, %p461
    %p463 = scmp.ne.s32.totalorder %s454, %s455
    %p464 = scmp.eq.s32.totalorder %s32, 0
    %p465 = por %p463, %p464
    %p466 = scmp.ne.s32.totalorder %s454, %s455
    %p467 = scmp.eq.s32.totalorder %s33, 1
    %p468 = por %p466, %p467
    %p470 = scmp.ne.s32.totalorder %s455, %s469
    %p471 = scmp.eq.s32.totalorder %s33, 0
    %p472 = por %p470, %p471
    %s474 = sadd.s32 %s473, 1
    %p477 = scmp.eq.s32.totalorder %s27, 1
    %p478 = scmp.ne.s32.totalorder %s473, %s475
    %p479 = scmp.eq.s32.totalorder %s27, 0
    %p480 = por %p478, %p479
    %p481 = scmp.ne.s32.totalorder %s473, %s475
    %p482 = scmp.eq.s32.totalorder %s32, 1
    %p483 = por %p481, %p482
    %p484 = scmp.ne.s32.totalorder %s475, %s476
    %p485 = scmp.eq.s32.totalorder %s32, 0
    %p486 = por %p484, %p485
    %p487 = scmp.ne.s32.totalorder %s475, %s476
    %p488 = scmp.eq.s32.totalorder %s33, 1
    %p489 = por %p487, %p488
    %p491 = scmp.ne.s32.totalorder %s476, %s490
    %p492 = scmp.eq.s32.totalorder %s33, 0
    %p493 = por %p491, %p492
    %s494 = ssub.s32 %s27, %s34
    %p495 = scmp.eq.s32.totalorder %s494, 0
    %s497 = sadd.s32 %s496, 1
    %s498 = scalar_select %p495, %s496, %s497
    %p501 = pneg %p495
    %p502 = scmp.eq.s32.totalorder %s27, 1
    %p503 = por %p501, %p502
    %p504 = scmp.ne.s32.totalorder %s496, %s499
    %p505 = scmp.eq.s32.totalorder %s27, 0
    %p506 = por %p504, %p505
    %p507 = scmp.ne.s32.totalorder %s496, %s499
    %p508 = scmp.eq.s32.totalorder %s32, 1
    %p509 = por %p507, %p508
    %p510 = scmp.ne.s32.totalorder %s499, %s500
    %p511 = scmp.eq.s32.totalorder %s32, 0
    %p512 = por %p510, %p511
    %p513 = scmp.ne.s32.totalorder %s499, %s500
    %p514 = scmp.eq.s32.totalorder %s33, 1
    %p515 = por %p513, %p514
    %p517 = scmp.ne.s32.totalorder %s500, %s516
    %p518 = scmp.eq.s32.totalorder %s33, 0
    %p519 = por %p517, %p518
    %s521 = sadd.s32 %s520, 1
    %p524 = scmp.eq.s32.totalorder %s27, 1
    %p525 = scmp.ne.s32.totalorder %s520, %s522
    %p526 = scmp.eq.s32.totalorder %s27, 0
    %p527 = por %p525, %p526
    %p528 = scmp.ne.s32.totalorder %s520, %s522
    %p529 = scmp.eq.s32.totalorder %s32, 1
    %p530 = por %p528, %p529
    %p531 = scmp.ne.s32.totalorder %s522, %s523
    %p532 = scmp.eq.s32.totalorder %s32, 0
    %p533 = por %p531, %p532
    %p534 = scmp.ne.s32.totalorder %s522, %s523
    %p535 = scmp.eq.s32.totalorder %s33, 1
    %p536 = por %p534, %p535
    %p538 = scmp.ne.s32.totalorder %s523, %s537
    %p539 = scmp.eq.s32.totalorder %s33, 0
    %p540 = por %p538, %p539
    %p541 = scmp.le.s32.totalorder 1, %s27
    %p542 = scmp.lt.s32.totalorder %s27, 3
    %p543 = pnand %p541, %p542
    %p544 = pneg %p543
    // Predicated region
    $region9: #{elm_forward.1} parent=5 // pred_check
      _
    $region10: #{elm_forward.1} parent=5 // pred_check_branch
      %546 = sbr.rel (%p543) target = $region12
    $region11: #{elm_forward.1} parent=5 // pred_region
      %s547 = ssub.s32 %s27, 1
      // Predicated region
      $region13: #{elm_forward.1} parent=11 // pred_check
        %p548 = pneg %p48
      $region14: #{elm_forward.1} parent=11 // pred_check_branch
        %550 = sbr.rel (%p548) target = $region16
      $region15: #{elm_forward.1} parent=11 // pred_region
        _
      $region16: #{elm_forward.1} parent=11 // pred_fallthru
        _
      // Predicated region
      $region17: #{elm_forward.1} parent=11 // pred_check
        %p551 = pneg %p381
      $region18: #{elm_forward.1} parent=11 // pred_check_branch
        %553 = sbr.rel (%p551) target = $region20
      $region19: #{elm_forward.1} parent=11 // pred_region
        _
      $region20: #{elm_forward.1} parent=11 // pred_fallthru
        _
      // Predicated region
      $region21: #{elm_forward.1} parent=11 // pred_check
        %p554 = pneg %p402
      $region22: #{elm_forward.1} parent=11 // pred_check_branch
        %556 = sbr.rel (%p554) target = $region24
      $region23: #{elm_forward.1} parent=11 // pred_region
        _
      $region24: #{elm_forward.1} parent=11 // pred_fallthru
        _
      // Predicated region
      $region25: #{elm_forward.1} parent=11 // pred_check
        %p557 = pneg %p423
      $region26: #{elm_forward.1} parent=11 // pred_check_branch
        %559 = sbr.rel (%p557) target = $region28
      $region27: #{elm_forward.1} parent=11 // pred_region
        _
      $region28: #{elm_forward.1} parent=11 // pred_fallthru
        _
      // Predicated region
      $region29: #{elm_forward.1} parent=11 // pred_check
        %p560 = pneg %p444
      $region30: #{elm_forward.1} parent=11 // pred_check_branch
        %562 = sbr.rel (%p560) target = $region32
      $region31: #{elm_forward.1} parent=11 // pred_region
        _
      $region32: #{elm_forward.1} parent=11 // pred_fallthru
        _
      // Predicated region
      $region33: #{elm_forward.1} parent=11 // pred_check
        %p563 = pneg %p465
      $region34: #{elm_forward.1} parent=11 // pred_check_branch
        %565 = sbr.rel (%p563) target = $region36
      $region35: #{elm_forward.1} parent=11 // pred_region
        _
      $region36: #{elm_forward.1} parent=11 // pred_fallthru
        _
      // Predicated region
      $region37: #{elm_forward.1} parent=11 // pred_check
        %p566 = pneg %p486
      $region38: #{elm_forward.1} parent=11 // pred_check_branch
        %568 = sbr.rel (%p566) target = $region40
      $region39: #{elm_forward.1} parent=11 // pred_region
        _
      $region40: #{elm_forward.1} parent=11 // pred_fallthru
        _
    $region12: #{elm_forward.1} parent=5 // pred_fallthru
      _
    %p569 = scmp.lt.s32.totalorder %s27, 2
    // Predicated region
    $region41: #{elm_forward.1} parent=5 // pred_check
      %p570 = pneg %p569
    $region42: #{elm_forward.1} parent=5 // pred_check_branch
      %572 = sbr.rel (%p570) target = $region44
    $region43: #{elm_forward.1} parent=5 // pred_region
      // Predicated region
      $region45: #{elm_forward.1} parent=43 // pred_check
        %p573 = pneg %p68
      $region46: #{elm_forward.1} parent=43 // pred_check_branch
        %575 = sbr.rel (%p573) target = $region48
      $region47: #{elm_forward.1} parent=43 // pred_region
        %p576 = scmp.lt.s32.totalorder %s27, 1
        %s577 = scalar_select %p576, %s27, 1
        %s578 = smul.addr %s577, 12
        %s579 = smul.addr %s578, 8
        %s580 = scalar_lea.vmem %s1, %s579
      $region48: #{elm_forward.1} parent=43 // pred_fallthru
        _
      // Predicated region
      $region49: #{elm_forward.1} parent=43 // pred_check
        %p581 = pneg %p94
      $region50: #{elm_forward.1} parent=43 // pred_check_branch
        %583 = sbr.rel (%p581) target = $region52
      $region51: #{elm_forward.1} parent=43 // pred_region
        %p584 = scmp.lt.s32.totalorder %s27, 1
        %s585 = scalar_select %p584, %s27, 1
        %s586 = smul.addr %s585, 12
        %s587 = smul.addr %s586, 8
        %s588 = scalar_lea.vmem %s2, %s587
      $region52: #{elm_forward.1} parent=43 // pred_fallthru
        _
      // Predicated region
      $region53: #{elm_forward.1} parent=43 // pred_check
        %p589 = pneg %p120
      $region54: #{elm_forward.1} parent=43 // pred_check_branch
        %591 = sbr.rel (%p589) target = $region56
      $region55: #{elm_forward.1} parent=43 // pred_region
        %p592 = scmp.lt.s32.totalorder %s27, 1
        %s593 = scalar_select %p592, %s27, 1
        %s594 = smul.addr %s593, 4
        %s595 = smul.addr %s594, 8
        %s596 = scalar_lea.vmem %s3, %s595
      $region56: #{elm_forward.1} parent=43 // pred_fallthru
        _
      // Predicated region
      $region57: #{elm_forward.1} parent=43 // pred_check
        %p597 = pneg %p146
      $region58: #{elm_forward.1} parent=43 // pred_check_branch
        %599 = sbr.rel (%p597) target = $region60
      $region59: #{elm_forward.1} parent=43 // pred_region
        %p600 = scmp.lt.s32.totalorder %s27, 1
        %s601 = scalar_select %p600, %s27, 1
        %s602 = scalar_lea.vmem %s4, %s601
      $region60: #{elm_forward.1} parent=43 // pred_fallthru
        _
      // Predicated region
      $region61: #{elm_forward.1} parent=43 // pred_check
        %p603 = pneg %p172
      $region62: #{elm_forward.1} parent=43 // pred_check_branch
        %605 = sbr.rel (%p603) target = $region64
      $region63: #{elm_forward.1} parent=43 // pred_region
        %p606 = scmp.lt.s32.totalorder %s27, 1
        %s607 = scalar_select %p606, %s27, 1
        %s608 = scalar_lea.vmem %s5, %s607
      $region64: #{elm_forward.1} parent=43 // pred_fallthru
        _
      // Predicated region
      $region65: #{elm_forward.1} parent=43 // pred_check
        %p609 = pneg %p198
      $region66: #{elm_forward.1} parent=43 // pred_check_branch
        %611 = sbr.rel (%p609) target = $region68
      $region67: #{elm_forward.1} parent=43 // pred_region
        %p612 = scmp.lt.s32.totalorder %s27, 1
        %s613 = scalar_select %p612, %s27, 1
        %s614 = scalar_lea.vmem %s6, %s613
      $region68: #{elm_forward.1} parent=43 // pred_fallthru
        _
      // Predicated region
      $region69: #{elm_forward.1} parent=43 // pred_check
        %p615 = pneg %p224
      $region70: #{elm_forward.1} parent=43 // pred_check_branch
        %617 = sbr.rel (%p615) target = $region72
      $region71: #{elm_forward.1} parent=43 // pred_region
        %p618 = scmp.lt.s32.totalorder %s27, 1
        %s619 = scalar_select %p618, %s27, 1
        %s620 = smul.addr %s619, 4
        %s621 = smul.addr %s620, 8
        %s622 = scalar_lea.vmem %s7, %s621
      $region72: #{elm_forward.1} parent=43 // pred_fallthru
        _
      // Predicated region
      $region73: #{elm_forward.1} parent=43 // pred_check
        %p623 = pneg %p250
      $region74: #{elm_forward.1} parent=43 // pred_check_branch
        %625 = sbr.rel (%p623) target = $region76
      $region75: #{elm_forward.1} parent=43 // pred_region
        %p626 = scmp.lt.s32.totalorder %s27, 1
        %s627 = scalar_select %p626, %s27, 1
        %s628 = scalar_lea.vmem %s8, %s627
      $region76: #{elm_forward.1} parent=43 // pred_fallthru
        _
      // Predicated region
      $region77: #{elm_forward.1} parent=43 // pred_check
        %p629 = pneg %p276
      $region78: #{elm_forward.1} parent=43 // pred_check_branch
        %631 = sbr.rel (%p629) target = $region80
      $region79: #{elm_forward.1} parent=43 // pred_region
        %p632 = scmp.lt.s32.totalorder %s27, 1
        %s633 = scalar_select %p632, %s27, 1
        %s634 = smul.addr %s633, 16
        %s635 = smul.addr %s634, 8
        %s636 = scalar_lea.vmem %s9, %s635
      $region80: #{elm_forward.1} parent=43 // pred_fallthru
        _
      // Predicated region
      $region81: #{elm_forward.1} parent=43 // pred_check
        %p637 = pneg %p302
      $region82: #{elm_forward.1} parent=43 // pred_check_branch
        %639 = sbr.rel (%p637) target = $region84
      $region83: #{elm_forward.1} parent=43 // pred_region
        %p640 = scmp.lt.s32.totalorder %s27, 1
        %s641 = scalar_select %p640, %s27, 1
        %s642 = scalar_lea.vmem %s10, %s641
      $region84: #{elm_forward.1} parent=43 // pred_fallthru
        _
      // Predicated region
      $region85: #{elm_forward.1} parent=43 // pred_check
        %p643 = pneg %p328
      $region86: #{elm_forward.1} parent=43 // pred_check_branch
        %645 = sbr.rel (%p643) target = $region88
      $region87: #{elm_forward.1} parent=43 // pred_region
        %p646 = scmp.lt.s32.totalorder %s27, 1
        %s647 = scalar_select %p646, %s27, 1
        %s648 = scalar_lea.vmem %s11, %s647
      $region88: #{elm_forward.1} parent=43 // pred_fallthru
        _
      // Predicated region
      $region89: #{elm_forward.1} parent=43 // pred_check
        %p649 = pneg %p354
      $region90: #{elm_forward.1} parent=43 // pred_check_branch
        %651 = sbr.rel (%p649) target = $region92
      $region91: #{elm_forward.1} parent=43 // pred_region
        %p652 = scmp.lt.s32.totalorder %s27, 1
        %s653 = scalar_select %p652, %s27, 1
        %s654 = scalar_lea.vmem %s12, %s653
      $region92: #{elm_forward.1} parent=43 // pred_fallthru
        _
    $region44: #{elm_forward.1} parent=5 // pred_fallthru
      _
    %p655 = scmp.le.s32.totalorder 1, %s27
    %p656 = scmp.lt.s32.totalorder %s27, 3
    %p657 = pnand %p655, %p656
    %p658 = pneg %p657
    // Predicated region
    $region93: #{elm_forward.1} parent=5 // pred_check
      _
    $region94: #{elm_forward.1} parent=5 // pred_check_branch
      %660 = sbr.rel (%p657) target = $region96
    $region95: #{elm_forward.1} parent=5 // pred_region
      %s661 = ssub.s32 %s27, 1
      %p662 = pneg %p48
      %p663 = pneg %p45
      %p664 = scmp.lt.s32.totalorder %s32, 1
      %s665 = scalar_select %p664, %s32, 1
      %s666 = smul.addr %s665, 12
      %s667 = smul.addr %s666, 8
      %s668 = scalar_lea.vmem %s1, %s667
      %p669 = pneg %p74
      %p670 = pneg %p71
      %p671 = scmp.lt.s32.totalorder %s32, 1
      %s672 = scalar_select %p671, %s32, 1
      %s673 = smul.addr %s672, 12
      %s674 = smul.addr %s673, 8
      %s675 = scalar_lea.vmem %s2, %s674
      %p676 = pneg %p100
      %p677 = pneg %p97
      %p678 = scmp.lt.s32.totalorder %s32, 1
      %s679 = scalar_select %p678, %s32, 1
      %s680 = smul.addr %s679, 4
      %s681 = smul.addr %s680, 8
      %s682 = scalar_lea.vmem %s3, %s681
      %p683 = pneg %p126
      %p684 = pneg %p123
      %p685 = scmp.lt.s32.totalorder %s32, 1
      %s686 = scalar_select %p685, %s32, 1
      %s687 = scalar_lea.vmem %s4, %s686
      %p688 = pneg %p152
      %p689 = pneg %p149
      %p690 = scmp.lt.s32.totalorder %s32, 1
      %s691 = scalar_select %p690, %s32, 1
      %s692 = scalar_lea.vmem %s5, %s691
      %p693 = pneg %p178
      %p694 = pneg %p175
      %p695 = scmp.lt.s32.totalorder %s32, 1
      %s696 = scalar_select %p695, %s32, 1
      %s697 = scalar_lea.vmem %s6, %s696
      %p698 = pneg %p204
      %p699 = pneg %p201
      %p700 = scmp.lt.s32.totalorder %s32, 1
      %s701 = scalar_select %p700, %s32, 1
      %s702 = smul.addr %s701, 4
      %s703 = smul.addr %s702, 8
      %s704 = scalar_lea.vmem %s7, %s703
      %p705 = pneg %p230
      %p706 = pneg %p227
      %p707 = scmp.lt.s32.totalorder %s32, 1
      %s708 = scalar_select %p707, %s32, 1
      %s709 = scalar_lea.vmem %s8, %s708
      %p710 = pneg %p256
      %p711 = pneg %p253
      %p712 = scmp.lt.s32.totalorder %s32, 1
      %s713 = scalar_select %p712, %s32, 1
      %s714 = smul.addr %s713, 16
      %s715 = smul.addr %s714, 8
      %s716 = scalar_lea.vmem %s9, %s715
      %p717 = pneg %p282
      %p718 = pneg %p279
      %p719 = scmp.lt.s32.totalorder %s32, 1
      %s720 = scalar_select %p719, %s32, 1
      %s721 = scalar_lea.vmem %s10, %s720
      %p722 = pneg %p308
      %p723 = pneg %p305
      %p724 = scmp.lt.s32.totalorder %s32, 1
      %s725 = scalar_select %p724, %s32, 1
      %s726 = scalar_lea.vmem %s11, %s725
      %p727 = pneg %p334
      %p728 = pneg %p331
      %p729 = scmp.lt.s32.totalorder %s32, 1
      %s730 = scalar_select %p729, %s32, 1
      %s731 = scalar_lea.vmem %s12, %s730
      %p732 = pneg %p360
      %p733 = pneg %p357
      %p734 = pneg %p381
      %p735 = pneg %p378
      %p736 = pneg %p402
      %p737 = pneg %p399
      %p738 = pneg %p423
      %p739 = pneg %p420
      %p740 = pneg %p444
      %p741 = pneg %p441
      %p742 = pneg %p465
      %p743 = pneg %p462
      %p744 = pneg %p486
      %p745 = pneg %p483
      %p746 = pneg %p512
      %p747 = pneg %p509
      %p748 = scmp.lt.s32.totalorder %s32, 1
      %s749 = scalar_select %p748, %s32, 1
      %s750 = smul.addr %s749, 2
      %s751 = smul.addr %s750, 8
      %s752 = scalar_lea.vmem %s19, %s751
      %p753 = pneg %p533
      %p754 = pneg %p530
      %p755 = scmp.lt.s32.totalorder %s32, 1
      %s756 = scalar_select %p755, %s32, 1
      %s757 = smul.addr %s756, 12
      %s758 = smul.addr %s757, 8
      %s759 = scalar_lea.vmem %s1, %s758
      %p760 = scmp.lt.s32.totalorder %s32, 1
      %s761 = scalar_select %p760, %s32, 1
      %s762 = smul.addr %s761, 12
      %s763 = smul.addr %s762, 8
      %s764 = scalar_lea.vmem %s2, %s763
      %p765 = scmp.lt.s32.totalorder %s32, 1
      %s766 = scalar_select %p765, %s32, 1
      %s767 = smul.addr %s766, 4
      %s768 = smul.addr %s767, 8
      %s769 = scalar_lea.vmem %s3, %s768
      %p770 = scmp.lt.s32.totalorder %s32, 1
      %s771 = scalar_select %p770, %s32, 1
      %s772 = scalar_lea.vmem %s4, %s771
      %p773 = scmp.lt.s32.totalorder %s32, 1
      %s774 = scalar_select %p773, %s32, 1
      %s775 = scalar_lea.vmem %s5, %s774
      %p776 = scmp.lt.s32.totalorder %s32, 1
      %s777 = scalar_select %p776, %s32, 1
      %s778 = scalar_lea.vmem %s6, %s777
      %p779 = scmp.lt.s32.totalorder %s32, 1
      %s780 = scalar_select %p779, %s32, 1
      %s781 = smul.addr %s780, 4
      %s782 = smul.addr %s781, 8
      %s783 = scalar_lea.vmem %s7, %s782
      %p784 = scmp.lt.s32.totalorder %s32, 1
      %s785 = scalar_select %p784, %s32, 1
      %s786 = scalar_lea.vmem %s8, %s785
      %p787 = scmp.lt.s32.totalorder %s32, 1
      %s788 = scalar_select %p787, %s32, 1
      %s789 = smul.addr %s788, 16
      %s790 = smul.addr %s789, 8
      %s791 = scalar_lea.vmem %s9, %s790
      %p792 = scmp.lt.s32.totalorder %s32, 1
      %s793 = scalar_select %p792, %s32, 1
      %s794 = scalar_lea.vmem %s10, %s793
      %p795 = scmp.lt.s32.totalorder %s32, 1
      %s796 = scalar_select %p795, %s32, 1
      %s797 = scalar_lea.vmem %s11, %s796
      %p798 = scmp.lt.s32.totalorder %s32, 1
      %s799 = scalar_select %p798, %s32, 1
      %s800 = scalar_lea.vmem %s12, %s799
      %p801 = scmp.lt.s32.totalorder %s32, 1
      %s802 = scalar_select %p801, %s32, 1
      %s803 = smul.addr %s802, 2
      %s804 = smul.addr %s803, 8
      %s805 = scalar_lea.vmem %s19, %s804
      %p806 = scmp.eq.s32.totalorder %s32, 0
      // Predicated region
      $region97: #{elm_forward.1} parent=95 // pred_check
        %p807 = pneg %p806
      $region98: #{elm_forward.1} parent=95 // pred_check_branch
        %809 = sbr.rel (%p807) target = $region100
      $region99: #{elm_forward.1} parent=95 // pred_region
        %v810 = vld [vmem:[%s0] sm:$0xff]
        %v811 = vld [vmem:[%s0 + $0x8] sm:$0xff]
        %vm812 = vcmask 261120
        %813 = vst.msk [vmem:[#allocation2] sm:$0xff] %vm812, %v810
        %814 = vst.msk [vmem:[#allocation2 + $0x8] sm:$0xff] %vm812, %v811
      $region100: #{elm_forward.1} parent=95 // pred_fallthru
        _
      %v815 = vld [vmem:[#allocation2] sm:$0xff]
      %v816 = vld [vmem:[#allocation2 + $0x8] sm:$0xff]
      %v817 = vld [vmem:[%s759] sm:$0xff]
      %v818 = vld [vmem:[%s759 + $0x8] sm:$0xff]
      %v819 = vld [vmem:[%s759 + $0x10] sm:$0xff]
      %v820 = vld [vmem:[%s759 + $0x18] sm:$0xff]
      %v821 = vld [vmem:[%s759 + $0x20] sm:$0xff]
      %v822 = vld [vmem:[%s759 + $0x28] sm:$0xff]
      %v823 = vld [vmem:[%s759 + $0x30] sm:$0xff]
      %v824 = vld [vmem:[%s759 + $0x38] sm:$0xff]
      %v825 = vld [vmem:[%s759 + $0x40] sm:$0xff]
      %v826 = vld [vmem:[%s759 + $0x48] sm:$0xff]
      %v827 = vld [vmem:[%s759 + $0x50] sm:$0xff]
      %v828 = vld [vmem:[%s759 + $0x58] sm:$0xff]
      %v829 = vld [vmem:[%s764] sm:$0xff]
      %v830 = vld [vmem:[%s764 + $0x8] sm:$0xff]
      %v831 = vld [vmem:[%s764 + $0x10] sm:$0xff]
      %v832 = vld [vmem:[%s764 + $0x18] sm:$0xff]
      %v833 = vld [vmem:[%s764 + $0x20] sm:$0xff]
      %v834 = vld [vmem:[%s764 + $0x28] sm:$0xff]
      %v835 = vld [vmem:[%s764 + $0x30] sm:$0xff]
      %v836 = vld [vmem:[%s764 + $0x38] sm:$0xff]
      %v837 = vld [vmem:[%s764 + $0x40] sm:$0xff]
      %v838 = vld [vmem:[%s764 + $0x48] sm:$0xff]
      %v839 = vld [vmem:[%s764 + $0x50] sm:$0xff]
      %v840 = vld [vmem:[%s764 + $0x58] sm:$0xff]
      %842 = vset.pattern.permute.xlu0 0
      %843 = vperm.xlu0 %842, %v829
      %v844 = vpop.permute.xlu0 %843
      %847 = vset.pattern.permute.xlu0 0
      %848 = vperm.xlu0 %847, %v830
      %v849 = vpop.permute.xlu0 %848
      %852 = vset.pattern.permute.xlu0 0
      %853 = vperm.xlu0 %852, %v831
      %v854 = vpop.permute.xlu0 %853
      %857 = vset.pattern.permute.xlu0 0
      %858 = vperm.xlu0 %857, %v832
      %v859 = vpop.permute.xlu0 %858
      %862 = vset.pattern.permute.xlu0 0
      %863 = vperm.xlu0 %862, %v833
      %v864 = vpop.permute.xlu0 %863
      %867 = vset.pattern.permute.xlu0 0
      %868 = vperm.xlu0 %867, %v834
      %v869 = vpop.permute.xlu0 %868
      %872 = vset.pattern.permute.xlu0 0
      %873 = vperm.xlu0 %872, %v835
      %v874 = vpop.permute.xlu0 %873
      %877 = vset.pattern.permute.xlu0 0
      %878 = vperm.xlu0 %877, %v836
      %v879 = vpop.permute.xlu0 %878
      %882 = vset.pattern.permute.xlu0 0
      %883 = vperm.xlu0 %882, %v837
      %v884 = vpop.permute.xlu0 %883
      %887 = vset.pattern.permute.xlu0 0
      %888 = vperm.xlu0 %887, %v838
      %v889 = vpop.permute.xlu0 %888
      %892 = vset.pattern.permute.xlu0 0
      %893 = vperm.xlu0 %892, %v839
      %v894 = vpop.permute.xlu0 %893
      %897 = vset.pattern.permute.xlu0 0
      %898 = vperm.xlu0 %897, %v840
      %v899 = vpop.permute.xlu0 %898
      %vm901 = vcmask 261120
      %v903 = vsel %vm901, %v817, 0
      %v906 = vsel %vm901, %v818, 0
      %v909 = vsel %vm901, %v819, 0
      %v912 = vsel %vm901, %v820, 0
      %v915 = vsel %vm901, %v821, 0
      %v918 = vsel %vm901, %v822, 0
      %v921 = vsel %vm901, %v823, 0
      %v924 = vsel %vm901, %v824, 0
      %v927 = vsel %vm901, %v825, 0
      %v930 = vsel %vm901, %v826, 0
      %v933 = vsel %vm901, %v827, 0
      %v936 = vsel %vm901, %v828, 0
      %v939 = vsel %vm901, %v815, 0
      %v942 = vsel %vm901, %v816, 0
      %944 = vmatprep.subr.mxu0 0.0
      %945 = vmatpush1.xpose.msra.mxu0 %v939
      %946 = vmatprep.subr.mxu0 0.0
      %947 = vmatpush1.xpose.msra.mxu0 %v942
      %948 = vmatprep.subr.mxu0 0.0
      %949 = vmatpush1.xpose.msra.mxu0 0.0
      %950 = vmatprep.subr.mxu0 0.0
      %951 = vmatpush1.xpose.msra.mxu0 0.0
      %952 = vmatprep.subr.mxu0 0.0
      %953 = vmatpush1.xpose.msra.mxu0 0.0
      %954 = vmatprep.subr.mxu0 0.0
      %955 = vmatpush1.xpose.msra.mxu0 0.0
      %956 = vmatprep.subr.mxu0 0.0
      %957 = vmatpush1.xpose.msra.mxu0 0.0
      %958 = vmatprep.subr.mxu0 0.0
      %959 = vmatpush1.xpose.msra.mxu0 0.0
      %960 = vmatprep.subr.mxu0 0.0
      %961 = vmatpush1.xpose.msra.mxu0 0.0
      %962 = vmatprep.subr.mxu0 0.0
      %963 = vmatpush1.xpose.msra.mxu0 0.0
      %964 = vmatprep.subr.mxu0 0.0
      %965 = vmatpush1.xpose.msra.mxu0 0.0
      %966 = vmatprep.subr.mxu0 0.0
      %967 = vmatpush1.xpose.msra.mxu0 0.0
      %968 = vmatprep.subr.mxu0 0.0
      %969 = vmatpush1.xpose.msra.mxu0 0.0
      %970 = vmatprep.subr.mxu0 0.0
      %971 = vmatpush1.xpose.msra.mxu0 0.0
      %972 = vmatprep.subr.mxu0 0.0
      %973 = vmatpush1.xpose.msra.mxu0 0.0
      %974 = vmatprep.subr.mxu0 0.0
      %975 = vmatpush1.xpose.msra.mxu0 0.0
      %976 = vmatprep.subr.mxu0 0.0
      %977 = vmatpush1.xpose.msra.mxu0 0.0
      %978 = vmatprep.subr.mxu0 0.0
      %979 = vmatpush1.xpose.msra.mxu0 0.0
      %980 = vmatprep.subr.mxu0 0.0
      %981 = vmatpush1.xpose.msra.mxu0 0.0
      %982 = vmatprep.subr.mxu0 0.0
      %983 = vmatpush1.xpose.msra.mxu0 0.0
      %984 = vmatprep.subr.mxu0 0.0
      %985 = vmatpush1.xpose.msra.mxu0 0.0
      %986 = vmatprep.subr.mxu0 0.0
      %987 = vmatpush1.xpose.msra.mxu0 0.0
      %988 = vmatprep.subr.mxu0 0.0
      %989 = vmatpush1.xpose.msra.mxu0 0.0
      %990 = vmatprep.subr.mxu0 0.0
      %991 = vmatpush1.xpose.msra.mxu0 0.0
      %992 = vmatprep.subr.mxu0 0.0
      %993 = vmatpush1.xpose.msra.mxu0 0.0
      %994 = vmatprep.subr.mxu0 0.0
      %995 = vmatpush1.xpose.msra.mxu0 0.0
      %996 = vmatprep.subr.mxu0 0.0
      %997 = vmatpush1.xpose.msra.mxu0 0.0
      %998 = vmatprep.subr.mxu0 0.0
      %999 = vmatpush1.xpose.msra.mxu0 0.0
      %1000 = vmatprep.subr.mxu0 0.0
      %1001 = vmatpush1.xpose.msra.mxu0 0.0
      %1002 = vmatprep.subr.mxu0 0.0
      %1003 = vmatpush1.xpose.msra.mxu0 0.0
      %1004 = vmatprep.subr.mxu0 0.0
      %1005 = vmatpush1.xpose.msra.mxu0 0.0
      %1006 = vmatprep.subr.mxu0 0.0
      %1007 = vmatpush1.xpose.msra.mxu0 0.0
      %1008 = vmatprep.mubr.f32.mxu0 0.0
      %1009 = vmatmul.mubr.f32.gmra.mrb[0].mxu0 %v903
      %v1010 = vpop.f32.mrb[0].mxu0
      %v1011 = vadd.f32 %v844, %v1010
      %v1012 = vpop.f32.mrb[0].mxu0
      %1013 = vmatprep.mubr.f32.mxu0 0.0
      %1014 = vmatmul.mubr.f32.gmra.mrb[0].mxu0 %v906
      %v1015 = vpop.f32.mrb[0].mxu0
      %v1016 = vadd.f32 %v849, %v1015
      %v1017 = vpop.f32.mrb[0].mxu0
      %1018 = vmatprep.mubr.f32.mxu0 0.0
      %1019 = vmatmul.mubr.f32.gmra.mrb[0].mxu0 %v909
      %v1020 = vpop.f32.mrb[0].mxu0
      %v1021 = vadd.f32 %v854, %v1020
      %v1022 = vpop.f32.mrb[0].mxu0
      %1023 = vmatprep.mubr.f32.mxu0 0.0
      %1024 = vmatmul.mubr.f32.gmra.mrb[0].mxu0 %v912
      %v1025 = vpop.f32.mrb[0].mxu0
      %v1026 = vadd.f32 %v859, %v1025
      %v1027 = vpop.f32.mrb[0].mxu0
      %1028 = vmatprep.mubr.f32.mxu0 0.0
      %1029 = vmatmul.mubr.f32.gmra.mrb[0].mxu0 %v915
      %v1030 = vpop.f32.mrb[0].mxu0
      %v1031 = vadd.f32 %v864, %v1030
      %v1032 = vpop.f32.mrb[0].mxu0
      %1033 = vmatprep.mubr.f32.mxu0 0.0
      %1034 = vmatmul.mubr.f32.gmra.mrb[0].mxu0 %v918
      %v1035 = vpop.f32.mrb[0].mxu0
      %v1036 = vadd.f32 %v869, %v1035
      %v1037 = vpop.f32.mrb[0].mxu0
      %1038 = vmatprep.mubr.f32.mxu0 0.0
      %1039 = vmatmul.mubr.f32.gmra.mrb[0].mxu0 %v921
      %v1040 = vpop.f32.mrb[0].mxu0
      %v1041 = vadd.f32 %v874, %v1040
      %v1042 = vpop.f32.mrb[0].mxu0
      %1043 = vmatprep.mubr.f32.mxu0 0.0
      %1044 = vmatmul.mubr.f32.gmra.mrb[0].mxu0 %v924
      %v1045 = vpop.f32.mrb[0].mxu0
      %v1046 = vadd.f32 %v879, %v1045
      %v1047 = vpop.f32.mrb[0].mxu0
      %1048 = vmatprep.mubr.f32.mxu0 0.0
      %1049 = vmatmul.mubr.f32.gmra.mrb[0].mxu0 %v927
      %v1050 = vpop.f32.mrb[0].mxu0
      %v1051 = vadd.f32 %v884, %v1050
      %v1052 = vpop.f32.mrb[0].mxu0
      %1053 = vmatprep.mubr.f32.mxu0 0.0
      %1054 = vmatmul.mubr.f32.gmra.mrb[0].mxu0 %v930
      %v1055 = vpop.f32.mrb[0].mxu0
      %v1056 = vadd.f32 %v889, %v1055
      %v1057 = vpop.f32.mrb[0].mxu0
      %1058 = vmatprep.mubr.f32.mxu0 0.0
      %1059 = vmatmul.mubr.f32.gmra.mrb[0].mxu0 %v933
      %v1060 = vpop.f32.mrb[0].mxu0
      %v1061 = vadd.f32 %v894, %v1060
      %v1062 = vpop.f32.mrb[0].mxu0
      %1063 = vmatprep.mubr.f32.mxu0 0.0
      %1064 = vmatmul.mubr.f32.gmra.mrb[0].mxu0 %v936
      %v1065 = vpop.f32.mrb[0].mxu0
      %v1066 = vadd.f32 %v899, %v1065
      %v1067 = vpop.f32.mrb[0].mxu0
      %1068 = vdwg.mxu0
      %v1069 = vlaneseq
      %v1070 = vshrl.u32 %v1069, 7
      %v1071 = vlaneseq
      %v1072 = vand.u32 %v1071, 127
      %vm1073 = vcmp.le.s32.totalorder %v1072, %v1070
      %1074 = vxpose.xlu0.b32.start [1/16] %v1011, 128
      %1075 = vxpose.xlu0.b32.cont [2/16] 0.0, 128
      %1076 = vxpose.xlu0.b32.cont [3/16] 0.0, 128
      %1077 = vxpose.xlu0.b32.cont [4/16] 0.0, 128
      %1078 = vxpose.xlu0.b32.cont [5/16] 0.0, 128
      %1079 = vxpose.xlu0.b32.cont [6/16] 0.0, 128
      %1080 = vxpose.xlu0.b32.cont [7/16] 0.0, 128
      %1081 = vxpose.xlu0.b32.cont [8/16] 0.0, 128
      %1082 = vxpose.xlu0.b32.cont [9/16] 0.0, 128
      %1083 = vxpose.xlu0.b32.cont [10/16] 0.0, 128
      %1084 = vxpose.xlu0.b32.cont [11/16] 0.0, 128
      %1085 = vxpose.xlu0.b32.cont [12/16] 0.0, 128
      %1086 = vxpose.xlu0.b32.cont [13/16] 0.0, 128
      %1087 = vxpose.xlu0.b32.cont [14/16] 0.0, 128
      %1088 = vxpose.xlu0.b32.cont [15/16] 0.0, 128
      %1089 = vxpose.xlu0.b32.end [16/16] 0.0, 128
      %v1090 = vpop.trf.xlu0
      %v1091 = vpop.trf.xlu0
      %v1092 = vpop.trf.xlu0
      %v1093 = vpop.trf.xlu0
      %v1094 = vpop.trf.xlu0
      %v1095 = vpop.trf.xlu0
      %v1096 = vpop.trf.xlu0
      %v1097 = vpop.trf.xlu0
      %v1098 = vpop.trf.xlu0
      %v1099 = vpop.trf.xlu0
      %v1100 = vpop.trf.xlu0
      %v1101 = vpop.trf.xlu0
      %v1102 = vpop.trf.xlu0
      %v1103 = vpop.trf.xlu0
      %v1104 = vpop.trf.xlu0
      %v1105 = vpop.trf.xlu0
      %1106 = vxpose.xlu0.b32.start [1/16] %v1016, 128
      %1107 = vxpose.xlu0.b32.cont [2/16] 0.0, 128
      %1108 = vxpose.xlu0.b32.cont [3/16] 0.0, 128
      %1109 = vxpose.xlu0.b32.cont [4/16] 0.0, 128
      %1110 = vxpose.xlu0.b32.cont [5/16] 0.0, 128
      %1111 = vxpose.xlu0.b32.cont [6/16] 0.0, 128
      %1112 = vxpose.xlu0.b32.cont [7/16] 0.0, 128
      %1113 = vxpose.xlu0.b32.cont [8/16] 0.0, 128
      %1114 = vxpose.xlu0.b32.cont [9/16] 0.0, 128
      %1115 = vxpose.xlu0.b32.cont [10/16] 0.0, 128
      %1116 = vxpose.xlu0.b32.cont [11/16] 0.0, 128
      %1117 = vxpose.xlu0.b32.cont [12/16] 0.0, 128
      %1118 = vxpose.xlu0.b32.cont [13/16] 0.0, 128
      %1119 = vxpose.xlu0.b32.cont [14/16] 0.0, 128
      %1120 = vxpose.xlu0.b32.cont [15/16] 0.0, 128
      %1121 = vxpose.xlu0.b32.end [16/16] 0.0, 128
      %v1122 = vpop.trf.xlu0
      %v1123 = vpop.trf.xlu0
      %v1124 = vpop.trf.xlu0
      %v1125 = vpop.trf.xlu0
      %v1126 = vpop.trf.xlu0
      %v1127 = vpop.trf.xlu0
      %v1128 = vpop.trf.xlu0
      %v1129 = vpop.trf.xlu0
      %v1130 = vpop.trf.xlu0
      %v1131 = vpop.trf.xlu0
      %v1132 = vpop.trf.xlu0
      %v1133 = vpop.trf.xlu0
      %v1134 = vpop.trf.xlu0
      %v1135 = vpop.trf.xlu0
      %v1136 = vpop.trf.xlu0
      %v1137 = vpop.trf.xlu0
      %1138 = vxpose.xlu0.b32.start [1/16] %v1021, 128
      %1139 = vxpose.xlu0.b32.cont [2/16] 0.0, 128
      %1140 = vxpose.xlu0.b32.cont [3/16] 0.0, 128
      %1141 = vxpose.xlu0.b32.cont [4/16] 0.0, 128
      %1142 = vxpose.xlu0.b32.cont [5/16] 0.0, 128
      %1143 = vxpose.xlu0.b32.cont [6/16] 0.0, 128
      %1144 = vxpose.xlu0.b32.cont [7/16] 0.0, 128
      %1145 = vxpose.xlu0.b32.cont [8/16] 0.0, 128
      %1146 = vxpose.xlu0.b32.cont [9/16] 0.0, 128
      %1147 = vxpose.xlu0.b32.cont [10/16] 0.0, 128
      %1148 = vxpose.xlu0.b32.cont [11/16] 0.0, 128
      %1149 = vxpose.xlu0.b32.cont [12/16] 0.0, 128
      %1150 = vxpose.xlu0.b32.cont [13/16] 0.0, 128
      %1151 = vxpose.xlu0.b32.cont [14/16] 0.0, 128
      %1152 = vxpose.xlu0.b32.cont [15/16] 0.0, 128
      %1153 = vxpose.xlu0.b32.end [16/16] 0.0, 128
      %v1154 = vpop.trf.xlu0
      %v1155 = vpop.trf.xlu0
      %v1156 = vpop.trf.xlu0
      %v1157 = vpop.trf.xlu0
      %v1158 = vpop.trf.xlu0
      %v1159 = vpop.trf.xlu0
      %v1160 = vpop.trf.xlu0
      %v1161 = vpop.trf.xlu0
      %v1162 = vpop.trf.xlu0
      %v1163 = vpop.trf.xlu0
      %v1164 = vpop.trf.xlu0
      %v1165 = vpop.trf.xlu0
      %v1166 = vpop.trf.xlu0
      %v1167 = vpop.trf.xlu0
      %v1168 = vpop.trf.xlu0
      %v1169 = vpop.trf.xlu0
      %1170 = vxpose.xlu0.b32.start [1/16] %v1026, 128
      %1171 = vxpose.xlu0.b32.cont [2/16] 0.0, 128
      %1172 = vxpose.xlu0.b32.cont [3/16] 0.0, 128
      %1173 = vxpose.xlu0.b32.cont [4/16] 0.0, 128
      %1174 = vxpose.xlu0.b32.cont [5/16] 0.0, 128
      %1175 = vxpose.xlu0.b32.cont [6/16] 0.0, 128
      %1176 = vxpose.xlu0.b32.cont [7/16] 0.0, 128
      %1177 = vxpose.xlu0.b32.cont [8/16] 0.0, 128
      %1178 = vxpose.xlu0.b32.cont [9/16] 0.0, 128
      %1179 = vxpose.xlu0.b32.cont [10/16] 0.0, 128
      %1180 = vxpose.xlu0.b32.cont [11/16] 0.0, 128
      %1181 = vxpose.xlu0.b32.cont [12/16] 0.0, 128
      %1182 = vxpose.xlu0.b32.cont [13/16] 0.0, 128
      %1183 = vxpose.xlu0.b32.cont [14/16] 0.0, 128
      %1184 = vxpose.xlu0.b32.cont [15/16] 0.0, 128
      %1185 = vxpose.xlu0.b32.end [16/16] 0.0, 128
      %v1186 = vpop.trf.xlu0
      %v1187 = vpop.trf.xlu0
      %v1188 = vpop.trf.xlu0
      %v1189 = vpop.trf.xlu0
      %v1190 = vpop.trf.xlu0
      %v1191 = vpop.trf.xlu0
      %v1192 = vpop.trf.xlu0
      %v1193 = vpop.trf.xlu0
      %v1194 = vpop.trf.xlu0
      %v1195 = vpop.trf.xlu0
      %v1196 = vpop.trf.xlu0
      %v1197 = vpop.trf.xlu0
      %v1198 = vpop.trf.xlu0
      %v1199 = vpop.trf.xlu0
      %v1200 = vpop.trf.xlu0
      %v1201 = vpop.trf.xlu0
      %vm1202 = vcmask 64512
      %v1204 = vsel %vm1202, %v1090, 0
      %1206 = vmatprep.subr.mxu0 0.0
      %1207 = vmatpush1.msra.mxu0 %v1031
      %1208 = vmatprep.subr.mxu0 0.0
      %1209 = vmatpush1.msra.mxu0 0.0
      %1210 = vmatprep.subr.mxu0 0.0
      %1211 = vmatpush1.msra.mxu0 0.0
      %1212 = vmatprep.subr.mxu0 0.0
      %1213 = vmatpush1.msra.mxu0 0.0
      %1214 = vmatprep.subr.mxu0 0.0
      %1215 = vmatpush1.msra.mxu0 0.0
      %1216 = vmatprep.subr.mxu0 0.0
      %1217 = vmatpush1.msra.mxu0 0.0
      %1218 = vmatprep.subr.mxu0 0.0
      %1219 = vmatpush1.msra.mxu0 0.0
      %1220 = vmatprep.subr.mxu0 0.0
      %1221 = vmatpush1.msra.mxu0 0.0
      %1222 = vmatprep.subr.mxu0 0.0
      %1223 = vmatpush1.msra.mxu0 0.0
      %1224 = vmatprep.subr.mxu0 0.0
      %1225 = vmatpush1.msra.mxu0 0.0
      %1226 = vmatprep.subr.mxu0 0.0
      %1227 = vmatpush1.msra.mxu0 0.0
      %1228 = vmatprep.subr.mxu0 0.0
      %1229 = vmatpush1.msra.mxu0 0.0
      %1230 = vmatprep.subr.mxu0 0.0
      %1231 = vmatpush1.msra.mxu0 0.0
      %1232 = vmatprep.subr.mxu0 0.0
      %1233 = vmatpush1.msra.mxu0 0.0
      %1234 = vmatprep.subr.mxu0 0.0
      %1235 = vmatpush1.msra.mxu0 0.0
      %1236 = vmatprep.subr.mxu0 0.0
      %1237 = vmatpush1.msra.mxu0 0.0
      %1238 = vmatprep.subr.mxu0 0.0
      %1239 = vmatpush1.msra.mxu0 0.0
      %1240 = vmatprep.subr.mxu0 0.0
      %1241 = vmatpush1.msra.mxu0 0.0
      %1242 = vmatprep.subr.mxu0 0.0
      %1243 = vmatpush1.msra.mxu0 0.0
      %1244 = vmatprep.subr.mxu0 0.0
      %1245 = vmatpush1.msra.mxu0 0.0
      %1246 = vmatprep.subr.mxu0 0.0
      %1247 = vmatpush1.msra.mxu0 0.0
      %1248 = vmatprep.subr.mxu0 0.0
      %1249 = vmatpush1.msra.mxu0 0.0
      %1250 = vmatprep.subr.mxu0 0.0
      %1251 = vmatpush1.msra.mxu0 0.0
      %1252 = vmatprep.subr.mxu0 0.0
      %1253 = vmatpush1.msra.mxu0 0.0
      %1254 = vmatprep.subr.mxu0 0.0
      %1255 = vmatpush1.msra.mxu0 0.0
      %1256 = vmatprep.subr.mxu0 0.0
      %1257 = vmatpush1.msra.mxu0 0.0
      %1258 = vmatprep.subr.mxu0 0.0
      %1259 = vmatpush1.msra.mxu0 0.0
      %1260 = vmatprep.subr.mxu0 0.0
      %1261 = vmatpush1.msra.mxu0 0.0
      %1262 = vmatprep.subr.mxu0 0.0
      %1263 = vmatpush1.msra.mxu0 0.0
      %1264 = vmatprep.subr.mxu0 0.0
      %1265 = vmatpush1.msra.mxu0 0.0
      %1266 = vmatprep.subr.mxu0 0.0
      %1267 = vmatpush1.msra.mxu0 0.0
      %1268 = vmatprep.subr.mxu0 0.0
      %1269 = vmatpush1.msra.mxu0 0.0
      %1270 = vmatprep.mubr.f32.mxu0 0.0
      %1271 = vmatmul.mubr.f32.gmra.mrb[0].mxu0 %v1204
      %v1272 = vpop.f32.mrb[0].mxu0
      %v1273 = vadd.f32 0.0, %v1272
      %v1274 = vpop.f32.mrb[0].mxu0
      %1275 = vdwg.mxu0
      %v1277 = vsel %vm1202, %v1122, 0
      %1279 = vmatprep.subr.mxu0 0.0
      %1280 = vmatpush1.msra.mxu0 %v1036
      %1281 = vmatprep.subr.mxu0 0.0
      %1282 = vmatpush1.msra.mxu0 0.0
      %1283 = vmatprep.subr.mxu0 0.0
      %1284 = vmatpush1.msra.mxu0 0.0
      %1285 = vmatprep.subr.mxu0 0.0
      %1286 = vmatpush1.msra.mxu0 0.0
      %1287 = vmatprep.subr.mxu0 0.0
      %1288 = vmatpush1.msra.mxu0 0.0
      %1289 = vmatprep.subr.mxu0 0.0
      %1290 = vmatpush1.msra.mxu0 0.0
      %1291 = vmatprep.subr.mxu0 0.0
      %1292 = vmatpush1.msra.mxu0 0.0
      %1293 = vmatprep.subr.mxu0 0.0
      %1294 = vmatpush1.msra.mxu0 0.0
      %1295 = vmatprep.subr.mxu0 0.0
      %1296 = vmatpush1.msra.mxu0 0.0
      %1297 = vmatprep.subr.mxu0 0.0
      %1298 = vmatpush1.msra.mxu0 0.0
      %1299 = vmatprep.subr.mxu0 0.0
      %1300 = vmatpush1.msra.mxu0 0.0
      %1301 = vmatprep.subr.mxu0 0.0
      %1302 = vmatpush1.msra.mxu0 0.0
      %1303 = vmatprep.subr.mxu0 0.0
      %1304 = vmatpush1.msra.mxu0 0.0
      %1305 = vmatprep.subr.mxu0 0.0
      %1306 = vmatpush1.msra.mxu0 0.0
      %1307 = vmatprep.subr.mxu0 0.0
      %1308 = vmatpush1.msra.mxu0 0.0
      %1309 = vmatprep.subr.mxu0 0.0
      %1310 = vmatpush1.msra.mxu0 0.0
      %1311 = vmatprep.subr.mxu0 0.0
      %1312 = vmatpush1.msra.mxu0 0.0
      %1313 = vmatprep.subr.mxu0 0.0
      %1314 = vmatpush1.msra.mxu0 0.0
      %1315 = vmatprep.subr.mxu0 0.0
      %1316 = vmatpush1.msra.mxu0 0.0
      %1317 = vmatprep.subr.mxu0 0.0
      %1318 = vmatpush1.msra.mxu0 0.0
      %1319 = vmatprep.subr.mxu0 0.0
      %1320 = vmatpush1.msra.mxu0 0.0
      %1321 = vmatprep.subr.mxu0 0.0
      %1322 = vmatpush1.msra.mxu0 0.0
      %1323 = vmatprep.subr.mxu0 0.0
      %1324 = vmatpush1.msra.mxu0 0.0
      %1325 = vmatprep.subr.mxu0 0.0
      %1326 = vmatpush1.msra.mxu0 0.0
      %1327 = vmatprep.subr.mxu0 0.0
      %1328 = vmatpush1.msra.mxu0 0.0
      %1329 = vmatprep.subr.mxu0 0.0
      %1330 = vmatpush1.msra.mxu0 0.0
      %1331 = vmatprep.subr.mxu0 0.0
      %1332 = vmatpush1.msra.mxu0 0.0
      %1333 = vmatprep.subr.mxu0 0.0
      %1334 = vmatpush1.msra.mxu0 0.0
      %1335 = vmatprep.subr.mxu0 0.0
      %1336 = vmatpush1.msra.mxu0 0.0
      %1337 = vmatprep.subr.mxu0 0.0
      %1338 = vmatpush1.msra.mxu0 0.0
      %1339 = vmatprep.subr.mxu0 0.0
      %1340 = vmatpush1.msra.mxu0 0.0
      %1341 = vmatprep.subr.mxu0 0.0
      %1342 = vmatpush1.msra.mxu0 0.0
      %1343 = vmatprep.mubr.f32.mxu0 0.0
      %1344 = vmatmul.mubr.f32.gmra.mrb[0].mxu0 %v1277
      %v1345 = vpop.f32.mrb[0].mxu0
      %v1346 = vadd.f32 0.0, %v1345
      %v1347 = vpop.f32.mrb[0].mxu0
      %1348 = vdwg.mxu0
      %v1350 = vsel %vm1202, %v1154, 0
      %1352 = vmatprep.subr.mxu0 0.0
      %1353 = vmatpush1.msra.mxu0 %v1041
      %1354 = vmatprep.subr.mxu0 0.0
      %1355 = vmatpush1.msra.mxu0 0.0
      %1356 = vmatprep.subr.mxu0 0.0
      %1357 = vmatpush1.msra.mxu0 0.0
      %1358 = vmatprep.subr.mxu0 0.0
      %1359 = vmatpush1.msra.mxu0 0.0
      %1360 = vmatprep.subr.mxu0 0.0
      %1361 = vmatpush1.msra.mxu0 0.0
      %1362 = vmatprep.subr.mxu0 0.0
      %1363 = vmatpush1.msra.mxu0 0.0
      %1364 = vmatprep.subr.mxu0 0.0
      %1365 = vmatpush1.msra.mxu0 0.0
      %1366 = vmatprep.subr.mxu0 0.0
      %1367 = vmatpush1.msra.mxu0 0.0
      %1368 = vmatprep.subr.mxu0 0.0
      %1369 = vmatpush1.msra.mxu0 0.0
      %1370 = vmatprep.subr.mxu0 0.0
      %1371 = vmatpush1.msra.mxu0 0.0
      %1372 = vmatprep.subr.mxu0 0.0
      %1373 = vmatpush1.msra.mxu0 0.0
      %1374 = vmatprep.subr.mxu0 0.0
      %1375 = vmatpush1.msra.mxu0 0.0
      %1376 = vmatprep.subr.mxu0 0.0
      %1377 = vmatpush1.msra.mxu0 0.0
      %1378 = vmatprep.subr.mxu0 0.0
      %1379 = vmatpush1.msra.mxu0 0.0
      %1380 = vmatprep.subr.mxu0 0.0
      %1381 = vmatpush1.msra.mxu0 0.0
      %1382 = vmatprep.subr.mxu0 0.0
      %1383 = vmatpush1.msra.mxu0 0.0
      %1384 = vmatprep.subr.mxu0 0.0
      %1385 = vmatpush1.msra.mxu0 0.0
      %1386 = vmatprep.subr.mxu0 0.0
      %1387 = vmatpush1.msra.mxu0 0.0
      %1388 = vmatprep.subr.mxu0 0.0
      %1389 = vmatpush1.msra.mxu0 0.0
      %1390 = vmatprep.subr.mxu0 0.0
      %1391 = vmatpush1.msra.mxu0 0.0
      %1392 = vmatprep.subr.mxu0 0.0
      %1393 = vmatpush1.msra.mxu0 0.0
      %1394 = vmatprep.subr.mxu0 0.0
      %1395 = vmatpush1.msra.mxu0 0.0
      %1396 = vmatprep.subr.mxu0 0.0
      %1397 = vmatpush1.msra.mxu0 0.0
      %1398 = vmatprep.subr.mxu0 0.0
      %1399 = vmatpush1.msra.mxu0 0.0
      %1400 = vmatprep.subr.mxu0 0.0
      %1401 = vmatpush1.msra.mxu0 0.0
      %1402 = vmatprep.subr.mxu0 0.0
      %1403 = vmatpush1.msra.mxu0 0.0
      %1404 = vmatprep.subr.mxu0 0.0
      %1405 = vmatpush1.msra.mxu0 0.0
      %1406 = vmatprep.subr.mxu0 0.0
      %1407 = vmatpush1.msra.mxu0 0.0
      %1408 = vmatprep.subr.mxu0 0.0
      %1409 = vmatpush1.msra.mxu0 0.0
      %1410 = vmatprep.subr.mxu0 0.0
      %1411 = vmatpush1.msra.mxu0 0.0
      %1412 = vmatprep.subr.mxu0 0.0
      %1413 = vmatpush1.msra.mxu0 0.0
      %1414 = vmatprep.subr.mxu0 0.0
      %1415 = vmatpush1.msra.mxu0 0.0
      %1416 = vmatprep.mubr.f32.mxu0 0.0
      %1417 = vmatmul.mubr.f32.gmra.mrb[0].mxu0 %v1350
      %v1418 = vpop.f32.mrb[0].mxu0
      %v1419 = vadd.f32 0.0, %v1418
      %v1420 = vpop.f32.mrb[0].mxu0
      %1421 = vdwg.mxu0
      %v1423 = vsel %vm1202, %v1186, 0
      %1425 = vmatprep.subr.mxu0 0.0
      %1426 = vmatpush1.msra.mxu0 %v1046
      %1427 = vmatprep.subr.mxu0 0.0
      %1428 = vmatpush1.msra.mxu0 0.0
      %1429 = vmatprep.subr.mxu0 0.0
      %1430 = vmatpush1.msra.mxu0 0.0
      %1431 = vmatprep.subr.mxu0 0.0
      %1432 = vmatpush1.msra.mxu0 0.0
      %1433 = vmatprep.subr.mxu0 0.0
      %1434 = vmatpush1.msra.mxu0 0.0
      %1435 = vmatprep.subr.mxu0 0.0
      %1436 = vmatpush1.msra.mxu0 0.0
      %1437 = vmatprep.subr.mxu0 0.0
      %1438 = vmatpush1.msra.mxu0 0.0
      %1439 = vmatprep.subr.mxu0 0.0
      %1440 = vmatpush1.msra.mxu0 0.0
      %1441 = vmatprep.subr.mxu0 0.0
      %1442 = vmatpush1.msra.mxu0 0.0
      %1443 = vmatprep.subr.mxu0 0.0
      %1444 = vmatpush1.msra.mxu0 0.0
      %1445 = vmatprep.subr.mxu0 0.0
      %1446 = vmatpush1.msra.mxu0 0.0
      %1447 = vmatprep.subr.mxu0 0.0
      %1448 = vmatpush1.msra.mxu0 0.0
      %1449 = vmatprep.subr.mxu0 0.0
      %1450 = vmatpush1.msra.mxu0 0.0
      %1451 = vmatprep.subr.mxu0 0.0
      %1452 = vmatpush1.msra.mxu0 0.0
      %1453 = vmatprep.subr.mxu0 0.0
      %1454 = vmatpush1.msra.mxu0 0.0
      %1455 = vmatprep.subr.mxu0 0.0
      %1456 = vmatpush1.msra.mxu0 0.0
      %1457 = vmatprep.subr.mxu0 0.0
      %1458 = vmatpush1.msra.mxu0 0.0
      %1459 = vmatprep.subr.mxu0 0.0
      %1460 = vmatpush1.msra.mxu0 0.0
      %1461 = vmatprep.subr.mxu0 0.0
      %1462 = vmatpush1.msra.mxu0 0.0
      %1463 = vmatprep.subr.mxu0 0.0
      %1464 = vmatpush1.msra.mxu0 0.0
      %1465 = vmatprep.subr.mxu0 0.0
      %1466 = vmatpush1.msra.mxu0 0.0
      %1467 = vmatprep.subr.mxu0 0.0
      %1468 = vmatpush1.msra.mxu0 0.0
      %1469 = vmatprep.subr.mxu0 0.0
      %1470 = vmatpush1.msra.mxu0 0.0
      %1471 = vmatprep.subr.mxu0 0.0
      %1472 = vmatpush1.msra.mxu0 0.0
      %1473 = vmatprep.subr.mxu0 0.0
      %1474 = vmatpush1.msra.mxu0 0.0
      %1475 = vmatprep.subr.mxu0 0.0
      %1476 = vmatpush1.msra.mxu0 0.0
      %1477 = vmatprep.subr.mxu0 0.0
      %1478 = vmatpush1.msra.mxu0 0.0
      %1479 = vmatprep.subr.mxu0 0.0
      %1480 = vmatpush1.msra.mxu0 0.0
      %1481 = vmatprep.subr.mxu0 0.0
      %1482 = vmatpush1.msra.mxu0 0.0
      %1483 = vmatprep.subr.mxu0 0.0
      %1484 = vmatpush1.msra.mxu0 0.0
      %1485 = vmatprep.subr.mxu0 0.0
      %1486 = vmatpush1.msra.mxu0 0.0
      %1487 = vmatprep.subr.mxu0 0.0
      %1488 = vmatpush1.msra.mxu0 0.0
      %1489 = vmatprep.mubr.f32.mxu0 0.0
      %1490 = vmatmul.mubr.f32.gmra.mrb[0].mxu0 %v1423
      %v1491 = vpop.f32.mrb[0].mxu0
      %v1492 = vadd.f32 0.0, %v1491
      %v1493 = vpop.f32.mrb[0].mxu0
      %1494 = vdwg.mxu0
      %v1495 = vmul.f32 %v1273, 0.35355338
      %v1496 = vmul.f32 %v1346, 0.35355338
      %v1497 = vmul.f32 %v1419, 0.35355338
      %v1498 = vmul.f32 %v1492, 0.35355338
      %v1499 = vsel %vm1073, 1, 0
      %vm1500 = vcmp.eq.s32.totalorder %v1499, 1
      %v1501 = vsel %vm1500, %v1495, -1e+09
      %v1502 = vsel %vm1500, %v1496, -1e+09
      %v1503 = vsel %vm1500, %v1497, -1e+09
      %v1504 = vsel %vm1500, %v1498, -1e+09
      %v1505 = vsel %vm1202, %v1501, -inf
      %1506 = vmax.xlane.f32.xlu0 %v1505
      %v1507 = vpop.xlane.xlu0 %1506
      %v1508 = vsel %vm1202, %v1502, -inf
      %1509 = vmax.xlane.f32.xlu0 %v1508
      %v1510 = vpop.xlane.xlu0 %1509
      %v1511 = vsel %vm1202, %v1503, -inf
      %1512 = vmax.xlane.f32.xlu0 %v1511
      %v1513 = vpop.xlane.xlu0 %1512
      %v1514 = vsel %vm1202, %v1504, -inf
      %1515 = vmax.xlane.f32.xlu0 %v1514
      %v1516 = vpop.xlane.xlu0 %1515
      %v1517 = vsub.f32 %v1501, %v1507
      %v1518 = vsub.f32 %v1502, %v1510
      %v1519 = vsub.f32 %v1503, %v1513
      %v1520 = vsub.f32 %v1504, %v1516
      %v1521 = vmul.f32 %v1517, 1.442695
      %v1522 = vpow.pop %v1521
      %v1523 = vmul.f32 %v1518, 1.442695
      %v1524 = vpow.pop %v1523
      %v1525 = vmul.f32 %v1519, 1.442695
      %v1526 = vpow.pop %v1525
      %v1527 = vmul.f32 %v1520, 1.442695
      %v1528 = vpow.pop %v1527
      %v1529 = vsel %vm1202, %v1522, 0.0
      %1530 = vadd.xlane.f32.xlu0 %v1529
      %v1531 = vpop.xlane.xlu0 %1530
      %v1532 = vsel %vm1202, %v1524, 0.0
      %1533 = vadd.xlane.f32.xlu0 %v1532
      %v1534 = vpop.xlane.xlu0 %1533
      %v1535 = vsel %vm1202, %v1526, 0.0
      %1536 = vadd.xlane.f32.xlu0 %v1535
      %v1537 = vpop.xlane.xlu0 %1536
      %v1538 = vsel %vm1202, %v1528, 0.0
      %1539 = vadd.xlane.f32.xlu0 %v1538
      %v1540 = vpop.xlane.xlu0 %1539
      %v1541 = vrcp.pop %v1531
      %v1542 = vmul.f32 %v1522, %v1541
      %v1543 = vrcp.pop %v1534
      %v1544 = vmul.f32 %v1524, %v1543
      %v1545 = vrcp.pop %v1537
      %v1546 = vmul.f32 %v1526, %v1545
      %v1547 = vrcp.pop %v1540
      %v1548 = vmul.f32 %v1528, %v1547
      %v1550 = vsel %vm1202, %v1051, 0
      %v1553 = vsel %vm1202, %v1542, 0
      %1555 = vmatprep.subr.mxu0 0.0
      %1556 = vmatpush1.xpose.msra.mxu0 %v1553
      %1557 = vmatprep.subr.mxu0 0.0
      %1558 = vmatpush1.xpose.msra.mxu0 0.0
      %1559 = vmatprep.subr.mxu0 0.0
      %1560 = vmatpush1.xpose.msra.mxu0 0.0
      %1561 = vmatprep.subr.mxu0 0.0
      %1562 = vmatpush1.xpose.msra.mxu0 0.0
      %1563 = vmatprep.subr.mxu0 0.0
      %1564 = vmatpush1.xpose.msra.mxu0 0.0
      %1565 = vmatprep.subr.mxu0 0.0
      %1566 = vmatpush1.xpose.msra.mxu0 0.0
      %1567 = vmatprep.subr.mxu0 0.0
      %1568 = vmatpush1.xpose.msra.mxu0 0.0
      %1569 = vmatprep.subr.mxu0 0.0
      %1570 = vmatpush1.xpose.msra.mxu0 0.0
      %1571 = vmatprep.subr.mxu0 0.0
      %1572 = vmatpush1.xpose.msra.mxu0 0.0
      %1573 = vmatprep.subr.mxu0 0.0
      %1574 = vmatpush1.xpose.msra.mxu0 0.0
      %1575 = vmatprep.subr.mxu0 0.0
      %1576 = vmatpush1.xpose.msra.mxu0 0.0
      %1577 = vmatprep.subr.mxu0 0.0
      %1578 = vmatpush1.xpose.msra.mxu0 0.0
      %1579 = vmatprep.subr.mxu0 0.0
      %1580 = vmatpush1.xpose.msra.mxu0 0.0
      %1581 = vmatprep.subr.mxu0 0.0
      %1582 = vmatpush1.xpose.msra.mxu0 0.0
      %1583 = vmatprep.subr.mxu0 0.0
      %1584 = vmatpush1.xpose.msra.mxu0 0.0
      %1585 = vmatprep.subr.mxu0 0.0
      %1586 = vmatpush1.xpose.msra.mxu0 0.0
      %1587 = vmatprep.subr.mxu0 0.0
      %1588 = vmatpush1.xpose.msra.mxu0 0.0
      %1589 = vmatprep.subr.mxu0 0.0
      %1590 = vmatpush1.xpose.msra.mxu0 0.0
      %1591 = vmatprep.subr.mxu0 0.0
      %1592 = vmatpush1.xpose.msra.mxu0 0.0
      %1593 = vmatprep.subr.mxu0 0.0
      %1594 = vmatpush1.xpose.msra.mxu0 0.0
      %1595 = vmatprep.subr.mxu0 0.0
      %1596 = vmatpush1.xpose.msra.mxu0 0.0
      %1597 = vmatprep.subr.mxu0 0.0
      %1598 = vmatpush1.xpose.msra.mxu0 0.0
      %1599 = vmatprep.subr.mxu0 0.0
      %1600 = vmatpush1.xpose.msra.mxu0 0.0
      %1601 = vmatprep.subr.mxu0 0.0
      %1602 = vmatpush1.xpose.msra.mxu0 0.0
      %1603 = vmatprep.subr.mxu0 0.0
      %1604 = vmatpush1.xpose.msra.mxu0 0.0
      %1605 = vmatprep.subr.mxu0 0.0
      %1606 = vmatpush1.xpose.msra.mxu0 0.0
      %1607 = vmatprep.subr.mxu0 0.0
      %1608 = vmatpush1.xpose.msra.mxu0 0.0
      %1609 = vmatprep.subr.mxu0 0.0
      %1610 = vmatpush1.xpose.msra.mxu0 0.0
      %1611 = vmatprep.subr.mxu0 0.0
      %1612 = vmatpush1.xpose.msra.mxu0 0.0
      %1613 = vmatprep.subr.mxu0 0.0
      %1614 = vmatpush1.xpose.msra.mxu0 0.0
      %1615 = vmatprep.subr.mxu0 0.0
      %1616 = vmatpush1.xpose.msra.mxu0 0.0
      %1617 = vmatprep.subr.mxu0 0.0
      %1618 = vmatpush1.xpose.msra.mxu0 0.0
      %1619 = vmatprep.mubr.f32.mxu0 0.0
      %1620 = vmatmul.mubr.f32.gmra.mrb[0].mxu0 %v1550
      %v1621 = vpop.f32.mrb[0].mxu0
      %v1622 = vadd.f32 0.0, %v1621
      %v1623 = vpop.f32.mrb[0].mxu0
      %1624 = vdwg.mxu0
      %v1626 = vsel %vm1202, %v1056, 0
      %v1629 = vsel %vm1202, %v1544, 0
      %1631 = vmatprep.subr.mxu0 0.0
      %1632 = vmatpush1.xpose.msra.mxu0 %v1629
      %1633 = vmatprep.subr.mxu0 0.0
      %1634 = vmatpush1.xpose.msra.mxu0 0.0
      %1635 = vmatprep.subr.mxu0 0.0
      %1636 = vmatpush1.xpose.msra.mxu0 0.0
      %1637 = vmatprep.subr.mxu0 0.0
      %1638 = vmatpush1.xpose.msra.mxu0 0.0
      %1639 = vmatprep.subr.mxu0 0.0
      %1640 = vmatpush1.xpose.msra.mxu0 0.0
      %1641 = vmatprep.subr.mxu0 0.0
      %1642 = vmatpush1.xpose.msra.mxu0 0.0
      %1643 = vmatprep.subr.mxu0 0.0
      %1644 = vmatpush1.xpose.msra.mxu0 0.0
      %1645 = vmatprep.subr.mxu0 0.0
      %1646 = vmatpush1.xpose.msra.mxu0 0.0
      %1647 = vmatprep.subr.mxu0 0.0
      %1648 = vmatpush1.xpose.msra.mxu0 0.0
      %1649 = vmatprep.subr.mxu0 0.0
      %1650 = vmatpush1.xpose.msra.mxu0 0.0
      %1651 = vmatprep.subr.mxu0 0.0
      %1652 = vmatpush1.xpose.msra.mxu0 0.0
      %1653 = vmatprep.subr.mxu0 0.0
      %1654 = vmatpush1.xpose.msra.mxu0 0.0
      %1655 = vmatprep.subr.mxu0 0.0
      %1656 = vmatpush1.xpose.msra.mxu0 0.0
      %1657 = vmatprep.subr.mxu0 0.0
      %1658 = vmatpush1.xpose.msra.mxu0 0.0
      %1659 = vmatprep.subr.mxu0 0.0
      %1660 = vmatpush1.xpose.msra.mxu0 0.0
      %1661 = vmatprep.subr.mxu0 0.0
      %1662 = vmatpush1.xpose.msra.mxu0 0.0
      %1663 = vmatprep.subr.mxu0 0.0
      %1664 = vmatpush1.xpose.msra.mxu0 0.0
      %1665 = vmatprep.subr.mxu0 0.0
      %1666 = vmatpush1.xpose.msra.mxu0 0.0
      %1667 = vmatprep.subr.mxu0 0.0
      %1668 = vmatpush1.xpose.msra.mxu0 0.0
      %1669 = vmatprep.subr.mxu0 0.0
      %1670 = vmatpush1.xpose.msra.mxu0 0.0
      %1671 = vmatprep.subr.mxu0 0.0
      %1672 = vmatpush1.xpose.msra.mxu0 0.0
      %1673 = vmatprep.subr.mxu0 0.0
      %1674 = vmatpush1.xpose.msra.mxu0 0.0
      %1675 = vmatprep.subr.mxu0 0.0
      %1676 = vmatpush1.xpose.msra.mxu0 0.0
      %1677 = vmatprep.subr.mxu0 0.0
      %1678 = vmatpush1.xpose.msra.mxu0 0.0
      %1679 = vmatprep.subr.mxu0 0.0
      %1680 = vmatpush1.xpose.msra.mxu0 0.0
      %1681 = vmatprep.subr.mxu0 0.0
      %1682 = vmatpush1.xpose.msra.mxu0 0.0
      %1683 = vmatprep.subr.mxu0 0.0
      %1684 = vmatpush1.xpose.msra.mxu0 0.0
      %1685 = vmatprep.subr.mxu0 0.0
      %1686 = vmatpush1.xpose.msra.mxu0 0.0
      %1687 = vmatprep.subr.mxu0 0.0
      %1688 = vmatpush1.xpose.msra.mxu0 0.0
      %1689 = vmatprep.subr.mxu0 0.0
      %1690 = vmatpush1.xpose.msra.mxu0 0.0
      %1691 = vmatprep.subr.mxu0 0.0
      %1692 = vmatpush1.xpose.msra.mxu0 0.0
      %1693 = vmatprep.subr.mxu0 0.0
      %1694 = vmatpush1.xpose.msra.mxu0 0.0
      %1695 = vmatprep.mubr.f32.mxu0 0.0
      %1696 = vmatmul.mubr.f32.gmra.mrb[0].mxu0 %v1626
      %v1697 = vpop.f32.mrb[0].mxu0
      %v1698 = vadd.f32 0.0, %v1697
      %v1699 = vpop.f32.mrb[0].mxu0
      %1700 = vdwg.mxu0
      %v1702 = vsel %vm1202, %v1061, 0
      %v1705 = vsel %vm1202, %v1546, 0
      %1707 = vmatprep.subr.mxu0 0.0
      %1708 = vmatpush1.xpose.msra.mxu0 %v1705
      %1709 = vmatprep.subr.mxu0 0.0
      %1710 = vmatpush1.xpose.msra.mxu0 0.0
      %1711 = vmatprep.subr.mxu0 0.0
      %1712 = vmatpush1.xpose.msra.mxu0 0.0
      %1713 = vmatprep.subr.mxu0 0.0
      %1714 = vmatpush1.xpose.msra.mxu0 0.0
      %1715 = vmatprep.subr.mxu0 0.0
      %1716 = vmatpush1.xpose.msra.mxu0 0.0
      %1717 = vmatprep.subr.mxu0 0.0
      %1718 = vmatpush1.xpose.msra.mxu0 0.0
      %1719 = vmatprep.subr.mxu0 0.0
      %1720 = vmatpush1.xpose.msra.mxu0 0.0
      %1721 = vmatprep.subr.mxu0 0.0
      %1722 = vmatpush1.xpose.msra.mxu0 0.0
      %1723 = vmatprep.subr.mxu0 0.0
      %1724 = vmatpush1.xpose.msra.mxu0 0.0
      %1725 = vmatprep.subr.mxu0 0.0
      %1726 = vmatpush1.xpose.msra.mxu0 0.0
      %1727 = vmatprep.subr.mxu0 0.0
      %1728 = vmatpush1.xpose.msra.mxu0 0.0
      %1729 = vmatprep.subr.mxu0 0.0
      %1730 = vmatpush1.xpose.msra.mxu0 0.0
      %1731 = vmatprep.subr.mxu0 0.0
      %1732 = vmatpush1.xpose.msra.mxu0 0.0
      %1733 = vmatprep.subr.mxu0 0.0
      %1734 = vmatpush1.xpose.msra.mxu0 0.0
      %1735 = vmatprep.subr.mxu0 0.0
      %1736 = vmatpush1.xpose.msra.mxu0 0.0
      %1737 = vmatprep.subr.mxu0 0.0
      %1738 = vmatpush1.xpose.msra.mxu0 0.0
      %1739 = vmatprep.subr.mxu0 0.0
      %1740 = vmatpush1.xpose.msra.mxu0 0.0
      %1741 = vmatprep.subr.mxu0 0.0
      %1742 = vmatpush1.xpose.msra.mxu0 0.0
      %1743 = vmatprep.subr.mxu0 0.0
      %1744 = vmatpush1.xpose.msra.mxu0 0.0
      %1745 = vmatprep.subr.mxu0 0.0
      %1746 = vmatpush1.xpose.msra.mxu0 0.0
      %1747 = vmatprep.subr.mxu0 0.0
      %1748 = vmatpush1.xpose.msra.mxu0 0.0
      %1749 = vmatprep.subr.mxu0 0.0
      %1750 = vmatpush1.xpose.msra.mxu0 0.0
      %1751 = vmatprep.subr.mxu0 0.0
      %1752 = vmatpush1.xpose.msra.mxu0 0.0
      %1753 = vmatprep.subr.mxu0 0.0
      %1754 = vmatpush1.xpose.msra.mxu0 0.0
      %1755 = vmatprep.subr.mxu0 0.0
      %1756 = vmatpush1.xpose.msra.mxu0 0.0
      %1757 = vmatprep.subr.mxu0 0.0
      %1758 = vmatpush1.xpose.msra.mxu0 0.0
      %1759 = vmatprep.subr.mxu0 0.0
      %1760 = vmatpush1.xpose.msra.mxu0 0.0
      %1761 = vmatprep.subr.mxu0 0.0
      %1762 = vmatpush1.xpose.msra.mxu0 0.0
      %1763 = vmatprep.subr.mxu0 0.0
      %1764 = vmatpush1.xpose.msra.mxu0 0.0
      %1765 = vmatprep.subr.mxu0 0.0
      %1766 = vmatpush1.xpose.msra.mxu0 0.0
      %1767 = vmatprep.subr.mxu0 0.0
      %1768 = vmatpush1.xpose.msra.mxu0 0.0
      %1769 = vmatprep.subr.mxu0 0.0
      %1770 = vmatpush1.xpose.msra.mxu0 0.0
      %1771 = vmatprep.mubr.f32.mxu0 0.0
      %1772 = vmatmul.mubr.f32.gmra.mrb[0].mxu0 %v1702
      %v1773 = vpop.f32.mrb[0].mxu0
      %v1774 = vadd.f32 0.0, %v1773
      %v1775 = vpop.f32.mrb[0].mxu0
      %1776 = vdwg.mxu0
      %v1778 = vsel %vm1202, %v1066, 0
      %v1781 = vsel %vm1202, %v1548, 0
      %1783 = vmatprep.subr.mxu0 0.0
      %1784 = vmatpush1.xpose.msra.mxu0 %v1781
      %1785 = vmatprep.subr.mxu0 0.0
      %1786 = vmatpush1.xpose.msra.mxu0 0.0
      %1787 = vmatprep.subr.mxu0 0.0
      %1788 = vmatpush1.xpose.msra.mxu0 0.0
      %1789 = vmatprep.subr.mxu0 0.0
      %1790 = vmatpush1.xpose.msra.mxu0 0.0
      %1791 = vmatprep.subr.mxu0 0.0
      %1792 = vmatpush1.xpose.msra.mxu0 0.0
      %1793 = vmatprep.subr.mxu0 0.0
      %1794 = vmatpush1.xpose.msra.mxu0 0.0
      %1795 = vmatprep.subr.mxu0 0.0
      %1796 = vmatpush1.xpose.msra.mxu0 0.0
      %1797 = vmatprep.subr.mxu0 0.0
      %1798 = vmatpush1.xpose.msra.mxu0 0.0
      %1799 = vmatprep.subr.mxu0 0.0
      %1800 = vmatpush1.xpose.msra.mxu0 0.0
      %1801 = vmatprep.subr.mxu0 0.0
      %1802 = vmatpush1.xpose.msra.mxu0 0.0
      %1803 = vmatprep.subr.mxu0 0.0
      %1804 = vmatpush1.xpose.msra.mxu0 0.0
      %1805 = vmatprep.subr.mxu0 0.0
      %1806 = vmatpush1.xpose.msra.mxu0 0.0
      %1807 = vmatprep.subr.mxu0 0.0
      %1808 = vmatpush1.xpose.msra.mxu0 0.0
      %1809 = vmatprep.subr.mxu0 0.0
      %1810 = vmatpush1.xpose.msra.mxu0 0.0
      %1811 = vmatprep.subr.mxu0 0.0
      %1812 = vmatpush1.xpose.msra.mxu0 0.0
      %1813 = vmatprep.subr.mxu0 0.0
      %1814 = vmatpush1.xpose.msra.mxu0 0.0
      %1815 = vmatprep.subr.mxu0 0.0
      %1816 = vmatpush1.xpose.msra.mxu0 0.0
      %1817 = vmatprep.subr.mxu0 0.0
      %1818 = vmatpush1.xpose.msra.mxu0 0.0
      %1819 = vmatprep.subr.mxu0 0.0
      %1820 = vmatpush1.xpose.msra.mxu0 0.0
      %1821 = vmatprep.subr.mxu0 0.0
      %1822 = vmatpush1.xpose.msra.mxu0 0.0
      %1823 = vmatprep.subr.mxu0 0.0
      %1824 = vmatpush1.xpose.msra.mxu0 0.0
      %1825 = vmatprep.subr.mxu0 0.0
      %1826 = vmatpush1.xpose.msra.mxu0 0.0
      %1827 = vmatprep.subr.mxu0 0.0
      %1828 = vmatpush1.xpose.msra.mxu0 0.0
      %1829 = vmatprep.subr.mxu0 0.0
      %1830 = vmatpush1.xpose.msra.mxu0 0.0
      %1831 = vmatprep.subr.mxu0 0.0
      %1832 = vmatpush1.xpose.msra.mxu0 0.0
      %1833 = vmatprep.subr.mxu0 0.0
      %1834 = vmatpush1.xpose.msra.mxu0 0.0
      %1835 = vmatprep.subr.mxu0 0.0
      %1836 = vmatpush1.xpose.msra.mxu0 0.0
      %1837 = vmatprep.subr.mxu0 0.0
      %1838 = vmatpush1.xpose.msra.mxu0 0.0
      %1839 = vmatprep.subr.mxu0 0.0
      %1840 = vmatpush1.xpose.msra.mxu0 0.0
      %1841 = vmatprep.subr.mxu0 0.0
      %1842 = vmatpush1.xpose.msra.mxu0 0.0
      %1843 = vmatprep.subr.mxu0 0.0
      %1844 = vmatpush1.xpose.msra.mxu0 0.0
      %1845 = vmatprep.subr.mxu0 0.0
      %1846 = vmatpush1.xpose.msra.mxu0 0.0
      %1847 = vmatprep.mubr.f32.mxu0 0.0
      %1848 = vmatmul.mubr.f32.gmra.mrb[0].mxu0 %v1778
      %v1849 = vpop.f32.mrb[0].mxu0
      %v1850 = vadd.f32 0.0, %v1849
      %v1851 = vpop.f32.mrb[0].mxu0
      %1852 = vdwg.mxu0
      %1857 = vrot.lane.b32.xlu0 %v1011, 120
      %v1858 = vpop.permute.xlu0 %1857
      %1859 = vrot.lane.b32.xlu0 %v1016, 120
      %v1860 = vpop.permute.xlu0 %1859
      %1861 = vrot.lane.b32.xlu0 %v1021, 120
      %v1862 = vpop.permute.xlu0 %1861
      %1863 = vrot.lane.b32.xlu0 %v1026, 120
      %v1864 = vpop.permute.xlu0 %1863
      %1869 = vxpose.xlu0.b32.start [1/16] %v1858, 128
      %1870 = vxpose.xlu0.b32.cont [2/16] 0.0, 128
      %1871 = vxpose.xlu0.b32.cont [3/16] 0.0, 128
      %1872 = vxpose.xlu0.b32.cont [4/16] 0.0, 128
      %1873 = vxpose.xlu0.b32.cont [5/16] 0.0, 128
      %1874 = vxpose.xlu0.b32.cont [6/16] 0.0, 128
      %1875 = vxpose.xlu0.b32.cont [7/16] 0.0, 128
      %1876 = vxpose.xlu0.b32.cont [8/16] 0.0, 128
      %1877 = vxpose.xlu0.b32.cont [9/16] 0.0, 128
      %1878 = vxpose.xlu0.b32.cont [10/16] 0.0, 128
      %1879 = vxpose.xlu0.b32.cont [11/16] 0.0, 128
      %1880 = vxpose.xlu0.b32.cont [12/16] 0.0, 128
      %1881 = vxpose.xlu0.b32.cont [13/16] 0.0, 128
      %1882 = vxpose.xlu0.b32.cont [14/16] 0.0, 128
      %1883 = vxpose.xlu0.b32.cont [15/16] 0.0, 128
      %1884 = vxpose.xlu0.b32.end [16/16] 0.0, 128
      %v1885 = vpop.trf.xlu0
      %v1886 = vpop.trf.xlu0
      %v1887 = vpop.trf.xlu0
      %v1888 = vpop.trf.xlu0
      %v1889 = vpop.trf.xlu0
      %v1890 = vpop.trf.xlu0
      %v1891 = vpop.trf.xlu0
      %v1892 = vpop.trf.xlu0
      %v1893 = vpop.trf.xlu0
      %v1894 = vpop.trf.xlu0
      %v1895 = vpop.trf.xlu0
      %v1896 = vpop.trf.xlu0
      %v1897 = vpop.trf.xlu0
      %v1898 = vpop.trf.xlu0
      %v1899 = vpop.trf.xlu0
      %v1900 = vpop.trf.xlu0
      %1901 = vxpose.xlu0.b32.start [1/16] %v1860, 128
      %1902 = vxpose.xlu0.b32.cont [2/16] 0.0, 128
      %1903 = vxpose.xlu0.b32.cont [3/16] 0.0, 128
      %1904 = vxpose.xlu0.b32.cont [4/16] 0.0, 128
      %1905 = vxpose.xlu0.b32.cont [5/16] 0.0, 128
      %1906 = vxpose.xlu0.b32.cont [6/16] 0.0, 128
      %1907 = vxpose.xlu0.b32.cont [7/16] 0.0, 128
      %1908 = vxpose.xlu0.b32.cont [8/16] 0.0, 128
      %1909 = vxpose.xlu0.b32.cont [9/16] 0.0, 128
      %1910 = vxpose.xlu0.b32.cont [10/16] 0.0, 128
      %1911 = vxpose.xlu0.b32.cont [11/16] 0.0, 128
      %1912 = vxpose.xlu0.b32.cont [12/16] 0.0, 128
      %1913 = vxpose.xlu0.b32.cont [13/16] 0.0, 128
      %1914 = vxpose.xlu0.b32.cont [14/16] 0.0, 128
      %1915 = vxpose.xlu0.b32.cont [15/16] 0.0, 128
      %1916 = vxpose.xlu0.b32.end [16/16] 0.0, 128
      %v1917 = vpop.trf.xlu0
      %v1918 = vpop.trf.xlu0
      %v1919 = vpop.trf.xlu0
      %v1920 = vpop.trf.xlu0
      %v1921 = vpop.trf.xlu0
      %v1922 = vpop.trf.xlu0
      %v1923 = vpop.trf.xlu0
      %v1924 = vpop.trf.xlu0
      %v1925 = vpop.trf.xlu0
      %v1926 = vpop.trf.xlu0
      %v1927 = vpop.trf.xlu0
      %v1928 = vpop.trf.xlu0
      %v1929 = vpop.trf.xlu0
      %v1930 = vpop.trf.xlu0
      %v1931 = vpop.trf.xlu0
      %v1932 = vpop.trf.xlu0
      %1933 = vxpose.xlu0.b32.start [1/16] %v1862, 128
      %1934 = vxpose.xlu0.b32.cont [2/16] 0.0, 128
      %1935 = vxpose.xlu0.b32.cont [3/16] 0.0, 128
      %1936 = vxpose.xlu0.b32.cont [4/16] 0.0, 128
      %1937 = vxpose.xlu0.b32.cont [5/16] 0.0, 128
      %1938 = vxpose.xlu0.b32.cont [6/16] 0.0, 128
      %1939 = vxpose.xlu0.b32.cont [7/16] 0.0, 128
      %1940 = vxpose.xlu0.b32.cont [8/16] 0.0, 128
      %1941 = vxpose.xlu0.b32.cont [9/16] 0.0, 128
      %1942 = vxpose.xlu0.b32.cont [10/16] 0.0, 128
      %1943 = vxpose.xlu0.b32.cont [11/16] 0.0, 128
      %1944 = vxpose.xlu0.b32.cont [12/16] 0.0, 128
      %1945 = vxpose.xlu0.b32.cont [13/16] 0.0, 128
      %1946 = vxpose.xlu0.b32.cont [14/16] 0.0, 128
      %1947 = vxpose.xlu0.b32.cont [15/16] 0.0, 128
      %1948 = vxpose.xlu0.b32.end [16/16] 0.0, 128
      %v1949 = vpop.trf.xlu0
      %v1950 = vpop.trf.xlu0
      %v1951 = vpop.trf.xlu0
      %v1952 = vpop.trf.xlu0
      %v1953 = vpop.trf.xlu0
      %v1954 = vpop.trf.xlu0
      %v1955 = vpop.trf.xlu0
      %v1956 = vpop.trf.xlu0
      %v1957 = vpop.trf.xlu0
      %v1958 = vpop.trf.xlu0
      %v1959 = vpop.trf.xlu0
      %v1960 = vpop.trf.xlu0
      %v1961 = vpop.trf.xlu0
      %v1962 = vpop.trf.xlu0
      %v1963 = vpop.trf.xlu0
      %v1964 = vpop.trf.xlu0
      %1965 = vxpose.xlu0.b32.start [1/16] %v1864, 128
      %1966 = vxpose.xlu0.b32.cont [2/16] 0.0, 128
      %1967 = vxpose.xlu0.b32.cont [3/16] 0.0, 128
      %1968 = vxpose.xlu0.b32.cont [4/16] 0.0, 128
      %1969 = vxpose.xlu0.b32.cont [5/16] 0.0, 128
      %1970 = vxpose.xlu0.b32.cont [6/16] 0.0, 128
      %1971 = vxpose.xlu0.b32.cont [7/16] 0.0, 128
      %1972 = vxpose.xlu0.b32.cont [8/16] 0.0, 128
      %1973 = vxpose.xlu0.b32.cont [9/16] 0.0, 128
      %1974 = vxpose.xlu0.b32.cont [10/16] 0.0, 128
      %1975 = vxpose.xlu0.b32.cont [11/16] 0.0, 128
      %1976 = vxpose.xlu0.b32.cont [12/16] 0.0, 128
      %1977 = vxpose.xlu0.b32.cont [13/16] 0.0, 128
      %1978 = vxpose.xlu0.b32.cont [14/16] 0.0, 128
      %1979 = vxpose.xlu0.b32.cont [15/16] 0.0, 128
      %1980 = vxpose.xlu0.b32.end [16/16] 0.0, 128
      %v1981 = vpop.trf.xlu0
      %v1982 = vpop.trf.xlu0
      %v1983 = vpop.trf.xlu0
      %v1984 = vpop.trf.xlu0
      %v1985 = vpop.trf.xlu0
      %v1986 = vpop.trf.xlu0
      %v1987 = vpop.trf.xlu0
      %v1988 = vpop.trf.xlu0
      %v1989 = vpop.trf.xlu0
      %v1990 = vpop.trf.xlu0
      %v1991 = vpop.trf.xlu0
      %v1992 = vpop.trf.xlu0
      %v1993 = vpop.trf.xlu0
      %v1994 = vpop.trf.xlu0
      %v1995 = vpop.trf.xlu0
      %v1996 = vpop.trf.xlu0
      %1998 = vrot.lane.b32.xlu0 %v1031, 120
      %v1999 = vpop.permute.xlu0 %1998
      %v2002 = vsel %vm1202, %v1885, 0
      %2004 = vmatprep.subr.mxu0 0.0
      %2005 = vmatpush1.msra.mxu0 %v1999
      %2006 = vmatprep.subr.mxu0 0.0
      %2007 = vmatpush1.msra.mxu0 0.0
      %2008 = vmatprep.subr.mxu0 0.0
      %2009 = vmatpush1.msra.mxu0 0.0
      %2010 = vmatprep.subr.mxu0 0.0
      %2011 = vmatpush1.msra.mxu0 0.0
      %2012 = vmatprep.subr.mxu0 0.0
      %2013 = vmatpush1.msra.mxu0 0.0
      %2014 = vmatprep.subr.mxu0 0.0
      %2015 = vmatpush1.msra.mxu0 0.0
      %2016 = vmatprep.subr.mxu0 0.0
      %2017 = vmatpush1.msra.mxu0 0.0
      %2018 = vmatprep.subr.mxu0 0.0
      %2019 = vmatpush1.msra.mxu0 0.0
      %2020 = vmatprep.subr.mxu0 0.0
      %2021 = vmatpush1.msra.mxu0 0.0
      %2022 = vmatprep.subr.mxu0 0.0
      %2023 = vmatpush1.msra.mxu0 0.0
      %2024 = vmatprep.subr.mxu0 0.0
      %2025 = vmatpush1.msra.mxu0 0.0
      %2026 = vmatprep.subr.mxu0 0.0
      %2027 = vmatpush1.msra.mxu0 0.0
      %2028 = vmatprep.subr.mxu0 0.0
      %2029 = vmatpush1.msra.mxu0 0.0
      %2030 = vmatprep.subr.mxu0 0.0
      %2031 = vmatpush1.msra.mxu0 0.0
      %2032 = vmatprep.subr.mxu0 0.0
      %2033 = vmatpush1.msra.mxu0 0.0
      %2034 = vmatprep.subr.mxu0 0.0
      %2035 = vmatpush1.msra.mxu0 0.0
      %2036 = vmatprep.subr.mxu0 0.0
      %2037 = vmatpush1.msra.mxu0 0.0
      %2038 = vmatprep.subr.mxu0 0.0
      %2039 = vmatpush1.msra.mxu0 0.0
      %2040 = vmatprep.subr.mxu0 0.0
      %2041 = vmatpush1.msra.mxu0 0.0
      %2042 = vmatprep.subr.mxu0 0.0
      %2043 = vmatpush1.msra.mxu0 0.0
      %2044 = vmatprep.subr.mxu0 0.0
      %2045 = vmatpush1.msra.mxu0 0.0
      %2046 = vmatprep.subr.mxu0 0.0
      %2047 = vmatpush1.msra.mxu0 0.0
      %2048 = vmatprep.subr.mxu0 0.0
      %2049 = vmatpush1.msra.mxu0 0.0
      %2050 = vmatprep.subr.mxu0 0.0
      %2051 = vmatpush1.msra.mxu0 0.0
      %2052 = vmatprep.subr.mxu0 0.0
      %2053 = vmatpush1.msra.mxu0 0.0
      %2054 = vmatprep.subr.mxu0 0.0
      %2055 = vmatpush1.msra.mxu0 0.0
      %2056 = vmatprep.subr.mxu0 0.0
      %2057 = vmatpush1.msra.mxu0 0.0
      %2058 = vmatprep.subr.mxu0 0.0
      %2059 = vmatpush1.msra.mxu0 0.0
      %2060 = vmatprep.subr.mxu0 0.0
      %2061 = vmatpush1.msra.mxu0 0.0
      %2062 = vmatprep.subr.mxu0 0.0
      %2063 = vmatpush1.msra.mxu0 0.0
      %2064 = vmatprep.subr.mxu0 0.0
      %2065 = vmatpush1.msra.mxu0 0.0
      %2066 = vmatprep.subr.mxu0 0.0
      %2067 = vmatpush1.msra.mxu0 0.0
      %2068 = vmatprep.mubr.f32.mxu0 0.0
      %2069 = vmatmul.mubr.f32.gmra.mrb[0].mxu0 %v2002
      %v2070 = vpop.f32.mrb[0].mxu0
      %v2071 = vadd.f32 0.0, %v2070
      %v2072 = vpop.f32.mrb[0].mxu0
      %2073 = vdwg.mxu0
      %2075 = vrot.lane.b32.xlu0 %v1036, 120
      %v2076 = vpop.permute.xlu0 %2075
      %v2079 = vsel %vm1202, %v1917, 0
      %2081 = vmatprep.subr.mxu0 0.0
      %2082 = vmatpush1.msra.mxu0 %v2076
      %2083 = vmatprep.subr.mxu0 0.0
      %2084 = vmatpush1.msra.mxu0 0.0
      %2085 = vmatprep.subr.mxu0 0.0
      %2086 = vmatpush1.msra.mxu0 0.0
      %2087 = vmatprep.subr.mxu0 0.0
      %2088 = vmatpush1.msra.mxu0 0.0
      %2089 = vmatprep.subr.mxu0 0.0
      %2090 = vmatpush1.msra.mxu0 0.0
      %2091 = vmatprep.subr.mxu0 0.0
      %2092 = vmatpush1.msra.mxu0 0.0
      %2093 = vmatprep.subr.mxu0 0.0
      %2094 = vmatpush1.msra.mxu0 0.0
      %2095 = vmatprep.subr.mxu0 0.0
      %2096 = vmatpush1.msra.mxu0 0.0
      %2097 = vmatprep.subr.mxu0 0.0
      %2098 = vmatpush1.msra.mxu0 0.0
      %2099 = vmatprep.subr.mxu0 0.0
      %2100 = vmatpush1.msra.mxu0 0.0
      %2101 = vmatprep.subr.mxu0 0.0
      %2102 = vmatpush1.msra.mxu0 0.0
      %2103 = vmatprep.subr.mxu0 0.0
      %2104 = vmatpush1.msra.mxu0 0.0
      %2105 = vmatprep.subr.mxu0 0.0
      %2106 = vmatpush1.msra.mxu0 0.0
      %2107 = vmatprep.subr.mxu0 0.0
      %2108 = vmatpush1.msra.mxu0 0.0
      %2109 = vmatprep.subr.mxu0 0.0
      %2110 = vmatpush1.msra.mxu0 0.0
      %2111 = vmatprep.subr.mxu0 0.0
      %2112 = vmatpush1.msra.mxu0 0.0
      %2113 = vmatprep.subr.mxu0 0.0
      %2114 = vmatpush1.msra.mxu0 0.0
      %2115 = vmatprep.subr.mxu0 0.0
      %2116 = vmatpush1.msra.mxu0 0.0
      %2117 = vmatprep.subr.mxu0 0.0
      %2118 = vmatpush1.msra.mxu0 0.0
      %2119 = vmatprep.subr.mxu0 0.0
      %2120 = vmatpush1.msra.mxu0 0.0
      %2121 = vmatprep.subr.mxu0 0.0
      %2122 = vmatpush1.msra.mxu0 0.0
      %2123 = vmatprep.subr.mxu0 0.0
      %2124 = vmatpush1.msra.mxu0 0.0
      %2125 = vmatprep.subr.mxu0 0.0
      %2126 = vmatpush1.msra.mxu0 0.0
      %2127 = vmatprep.subr.mxu0 0.0
      %2128 = vmatpush1.msra.mxu0 0.0
      %2129 = vmatprep.subr.mxu0 0.0
      %2130 = vmatpush1.msra.mxu0 0.0
      %2131 = vmatprep.subr.mxu0 0.0
      %2132 = vmatpush1.msra.mxu0 0.0
      %2133 = vmatprep.subr.mxu0 0.0
      %2134 = vmatpush1.msra.mxu0 0.0
      %2135 = vmatprep.subr.mxu0 0.0
      %2136 = vmatpush1.msra.mxu0 0.0
      %2137 = vmatprep.subr.mxu0 0.0
      %2138 = vmatpush1.msra.mxu0 0.0
      %2139 = vmatprep.subr.mxu0 0.0
      %2140 = vmatpush1.msra.mxu0 0.0
      %2141 = vmatprep.subr.mxu0 0.0
      %2142 = vmatpush1.msra.mxu0 0.0
      %2143 = vmatprep.subr.mxu0 0.0
      %2144 = vmatpush1.msra.mxu0 0.0
      %2145 = vmatprep.mubr.f32.mxu0 0.0
      %2146 = vmatmul.mubr.f32.gmra.mrb[0].mxu0 %v2079
      %v2147 = vpop.f32.mrb[0].mxu0
      %v2148 = vadd.f32 0.0, %v2147
      %v2149 = vpop.f32.mrb[0].mxu0
      %2150 = vdwg.mxu0
      %2152 = vrot.lane.b32.xlu0 %v1041, 120
      %v2153 = vpop.permute.xlu0 %2152
      %v2156 = vsel %vm1202, %v1949, 0
      %2158 = vmatprep.subr.mxu0 0.0
      %2159 = vmatpush1.msra.mxu0 %v2153
      %2160 = vmatprep.subr.mxu0 0.0
      %2161 = vmatpush1.msra.mxu0 0.0
      %2162 = vmatprep.subr.mxu0 0.0
      %2163 = vmatpush1.msra.mxu0 0.0
      %2164 = vmatprep.subr.mxu0 0.0
      %2165 = vmatpush1.msra.mxu0 0.0
      %2166 = vmatprep.subr.mxu0 0.0
      %2167 = vmatpush1.msra.mxu0 0.0
      %2168 = vmatprep.subr.mxu0 0.0
      %2169 = vmatpush1.msra.mxu0 0.0
      %2170 = vmatprep.subr.mxu0 0.0
      %2171 = vmatpush1.msra.mxu0 0.0
      %2172 = vmatprep.subr.mxu0 0.0
      %2173 = vmatpush1.msra.mxu0 0.0
      %2174 = vmatprep.subr.mxu0 0.0
      %2175 = vmatpush1.msra.mxu0 0.0
      %2176 = vmatprep.subr.mxu0 0.0
      %2177 = vmatpush1.msra.mxu0 0.0
      %2178 = vmatprep.subr.mxu0 0.0
      %2179 = vmatpush1.msra.mxu0 0.0
      %2180 = vmatprep.subr.mxu0 0.0
      %2181 = vmatpush1.msra.mxu0 0.0
      %2182 = vmatprep.subr.mxu0 0.0
      %2183 = vmatpush1.msra.mxu0 0.0
      %2184 = vmatprep.subr.mxu0 0.0
      %2185 = vmatpush1.msra.mxu0 0.0
      %2186 = vmatprep.subr.mxu0 0.0
      %2187 = vmatpush1.msra.mxu0 0.0
      %2188 = vmatprep.subr.mxu0 0.0
      %2189 = vmatpush1.msra.mxu0 0.0
      %2190 = vmatprep.subr.mxu0 0.0
      %2191 = vmatpush1.msra.mxu0 0.0
      %2192 = vmatprep.subr.mxu0 0.0
      %2193 = vmatpush1.msra.mxu0 0.0
      %2194 = vmatprep.subr.mxu0 0.0
      %2195 = vmatpush1.msra.mxu0 0.0
      %2196 = vmatprep.subr.mxu0 0.0
      %2197 = vmatpush1.msra.mxu0 0.0
      %2198 = vmatprep.subr.mxu0 0.0
      %2199 = vmatpush1.msra.mxu0 0.0
      %2200 = vmatprep.subr.mxu0 0.0
      %2201 = vmatpush1.msra.mxu0 0.0
      %2202 = vmatprep.subr.mxu0 0.0
      %2203 = vmatpush1.msra.mxu0 0.0
      %2204 = vmatprep.subr.mxu0 0.0
      %2205 = vmatpush1.msra.mxu0 0.0
      %2206 = vmatprep.subr.mxu0 0.0
      %2207 = vmatpush1.msra.mxu0 0.0
      %2208 = vmatprep.subr.mxu0 0.0
      %2209 = vmatpush1.msra.mxu0 0.0
      %2210 = vmatprep.subr.mxu0 0.0
      %2211 = vmatpush1.msra.mxu0 0.0
      %2212 = vmatprep.subr.mxu0 0.0
      %2213 = vmatpush1.msra.mxu0 0.0
      %2214 = vmatprep.subr.mxu0 0.0
      %2215 = vmatpush1.msra.mxu0 0.0
      %2216 = vmatprep.subr.mxu0 0.0
      %2217 = vmatpush1.msra.mxu0 0.0
      %2218 = vmatprep.subr.mxu0 0.0
      %2219 = vmatpush1.msra.mxu0 0.0
      %2220 = vmatprep.subr.mxu0 0.0
      %2221 = vmatpush1.msra.mxu0 0.0
      %2222 = vmatprep.mubr.f32.mxu0 0.0
      %2223 = vmatmul.mubr.f32.gmra.mrb[0].mxu0 %v2156
      %v2224 = vpop.f32.mrb[0].mxu0
      %v2225 = vadd.f32 0.0, %v2224
      %v2226 = vpop.f32.mrb[0].mxu0
      %2227 = vdwg.mxu0
      %2229 = vrot.lane.b32.xlu0 %v1046, 120
      %v2230 = vpop.permute.xlu0 %2229
      %v2233 = vsel %vm1202, %v1981, 0
      %2235 = vmatprep.subr.mxu0 0.0
      %2236 = vmatpush1.msra.mxu0 %v2230
      %2237 = vmatprep.subr.mxu0 0.0
      %2238 = vmatpush1.msra.mxu0 0.0
      %2239 = vmatprep.subr.mxu0 0.0
      %2240 = vmatpush1.msra.mxu0 0.0
      %2241 = vmatprep.subr.mxu0 0.0
      %2242 = vmatpush1.msra.mxu0 0.0
      %2243 = vmatprep.subr.mxu0 0.0
      %2244 = vmatpush1.msra.mxu0 0.0
      %2245 = vmatprep.subr.mxu0 0.0
      %2246 = vmatpush1.msra.mxu0 0.0
      %2247 = vmatprep.subr.mxu0 0.0
      %2248 = vmatpush1.msra.mxu0 0.0
      %2249 = vmatprep.subr.mxu0 0.0
      %2250 = vmatpush1.msra.mxu0 0.0
      %2251 = vmatprep.subr.mxu0 0.0
      %2252 = vmatpush1.msra.mxu0 0.0
      %2253 = vmatprep.subr.mxu0 0.0
      %2254 = vmatpush1.msra.mxu0 0.0
      %2255 = vmatprep.subr.mxu0 0.0
      %2256 = vmatpush1.msra.mxu0 0.0
      %2257 = vmatprep.subr.mxu0 0.0
      %2258 = vmatpush1.msra.mxu0 0.0
      %2259 = vmatprep.subr.mxu0 0.0
      %2260 = vmatpush1.msra.mxu0 0.0
      %2261 = vmatprep.subr.mxu0 0.0
      %2262 = vmatpush1.msra.mxu0 0.0
      %2263 = vmatprep.subr.mxu0 0.0
      %2264 = vmatpush1.msra.mxu0 0.0
      %2265 = vmatprep.subr.mxu0 0.0
      %2266 = vmatpush1.msra.mxu0 0.0
      %2267 = vmatprep.subr.mxu0 0.0
      %2268 = vmatpush1.msra.mxu0 0.0
      %2269 = vmatprep.subr.mxu0 0.0
      %2270 = vmatpush1.msra.mxu0 0.0
      %2271 = vmatprep.subr.mxu0 0.0
      %2272 = vmatpush1.msra.mxu0 0.0
      %2273 = vmatprep.subr.mxu0 0.0
      %2274 = vmatpush1.msra.mxu0 0.0
      %2275 = vmatprep.subr.mxu0 0.0
      %2276 = vmatpush1.msra.mxu0 0.0
      %2277 = vmatprep.subr.mxu0 0.0
      %2278 = vmatpush1.msra.mxu0 0.0
      %2279 = vmatprep.subr.mxu0 0.0
      %2280 = vmatpush1.msra.mxu0 0.0
      %2281 = vmatprep.subr.mxu0 0.0
      %2282 = vmatpush1.msra.mxu0 0.0
      %2283 = vmatprep.subr.mxu0 0.0
      %2284 = vmatpush1.msra.mxu0 0.0
      %2285 = vmatprep.subr.mxu0 0.0
      %2286 = vmatpush1.msra.mxu0 0.0
      %2287 = vmatprep.subr.mxu0 0.0
      %2288 = vmatpush1.msra.mxu0 0.0
      %2289 = vmatprep.subr.mxu0 0.0
      %2290 = vmatpush1.msra.mxu0 0.0
      %2291 = vmatprep.subr.mxu0 0.0
      %2292 = vmatpush1.msra.mxu0 0.0
      %2293 = vmatprep.subr.mxu0 0.0
      %2294 = vmatpush1.msra.mxu0 0.0
      %2295 = vmatprep.subr.mxu0 0.0
      %2296 = vmatpush1.msra.mxu0 0.0
      %2297 = vmatprep.subr.mxu0 0.0
      %2298 = vmatpush1.msra.mxu0 0.0
      %2299 = vmatprep.mubr.f32.mxu0 0.0
      %2300 = vmatmul.mubr.f32.gmra.mrb[0].mxu0 %v2233
      %v2301 = vpop.f32.mrb[0].mxu0
      %v2302 = vadd.f32 0.0, %v2301
      %v2303 = vpop.f32.mrb[0].mxu0
      %2304 = vdwg.mxu0
      %v2305 = vmul.f32 %v2071, 0.35355338
      %v2306 = vmul.f32 %v2148, 0.35355338
      %v2307 = vmul.f32 %v2225, 0.35355338
      %v2308 = vmul.f32 %v2302, 0.35355338
      %v2309 = vsel %vm1500, %v2305, -1e+09
      %v2310 = vsel %vm1500, %v2306, -1e+09
      %v2311 = vsel %vm1500, %v2307, -1e+09
      %v2312 = vsel %vm1500, %v2308, -1e+09
      %v2313 = vsel %vm1202, %v2309, -inf
      %2314 = vmax.xlane.f32.xlu0 %v2313
      %v2315 = vpop.xlane.xlu0 %2314
      %v2316 = vsel %vm1202, %v2310, -inf
      %2317 = vmax.xlane.f32.xlu0 %v2316
      %v2318 = vpop.xlane.xlu0 %2317
      %v2319 = vsel %vm1202, %v2311, -inf
      %2320 = vmax.xlane.f32.xlu0 %v2319
      %v2321 = vpop.xlane.xlu0 %2320
      %v2322 = vsel %vm1202, %v2312, -inf
      %2323 = vmax.xlane.f32.xlu0 %v2322
      %v2324 = vpop.xlane.xlu0 %2323
      %v2325 = vsub.f32 %v2309, %v2315
      %v2326 = vsub.f32 %v2310, %v2318
      %v2327 = vsub.f32 %v2311, %v2321
      %v2328 = vsub.f32 %v2312, %v2324
      %v2329 = vmul.f32 %v2325, 1.442695
      %v2330 = vpow.pop %v2329
      %v2331 = vmul.f32 %v2326, 1.442695
      %v2332 = vpow.pop %v2331
      %v2333 = vmul.f32 %v2327, 1.442695
      %v2334 = vpow.pop %v2333
      %v2335 = vmul.f32 %v2328, 1.442695
      %v2336 = vpow.pop %v2335
      %v2337 = vsel %vm1202, %v2330, 0.0
      %2338 = vadd.xlane.f32.xlu0 %v2337
      %v2339 = vpop.xlane.xlu0 %2338
      %v2340 = vsel %vm1202, %v2332, 0.0
      %2341 = vadd.xlane.f32.xlu0 %v2340
      %v2342 = vpop.xlane.xlu0 %2341
      %v2343 = vsel %vm1202, %v2334, 0.0
      %2344 = vadd.xlane.f32.xlu0 %v2343
      %v2345 = vpop.xlane.xlu0 %2344
      %v2346 = vsel %vm1202, %v2336, 0.0
      %2347 = vadd.xlane.f32.xlu0 %v2346
      %v2348 = vpop.xlane.xlu0 %2347
      %v2349 = vrcp.pop %v2339
      %v2350 = vmul.f32 %v2330, %v2349
      %v2351 = vrcp.pop %v2342
      %v2352 = vmul.f32 %v2332, %v2351
      %v2353 = vrcp.pop %v2345
      %v2354 = vmul.f32 %v2334, %v2353
      %v2355 = vrcp.pop %v2348
      %v2356 = vmul.f32 %v2336, %v2355
      %2357 = vrot.lane.b32.xlu0 %v1051, 120
      %v2358 = vpop.permute.xlu0 %2357
      %v2359 = vsel %vm1202, %v2358, 0
      %v2362 = vsel %vm1202, %v2350, 0
      %2364 = vmatprep.subr.mxu0 0.0
      %2365 = vmatpush1.xpose.msra.mxu0 %v2362
      %2366 = vmatprep.subr.mxu0 0.0
      %2367 = vmatpush1.xpose.msra.mxu0 0.0
      %2368 = vmatprep.subr.mxu0 0.0
      %2369 = vmatpush1.xpose.msra.mxu0 0.0
      %2370 = vmatprep.subr.mxu0 0.0
      %2371 = vmatpush1.xpose.msra.mxu0 0.0
      %2372 = vmatprep.subr.mxu0 0.0
      %2373 = vmatpush1.xpose.msra.mxu0 0.0
      %2374 = vmatprep.subr.mxu0 0.0
      %2375 = vmatpush1.xpose.msra.mxu0 0.0
      %2376 = vmatprep.subr.mxu0 0.0
      %2377 = vmatpush1.xpose.msra.mxu0 0.0
      %2378 = vmatprep.subr.mxu0 0.0
      %2379 = vmatpush1.xpose.msra.mxu0 0.0
      %2380 = vmatprep.subr.mxu0 0.0
      %2381 = vmatpush1.xpose.msra.mxu0 0.0
      %2382 = vmatprep.subr.mxu0 0.0
      %2383 = vmatpush1.xpose.msra.mxu0 0.0
      %2384 = vmatprep.subr.mxu0 0.0
      %2385 = vmatpush1.xpose.msra.mxu0 0.0
      %2386 = vmatprep.subr.mxu0 0.0
      %2387 = vmatpush1.xpose.msra.mxu0 0.0
      %2388 = vmatprep.subr.mxu0 0.0
      %2389 = vmatpush1.xpose.msra.mxu0 0.0
      %2390 = vmatprep.subr.mxu0 0.0
      %2391 = vmatpush1.xpose.msra.mxu0 0.0
      %2392 = vmatprep.subr.mxu0 0.0
      %2393 = vmatpush1.xpose.msra.mxu0 0.0
      %2394 = vmatprep.subr.mxu0 0.0
      %2395 = vmatpush1.xpose.msra.mxu0 0.0
      %2396 = vmatprep.subr.mxu0 0.0
      %2397 = vmatpush1.xpose.msra.mxu0 0.0
      %2398 = vmatprep.subr.mxu0 0.0
      %2399 = vmatpush1.xpose.msra.mxu0 0.0
      %2400 = vmatprep.subr.mxu0 0.0
      %2401 = vmatpush1.xpose.msra.mxu0 0.0
      %2402 = vmatprep.subr.mxu0 0.0
      %2403 = vmatpush1.xpose.msra.mxu0 0.0
      %2404 = vmatprep.subr.mxu0 0.0
      %2405 = vmatpush1.xpose.msra.mxu0 0.0
      %2406 = vmatprep.subr.mxu0 0.0
      %2407 = vmatpush1.xpose.msra.mxu0 0.0
      %2408 = vmatprep.subr.mxu0 0.0
      %2409 = vmatpush1.xpose.msra.mxu0 0.0
      %2410 = vmatprep.subr.mxu0 0.0
      %2411 = vmatpush1.xpose.msra.mxu0 0.0
      %2412 = vmatprep.subr.mxu0 0.0
      %2413 = vmatpush1.xpose.msra.mxu0 0.0
      %2414 = vmatprep.subr.mxu0 0.0
      %2415 = vmatpush1.xpose.msra.mxu0 0.0
      %2416 = vmatprep.subr.mxu0 0.0
      %2417 = vmatpush1.xpose.msra.mxu0 0.0
      %2418 = vmatprep.subr.mxu0 0.0
      %2419 = vmatpush1.xpose.msra.mxu0 0.0
      %2420 = vmatprep.subr.mxu0 0.0
      %2421 = vmatpush1.xpose.msra.mxu0 0.0
      %2422 = vmatprep.subr.mxu0 0.0
      %2423 = vmatpush1.xpose.msra.mxu0 0.0
      %2424 = vmatprep.subr.mxu0 0.0
      %2425 = vmatpush1.xpose.msra.mxu0 0.0
      %2426 = vmatprep.subr.mxu0 0.0
      %2427 = vmatpush1.xpose.msra.mxu0 0.0
      %2428 = vmatprep.mubr.f32.mxu0 0.0
      %2429 = vmatmul.mubr.f32.gmra.mrb[0].mxu0 %v2359
      %v2430 = vpop.f32.mrb[0].mxu0
      %v2431 = vadd.f32 0.0, %v2430
      %v2432 = vpop.f32.mrb[0].mxu0
      %2433 = vdwg.mxu0
      %2434 = vrot.lane.b32.xlu0 %v1056, 120
      %v2435 = vpop.permute.xlu0 %2434
      %v2436 = vsel %vm1202, %v2435, 0
      %v2439 = vsel %vm1202, %v2352, 0
      %2441 = vmatprep.subr.mxu0 0.0
      %2442 = vmatpush1.xpose.msra.mxu0 %v2439
      %2443 = vmatprep.subr.mxu0 0.0
      %2444 = vmatpush1.xpose.msra.mxu0 0.0
      %2445 = vmatprep.subr.mxu0 0.0
      %2446 = vmatpush1.xpose.msra.mxu0 0.0
      %2447 = vmatprep.subr.mxu0 0.0
      %2448 = vmatpush1.xpose.msra.mxu0 0.0
      %2449 = vmatprep.subr.mxu0 0.0
      %2450 = vmatpush1.xpose.msra.mxu0 0.0
      %2451 = vmatprep.subr.mxu0 0.0
      %2452 = vmatpush1.xpose.msra.mxu0 0.0
      %2453 = vmatprep.subr.mxu0 0.0
      %2454 = vmatpush1.xpose.msra.mxu0 0.0
      %2455 = vmatprep.subr.mxu0 0.0
      %2456 = vmatpush1.xpose.msra.mxu0 0.0
      %2457 = vmatprep.subr.mxu0 0.0
      %2458 = vmatpush1.xpose.msra.mxu0 0.0
      %2459 = vmatprep.subr.mxu0 0.0
      %2460 = vmatpush1.xpose.msra.mxu0 0.0
      %2461 = vmatprep.subr.mxu0 0.0
      %2462 = vmatpush1.xpose.msra.mxu0 0.0
      %2463 = vmatprep.subr.mxu0 0.0
      %2464 = vmatpush1.xpose.msra.mxu0 0.0
      %2465 = vmatprep.subr.mxu0 0.0
      %2466 = vmatpush1.xpose.msra.mxu0 0.0
      %2467 = vmatprep.subr.mxu0 0.0
      %2468 = vmatpush1.xpose.msra.mxu0 0.0
      %2469 = vmatprep.subr.mxu0 0.0
      %2470 = vmatpush1.xpose.msra.mxu0 0.0
      %2471 = vmatprep.subr.mxu0 0.0
      %2472 = vmatpush1.xpose.msra.mxu0 0.0
      %2473 = vmatprep.subr.mxu0 0.0
      %2474 = vmatpush1.xpose.msra.mxu0 0.0
      %2475 = vmatprep.subr.mxu0 0.0
      %2476 = vmatpush1.xpose.msra.mxu0 0.0
      %2477 = vmatprep.subr.mxu0 0.0
      %2478 = vmatpush1.xpose.msra.mxu0 0.0
      %2479 = vmatprep.subr.mxu0 0.0
      %2480 = vmatpush1.xpose.msra.mxu0 0.0
      %2481 = vmatprep.subr.mxu0 0.0
      %2482 = vmatpush1.xpose.msra.mxu0 0.0
      %2483 = vmatprep.subr.mxu0 0.0
      %2484 = vmatpush1.xpose.msra.mxu0 0.0
      %2485 = vmatprep.subr.mxu0 0.0
      %2486 = vmatpush1.xpose.msra.mxu0 0.0
      %2487 = vmatprep.subr.mxu0 0.0
      %2488 = vmatpush1.xpose.msra.mxu0 0.0
      %2489 = vmatprep.subr.mxu0 0.0
      %2490 = vmatpush1.xpose.msra.mxu0 0.0
      %2491 = vmatprep.subr.mxu0 0.0
      %2492 = vmatpush1.xpose.msra.mxu0 0.0
      %2493 = vmatprep.subr.mxu0 0.0
      %2494 = vmatpush1.xpose.msra.mxu0 0.0
      %2495 = vmatprep.subr.mxu0 0.0
      %2496 = vmatpush1.xpose.msra.mxu0 0.0
      %2497 = vmatprep.subr.mxu0 0.0
      %2498 = vmatpush1.xpose.msra.mxu0 0.0
      %2499 = vmatprep.subr.mxu0 0.0
      %2500 = vmatpush1.xpose.msra.mxu0 0.0
      %2501 = vmatprep.subr.mxu0 0.0
      %2502 = vmatpush1.xpose.msra.mxu0 0.0
      %2503 = vmatprep.subr.mxu0 0.0
      %2504 = vmatpush1.xpose.msra.mxu0 0.0
      %2505 = vmatprep.mubr.f32.mxu0 0.0
      %2506 = vmatmul.mubr.f32.gmra.mrb[0].mxu0 %v2436
      %v2507 = vpop.f32.mrb[0].mxu0
      %v2508 = vadd.f32 0.0, %v2507
      %v2509 = vpop.f32.mrb[0].mxu0
      %2510 = vdwg.mxu0
      %2511 = vrot.lane.b32.xlu0 %v1061, 120
      %v2512 = vpop.permute.xlu0 %2511
      %v2513 = vsel %vm1202, %v2512, 0
      %v2516 = vsel %vm1202, %v2354, 0
      %2518 = vmatprep.subr.mxu0 0.0
      %2519 = vmatpush1.xpose.msra.mxu0 %v2516
      %2520 = vmatprep.subr.mxu0 0.0
      %2521 = vmatpush1.xpose.msra.mxu0 0.0
      %2522 = vmatprep.subr.mxu0 0.0
      %2523 = vmatpush1.xpose.msra.mxu0 0.0
      %2524 = vmatprep.subr.mxu0 0.0
      %2525 = vmatpush1.xpose.msra.mxu0 0.0
      %2526 = vmatprep.subr.mxu0 0.0
      %2527 = vmatpush1.xpose.msra.mxu0 0.0
      %2528 = vmatprep.subr.mxu0 0.0
      %2529 = vmatpush1.xpose.msra.mxu0 0.0
      %2530 = vmatprep.subr.mxu0 0.0
      %2531 = vmatpush1.xpose.msra.mxu0 0.0
      %2532 = vmatprep.subr.mxu0 0.0
      %2533 = vmatpush1.xpose.msra.mxu0 0.0
      %2534 = vmatprep.subr.mxu0 0.0
      %2535 = vmatpush1.xpose.msra.mxu0 0.0
      %2536 = vmatprep.subr.mxu0 0.0
      %2537 = vmatpush1.xpose.msra.mxu0 0.0
      %2538 = vmatprep.subr.mxu0 0.0
      %2539 = vmatpush1.xpose.msra.mxu0 0.0
      %2540 = vmatprep.subr.mxu0 0.0
      %2541 = vmatpush1.xpose.msra.mxu0 0.0
      %2542 = vmatprep.subr.mxu0 0.0
      %2543 = vmatpush1.xpose.msra.mxu0 0.0
      %2544 = vmatprep.subr.mxu0 0.0
      %2545 = vmatpush1.xpose.msra.mxu0 0.0
      %2546 = vmatprep.subr.mxu0 0.0
      %2547 = vmatpush1.xpose.msra.mxu0 0.0
      %2548 = vmatprep.subr.mxu0 0.0
      %2549 = vmatpush1.xpose.msra.mxu0 0.0
      %2550 = vmatprep.subr.mxu0 0.0
      %2551 = vmatpush1.xpose.msra.mxu0 0.0
      %2552 = vmatprep.subr.mxu0 0.0
      %2553 = vmatpush1.xpose.msra.mxu0 0.0
      %2554 = vmatprep.subr.mxu0 0.0
      %2555 = vmatpush1.xpose.msra.mxu0 0.0
      %2556 = vmatprep.subr.mxu0 0.0
      %2557 = vmatpush1.xpose.msra.mxu0 0.0
      %2558 = vmatprep.subr.mxu0 0.0
      %2559 = vmatpush1.xpose.msra.mxu0 0.0
      %2560 = vmatprep.subr.mxu0 0.0
      %2561 = vmatpush1.xpose.msra.mxu0 0.0
      %2562 = vmatprep.subr.mxu0 0.0
      %2563 = vmatpush1.xpose.msra.mxu0 0.0
      %2564 = vmatprep.subr.mxu0 0.0
      %2565 = vmatpush1.xpose.msra.mxu0 0.0
      %2566 = vmatprep.subr.mxu0 0.0
      %2567 = vmatpush1.xpose.msra.mxu0 0.0
      %2568 = vmatprep.subr.mxu0 0.0
      %2569 = vmatpush1.xpose.msra.mxu0 0.0
      %2570 = vmatprep.subr.mxu0 0.0
      %2571 = vmatpush1.xpose.msra.mxu0 0.0
      %2572 = vmatprep.subr.mxu0 0.0
      %2573 = vmatpush1.xpose.msra.mxu0 0.0
      %2574 = vmatprep.subr.mxu0 0.0
      %2575 = vmatpush1.xpose.msra.mxu0 0.0
      %2576 = vmatprep.subr.mxu0 0.0
      %2577 = vmatpush1.xpose.msra.mxu0 0.0
      %2578 = vmatprep.subr.mxu0 0.0
      %2579 = vmatpush1.xpose.msra.mxu0 0.0
      %2580 = vmatprep.subr.mxu0 0.0
      %2581 = vmatpush1.xpose.msra.mxu0 0.0
      %2582 = vmatprep.mubr.f32.mxu0 0.0
      %2583 = vmatmul.mubr.f32.gmra.mrb[0].mxu0 %v2513
      %v2584 = vpop.f32.mrb[0].mxu0
      %v2585 = vadd.f32 0.0, %v2584
      %v2586 = vpop.f32.mrb[0].mxu0
      %2587 = vdwg.mxu0
      %2588 = vrot.lane.b32.xlu0 %v1066, 120
      %v2589 = vpop.permute.xlu0 %2588
      %v2590 = vsel %vm1202, %v2589, 0
      %v2593 = vsel %vm1202, %v2356, 0
      %2595 = vmatprep.subr.mxu0 0.0
      %2596 = vmatpush1.xpose.msra.mxu0 %v2593
      %2597 = vmatprep.subr.mxu0 0.0
      %2598 = vmatpush1.xpose.msra.mxu0 0.0
      %2599 = vmatprep.subr.mxu0 0.0
      %2600 = vmatpush1.xpose.msra.mxu0 0.0
      %2601 = vmatprep.subr.mxu0 0.0
      %2602 = vmatpush1.xpose.msra.mxu0 0.0
      %2603 = vmatprep.subr.mxu0 0.0
      %2604 = vmatpush1.xpose.msra.mxu0 0.0
      %2605 = vmatprep.subr.mxu0 0.0
      %2606 = vmatpush1.xpose.msra.mxu0 0.0
      %2607 = vmatprep.subr.mxu0 0.0
      %2608 = vmatpush1.xpose.msra.mxu0 0.0
      %2609 = vmatprep.subr.mxu0 0.0
      %2610 = vmatpush1.xpose.msra.mxu0 0.0
      %2611 = vmatprep.subr.mxu0 0.0
      %2612 = vmatpush1.xpose.msra.mxu0 0.0
      %2613 = vmatprep.subr.mxu0 0.0
      %2614 = vmatpush1.xpose.msra.mxu0 0.0
      %2615 = vmatprep.subr.mxu0 0.0
      %2616 = vmatpush1.xpose.msra.mxu0 0.0
      %2617 = vmatprep.subr.mxu0 0.0
      %2618 = vmatpush1.xpose.msra.mxu0 0.0
      %2619 = vmatprep.subr.mxu0 0.0
      %2620 = vmatpush1.xpose.msra.mxu0 0.0
      %2621 = vmatprep.subr.mxu0 0.0
      %2622 = vmatpush1.xpose.msra.mxu0 0.0
      %2623 = vmatprep.subr.mxu0 0.0
      %2624 = vmatpush1.xpose.msra.mxu0 0.0
      %2625 = vmatprep.subr.mxu0 0.0
      %2626 = vmatpush1.xpose.msra.mxu0 0.0
      %2627 = vmatprep.subr.mxu0 0.0
      %2628 = vmatpush1.xpose.msra.mxu0 0.0
      %2629 = vmatprep.subr.mxu0 0.0
      %2630 = vmatpush1.xpose.msra.mxu0 0.0
      %2631 = vmatprep.subr.mxu0 0.0
      %2632 = vmatpush1.xpose.msra.mxu0 0.0
      %2633 = vmatprep.subr.mxu0 0.0
      %2634 = vmatpush1.xpose.msra.mxu0 0.0
      %2635 = vmatprep.subr.mxu0 0.0
      %2636 = vmatpush1.xpose.msra.mxu0 0.0
      %2637 = vmatprep.subr.mxu0 0.0
      %2638 = vmatpush1.xpose.msra.mxu0 0.0
      %2639 = vmatprep.subr.mxu0 0.0
      %2640 = vmatpush1.xpose.msra.mxu0 0.0
      %2641 = vmatprep.subr.mxu0 0.0
      %2642 = vmatpush1.xpose.msra.mxu0 0.0
      %2643 = vmatprep.subr.mxu0 0.0
      %2644 = vmatpush1.xpose.msra.mxu0 0.0
      %2645 = vmatprep.subr.mxu0 0.0
      %2646 = vmatpush1.xpose.msra.mxu0 0.0
      %2647 = vmatprep.subr.mxu0 0.0
      %2648 = vmatpush1.xpose.msra.mxu0 0.0
      %2649 = vmatprep.subr.mxu0 0.0
      %2650 = vmatpush1.xpose.msra.mxu0 0.0
      %2651 = vmatprep.subr.mxu0 0.0
      %2652 = vmatpush1.xpose.msra.mxu0 0.0
      %2653 = vmatprep.subr.mxu0 0.0
      %2654 = vmatpush1.xpose.msra.mxu0 0.0
      %2655 = vmatprep.subr.mxu0 0.0
      %2656 = vmatpush1.xpose.msra.mxu0 0.0
      %2657 = vmatprep.subr.mxu0 0.0
      %2658 = vmatpush1.xpose.msra.mxu0 0.0
      %2659 = vmatprep.mubr.f32.mxu0 0.0
      %2660 = vmatmul.mubr.f32.gmra.mrb[0].mxu0 %v2590
      %v2661 = vpop.f32.mrb[0].mxu0
      %v2662 = vadd.f32 0.0, %v2661
      %v2663 = vpop.f32.mrb[0].mxu0
      %2664 = vdwg.mxu0
      %2669 = vrot.lane.b32.xlu0 %v2431, 8
      %v2670 = vpop.permute.xlu0 %2669
      %2671 = vrot.lane.b32.xlu0 %v2508, 8
      %v2672 = vpop.permute.xlu0 %2671
      %2673 = vrot.lane.b32.xlu0 %v2585, 8
      %v2674 = vpop.permute.xlu0 %2673
      %2675 = vrot.lane.b32.xlu0 %v2662, 8
      %v2676 = vpop.permute.xlu0 %2675
      %v2681 = vsel %vm1202, %v1622, %v2670
      %v2682 = vsel %vm1202, %v1698, %v2672
      %v2683 = vsel %vm1202, %v1774, %v2674
      %v2684 = vsel %vm1202, %v1850, %v2676
      %2685 = vxpose.xlu0.b32.start [1/16] %v2681, 128
      %2686 = vxpose.xlu0.b32.cont [2/16] %v2682, 128
      %2687 = vxpose.xlu0.b32.cont [3/16] %v2683, 128
      %2688 = vxpose.xlu0.b32.cont [4/16] %v2684, 128
      %2689 = vxpose.xlu0.b32.cont [5/16] 0.0, 128
      %2690 = vxpose.xlu0.b32.cont [6/16] 0.0, 128
      %2691 = vxpose.xlu0.b32.cont [7/16] 0.0, 128
      %2692 = vxpose.xlu0.b32.cont [8/16] 0.0, 128
      %2693 = vxpose.xlu0.b32.cont [9/16] 0.0, 128
      %2694 = vxpose.xlu0.b32.cont [10/16] 0.0, 128
      %2695 = vxpose.xlu0.b32.cont [11/16] 0.0, 128
      %2696 = vxpose.xlu0.b32.cont [12/16] 0.0, 128
      %2697 = vxpose.xlu0.b32.cont [13/16] 0.0, 128
      %2698 = vxpose.xlu0.b32.cont [14/16] 0.0, 128
      %2699 = vxpose.xlu0.b32.cont [15/16] 0.0, 128
      %2700 = vxpose.xlu0.b32.end [16/16] 0.0, 128
      %v2701 = vpop.trf.xlu0
      %v2702 = vpop.trf.xlu0
      %v2703 = vpop.trf.xlu0
      %v2704 = vpop.trf.xlu0
      %v2705 = vpop.trf.xlu0
      %v2706 = vpop.trf.xlu0
      %v2707 = vpop.trf.xlu0
      %v2708 = vpop.trf.xlu0
      %v2709 = vpop.trf.xlu0
      %v2710 = vpop.trf.xlu0
      %v2711 = vpop.trf.xlu0
      %v2712 = vpop.trf.xlu0
      %v2713 = vpop.trf.xlu0
      %v2714 = vpop.trf.xlu0
      %v2715 = vpop.trf.xlu0
      %v2716 = vpop.trf.xlu0
      %v2717 = vld [vmem:[%s769] sm:$0xff]
      %v2718 = vld [vmem:[%s769 + $0x8] sm:$0xff]
      %v2719 = vld [vmem:[%s769 + $0x10] sm:$0xff]
      %v2720 = vld [vmem:[%s769 + $0x18] sm:$0xff]
      %v2721 = vld [vmem:[%s772] sm:$0x1]
      %v2723 = vlaneseq
      %v2724 = vshrl.u32 %v2723, 7
      %v2725 = vsub.s32 0, %v2724
      %v2726 = vrot.slane %v2721, %v2725
      %v2729 = vsel %vm901, %v2701, 0
      %v2732 = vsel %vm901, %v2702, 0
      %2734 = vmatprep.subr.mxu0 0.0
      %2735 = vmatpush1.msra.mxu0 %v2717
      %2736 = vmatprep.subr.mxu0 0.0
      %2737 = vmatpush1.msra.mxu0 %v2718
      %2738 = vmatprep.subr.mxu0 0.0
      %2739 = vmatpush1.msra.mxu0 %v2719
      %2740 = vmatprep.subr.mxu0 0.0
      %2741 = vmatpush1.msra.mxu0 %v2720
      %2742 = vmatprep.subr.mxu0 0.0
      %2743 = vmatpush1.msra.mxu0 0.0
      %2744 = vmatprep.subr.mxu0 0.0
      %2745 = vmatpush1.msra.mxu0 0.0
      %2746 = vmatprep.subr.mxu0 0.0
      %2747 = vmatpush1.msra.mxu0 0.0
      %2748 = vmatprep.subr.mxu0 0.0
      %2749 = vmatpush1.msra.mxu0 0.0
      %2750 = vmatprep.subr.mxu0 0.0
      %2751 = vmatpush1.msra.mxu0 0.0
      %2752 = vmatprep.subr.mxu0 0.0
      %2753 = vmatpush1.msra.mxu0 0.0
      %2754 = vmatprep.subr.mxu0 0.0
      %2755 = vmatpush1.msra.mxu0 0.0
      %2756 = vmatprep.subr.mxu0 0.0
      %2757 = vmatpush1.msra.mxu0 0.0
      %2758 = vmatprep.subr.mxu0 0.0
      %2759 = vmatpush1.msra.mxu0 0.0
      %2760 = vmatprep.subr.mxu0 0.0
      %2761 = vmatpush1.msra.mxu0 0.0
      %2762 = vmatprep.subr.mxu0 0.0
      %2763 = vmatpush1.msra.mxu0 0.0
      %2764 = vmatprep.subr.mxu0 0.0
      %2765 = vmatpush1.msra.mxu0 0.0
      %2766 = vmatprep.subr.mxu0 0.0
      %2767 = vmatpush1.msra.mxu0 0.0
      %2768 = vmatprep.subr.mxu0 0.0
      %2769 = vmatpush1.msra.mxu0 0.0
      %2770 = vmatprep.subr.mxu0 0.0
      %2771 = vmatpush1.msra.mxu0 0.0
      %2772 = vmatprep.subr.mxu0 0.0
      %2773 = vmatpush1.msra.mxu0 0.0
      %2774 = vmatprep.subr.mxu0 0.0
      %2775 = vmatpush1.msra.mxu0 0.0
      %2776 = vmatprep.subr.mxu0 0.0
      %2777 = vmatpush1.msra.mxu0 0.0
      %2778 = vmatprep.subr.mxu0 0.0
      %2779 = vmatpush1.msra.mxu0 0.0
      %2780 = vmatprep.subr.mxu0 0.0
      %2781 = vmatpush1.msra.mxu0 0.0
      %2782 = vmatprep.subr.mxu0 0.0
      %2783 = vmatpush1.msra.mxu0 0.0
      %2784 = vmatprep.subr.mxu0 0.0
      %2785 = vmatpush1.msra.mxu0 0.0
      %2786 = vmatprep.subr.mxu0 0.0
      %2787 = vmatpush1.msra.mxu0 0.0
      %2788 = vmatprep.subr.mxu0 0.0
      %2789 = vmatpush1.msra.mxu0 0.0
      %2790 = vmatprep.subr.mxu0 0.0
      %2791 = vmatpush1.msra.mxu0 0.0
      %2792 = vmatprep.subr.mxu0 0.0
      %2793 = vmatpush1.msra.mxu0 0.0
      %2794 = vmatprep.subr.mxu0 0.0
      %2795 = vmatpush1.msra.mxu0 0.0
      %2796 = vmatprep.subr.mxu0 0.0
      %2797 = vmatpush1.msra.mxu0 0.0
      %2798 = vmatprep.mubr.f32.mxu0 0.0
      %2799 = vmatmul.mubr.f32.gmra.mrb[0].mxu0 %v2729
      %v2800 = vpop.f32.mrb[0].mxu0
      %v2801 = vadd.f32 %v2726, %v2800
      %v2802 = vpop.f32.mrb[0].mxu0
      %2803 = vmatprep.mubr.f32.mxu0 0.0
      %2804 = vmatmul.mubr.f32.gmra.mrb[0].mxu0 %v2732
      %v2805 = vpop.f32.mrb[0].mxu0
      %v2806 = vadd.f32 %v2726, %v2805
      %v2807 = vpop.f32.mrb[0].mxu0
      %2808 = vdwg.mxu0
      %v2809 = vadd.f32 %v815, %v2801
      %v2810 = vadd.f32 %v816, %v2806
      %v2811 = vld [vmem:[%s775] sm:$0x1]
      %v2812 = vld [vmem:[%s778] sm:$0x1]
      %v2813 = vsel %vm901, %v2809, 0.0
      %2814 = vadd.xlane.f32.xlu0 %v2813
      %v2815 = vpop.xlane.xlu0 %2814
      %v2816 = vsel %vm901, %v2810, 0.0
      %2817 = vadd.xlane.f32.xlu0 %v2816
      %v2818 = vpop.xlane.xlu0 %2817
      %v2819 = vrcp.pop 32.0
      %v2820 = vmul.f32 %v2815, %v2819
      %v2821 = vmul.f32 %v2818, %v2819
      %v2822 = vsub.f32 %v2809, %v2820
      %v2823 = vsub.f32 %v2810, %v2821
      %v2824 = vmul.f32 %v2822, %v2822
      %v2825 = vmul.f32 %v2823, %v2823
      %v2826 = vsel %vm901, %v2824, 0.0
      %2827 = vadd.xlane.f32.xlu0 %v2826
      %v2828 = vpop.xlane.xlu0 %2827
      %v2829 = vsel %vm901, %v2825, 0.0
      %2830 = vadd.xlane.f32.xlu0 %v2829
      %v2831 = vpop.xlane.xlu0 %2830
      %v2832 = vmul.f32 %v2828, %v2819
      %v2833 = vmul.f32 %v2831, %v2819
      %v2834 = vadd.f32 %v2832, 1e-05
      %v2835 = vadd.f32 %v2833, 1e-05
      %v2836 = vrsqrt.pop %v2834
      %v2837 = vrsqrt.pop %v2835
      %v2838 = vmul.f32 %v2822, %v2836
      %v2839 = vmul.f32 %v2823, %v2837
      %v2841 = vlaneseq
      %v2842 = vshrl.u32 %v2841, 7
      %v2843 = vsub.s32 0, %v2842
      %v2844 = vrot.slane %v2811, %v2843
      %v2846 = vmul.f32 %v2844, %v2838
      %v2847 = vmul.f32 %v2844, %v2839
      %v2849 = vlaneseq
      %v2850 = vshrl.u32 %v2849, 7
      %v2851 = vsub.s32 0, %v2850
      %v2852 = vrot.slane %v2812, %v2851
      %v2854 = vadd.f32 %v2846, %v2852
      %v2855 = vadd.f32 %v2847, %v2852
      %v2856 = vld [vmem:[%s783] sm:$0xff]
      %v2857 = vld [vmem:[%s783 + $0x8] sm:$0xff]
      %v2858 = vld [vmem:[%s783 + $0x10] sm:$0xff]
      %v2859 = vld [vmem:[%s783 + $0x18] sm:$0xff]
      %v2860 = vld [vmem:[%s786] sm:$0x1]
      %v2862 = vlaneseq
      %v2863 = vshrl.u32 %v2862, 7
      %v2864 = vsub.s32 0, %v2863
      %v2865 = vrot.slane %v2860, %v2864
      %v2868 = vsel %vm901, %v2854, 0
      %v2871 = vsel %vm901, %v2855, 0
      %2873 = vmatprep.subr.mxu0 0.0
      %2874 = vmatpush1.msra.mxu0 %v2856
      %2875 = vmatprep.subr.mxu0 0.0
      %2876 = vmatpush1.msra.mxu0 %v2857
      %2877 = vmatprep.subr.mxu0 0.0
      %2878 = vmatpush1.msra.mxu0 %v2858
      %2879 = vmatprep.subr.mxu0 0.0
      %2880 = vmatpush1.msra.mxu0 %v2859
      %2881 = vmatprep.subr.mxu0 0.0
      %2882 = vmatpush1.msra.mxu0 0.0
      %2883 = vmatprep.subr.mxu0 0.0
      %2884 = vmatpush1.msra.mxu0 0.0
      %2885 = vmatprep.subr.mxu0 0.0
      %2886 = vmatpush1.msra.mxu0 0.0
      %2887 = vmatprep.subr.mxu0 0.0
      %2888 = vmatpush1.msra.mxu0 0.0
      %2889 = vmatprep.subr.mxu0 0.0
      %2890 = vmatpush1.msra.mxu0 0.0
      %2891 = vmatprep.subr.mxu0 0.0
      %2892 = vmatpush1.msra.mxu0 0.0
      %2893 = vmatprep.subr.mxu0 0.0
      %2894 = vmatpush1.msra.mxu0 0.0
      %2895 = vmatprep.subr.mxu0 0.0
      %2896 = vmatpush1.msra.mxu0 0.0
      %2897 = vmatprep.subr.mxu0 0.0
      %2898 = vmatpush1.msra.mxu0 0.0
      %2899 = vmatprep.subr.mxu0 0.0
      %2900 = vmatpush1.msra.mxu0 0.0
      %2901 = vmatprep.subr.mxu0 0.0
      %2902 = vmatpush1.msra.mxu0 0.0
      %2903 = vmatprep.subr.mxu0 0.0
      %2904 = vmatpush1.msra.mxu0 0.0
      %2905 = vmatprep.subr.mxu0 0.0
      %2906 = vmatpush1.msra.mxu0 0.0
      %2907 = vmatprep.subr.mxu0 0.0
      %2908 = vmatpush1.msra.mxu0 0.0
      %2909 = vmatprep.subr.mxu0 0.0
      %2910 = vmatpush1.msra.mxu0 0.0
      %2911 = vmatprep.subr.mxu0 0.0
      %2912 = vmatpush1.msra.mxu0 0.0
      %2913 = vmatprep.subr.mxu0 0.0
      %2914 = vmatpush1.msra.mxu0 0.0
      %2915 = vmatprep.subr.mxu0 0.0
      %2916 = vmatpush1.msra.mxu0 0.0
      %2917 = vmatprep.subr.mxu0 0.0
      %2918 = vmatpush1.msra.mxu0 0.0
      %2919 = vmatprep.subr.mxu0 0.0
      %2920 = vmatpush1.msra.mxu0 0.0
      %2921 = vmatprep.subr.mxu0 0.0
      %2922 = vmatpush1.msra.mxu0 0.0
      %2923 = vmatprep.subr.mxu0 0.0
      %2924 = vmatpush1.msra.mxu0 0.0
      %2925 = vmatprep.subr.mxu0 0.0
      %2926 = vmatpush1.msra.mxu0 0.0
      %2927 = vmatprep.subr.mxu0 0.0
      %2928 = vmatpush1.msra.mxu0 0.0
      %2929 = vmatprep.subr.mxu0 0.0
      %2930 = vmatpush1.msra.mxu0 0.0
      %2931 = vmatprep.subr.mxu0 0.0
      %2932 = vmatpush1.msra.mxu0 0.0
      %2933 = vmatprep.subr.mxu0 0.0
      %2934 = vmatpush1.msra.mxu0 0.0
      %2935 = vmatprep.subr.mxu0 0.0
      %2936 = vmatpush1.msra.mxu0 0.0
      %2937 = vmatprep.mubr.f32.mxu0 0.0
      %2938 = vmatmul.mubr.f32.gmra.mrb[0].mxu0 %v2868
      %v2939 = vpop.f32.mrb[0].mxu0
      %v2940 = vadd.f32 %v2865, %v2939
      %v2941 = vpop.f32.mrb[0].mxu0
      %2942 = vmatprep.mubr.f32.mxu0 0.0
      %2943 = vmatmul.mubr.f32.gmra.mrb[0].mxu0 %v2871
      %v2944 = vpop.f32.mrb[0].mxu0
      %v2945 = vadd.f32 %v2865, %v2944
      %v2946 = vpop.f32.mrb[0].mxu0
      %2947 = vdwg.mxu0
      %v2948 = vmul.f32 %v2940, 0.5
      %v2949 = vmul.f32 %v2945, 0.5
      %v2950 = vmul.f32 %v2940, %v2940
      %v2951 = vmul.f32 %v2945, %v2945
      %v2952 = vmul.f32 %v2940, %v2950
      %v2953 = vmul.f32 %v2945, %v2951
      %v2954 = vmul.f32 %v2952, 0.044715
      %v2955 = vmul.f32 %v2953, 0.044715
      %v2956 = vadd.f32 %v2940, %v2954
      %v2957 = vadd.f32 %v2945, %v2955
      %v2958 = vmul.f32 %v2956, 0.7978846
      %v2959 = vmul.f32 %v2957, 0.7978846
      %v2960 = vtanh.pop %v2958
      %v2961 = vtanh.pop %v2959
      %v2962 = vadd.f32 %v2960, 1.0
      %v2963 = vadd.f32 %v2961, 1.0
      %v2964 = vmul.f32 %v2948, %v2962
      %v2965 = vmul.f32 %v2949, %v2963
      %v2966 = vld [vmem:[%s791] sm:$0xff]
      %v2967 = vld [vmem:[%s791 + $0x8] sm:$0xff]
      %v2968 = vld [vmem:[%s791 + $0x10] sm:$0xff]
      %v2969 = vld [vmem:[%s791 + $0x18] sm:$0xff]
      %v2970 = vld [vmem:[%s791 + $0x20] sm:$0xff]
      %v2971 = vld [vmem:[%s791 + $0x28] sm:$0xff]
      %v2972 = vld [vmem:[%s791 + $0x30] sm:$0xff]
      %v2973 = vld [vmem:[%s791 + $0x38] sm:$0xff]
      %v2974 = vld [vmem:[%s791 + $0x40] sm:$0xff]
      %v2975 = vld [vmem:[%s791 + $0x48] sm:$0xff]
      %v2976 = vld [vmem:[%s791 + $0x50] sm:$0xff]
      %v2977 = vld [vmem:[%s791 + $0x58] sm:$0xff]
      %v2978 = vld [vmem:[%s791 + $0x60] sm:$0xff]
      %v2979 = vld [vmem:[%s791 + $0x68] sm:$0xff]
      %v2980 = vld [vmem:[%s791 + $0x70] sm:$0xff]
      %v2981 = vld [vmem:[%s791 + $0x78] sm:$0xff]
      %v2982 = vld [vmem:[%s794] sm:$0x1]
      %v2984 = vlaneseq
      %v2985 = vshrl.u32 %v2984, 7
      %v2986 = vsub.s32 0, %v2985
      %v2987 = vrot.slane %v2982, %v2986
      %2989 = vmatprep.subr.mxu0 0.0
      %2990 = vmatpush1.msra.mxu0 %v2966
      %2991 = vmatprep.subr.mxu0 0.0
      %2992 = vmatpush1.msra.mxu0 %v2967
      %2993 = vmatprep.subr.mxu0 0.0
      %2994 = vmatpush1.msra.mxu0 %v2968
      %2995 = vmatprep.subr.mxu0 0.0
      %2996 = vmatpush1.msra.mxu0 %v2969
      %2997 = vmatprep.subr.mxu0 0.0
      %2998 = vmatpush1.msra.mxu0 %v2970
      %2999 = vmatprep.subr.mxu0 0.0
      %3000 = vmatpush1.msra.mxu0 %v2971
      %3001 = vmatprep.subr.mxu0 0.0
      %3002 = vmatpush1.msra.mxu0 %v2972
      %3003 = vmatprep.subr.mxu0 0.0
      %3004 = vmatpush1.msra.mxu0 %v2973
      %3005 = vmatprep.subr.mxu0 0.0
      %3006 = vmatpush1.msra.mxu0 %v2974
      %3007 = vmatprep.subr.mxu0 0.0
      %3008 = vmatpush1.msra.mxu0 %v2975
      %3009 = vmatprep.subr.mxu0 0.0
      %3010 = vmatpush1.msra.mxu0 %v2976
      %3011 = vmatprep.subr.mxu0 0.0
      %3012 = vmatpush1.msra.mxu0 %v2977
      %3013 = vmatprep.subr.mxu0 0.0
      %3014 = vmatpush1.msra.mxu0 %v2978
      %3015 = vmatprep.subr.mxu0 0.0
      %3016 = vmatpush1.msra.mxu0 %v2979
      %3017 = vmatprep.subr.mxu0 0.0
      %3018 = vmatpush1.msra.mxu0 %v2980
      %3019 = vmatprep.subr.mxu0 0.0
      %3020 = vmatpush1.msra.mxu0 %v2981
      %3021 = vmatprep.subr.mxu0 0.0
      %3022 = vmatpush1.msra.mxu0 0.0
      %3023 = vmatprep.subr.mxu0 0.0
      %3024 = vmatpush1.msra.mxu0 0.0
      %3025 = vmatprep.subr.mxu0 0.0
      %3026 = vmatpush1.msra.mxu0 0.0
      %3027 = vmatprep.subr.mxu0 0.0
      %3028 = vmatpush1.msra.mxu0 0.0
      %3029 = vmatprep.subr.mxu0 0.0
      %3030 = vmatpush1.msra.mxu0 0.0
      %3031 = vmatprep.subr.mxu0 0.0
      %3032 = vmatpush1.msra.mxu0 0.0
      %3033 = vmatprep.subr.mxu0 0.0
      %3034 = vmatpush1.msra.mxu0 0.0
      %3035 = vmatprep.subr.mxu0 0.0
      %3036 = vmatpush1.msra.mxu0 0.0
      %3037 = vmatprep.subr.mxu0 0.0
      %3038 = vmatpush1.msra.mxu0 0.0
      %3039 = vmatprep.subr.mxu0 0.0
      %3040 = vmatpush1.msra.mxu0 0.0
      %3041 = vmatprep.subr.mxu0 0.0
      %3042 = vmatpush1.msra.mxu0 0.0
      %3043 = vmatprep.subr.mxu0 0.0
      %3044 = vmatpush1.msra.mxu0 0.0
      %3045 = vmatprep.subr.mxu0 0.0
      %3046 = vmatpush1.msra.mxu0 0.0
      %3047 = vmatprep.subr.mxu0 0.0
      %3048 = vmatpush1.msra.mxu0 0.0
      %3049 = vmatprep.subr.mxu0 0.0
      %3050 = vmatpush1.msra.mxu0 0.0
      %3051 = vmatprep.subr.mxu0 0.0
      %3052 = vmatpush1.msra.mxu0 0.0
      %3053 = vmatprep.mubr.f32.mxu0 0.0
      %3054 = vmatmul.mubr.f32.gmra.mrb[0].mxu0 %v2964
      %v3055 = vpop.f32.mrb[0].mxu0
      %v3056 = vadd.f32 %v2987, %v3055
      %v3057 = vpop.f32.mrb[0].mxu0
      %3058 = vmatprep.mubr.f32.mxu0 0.0
      %3059 = vmatmul.mubr.f32.gmra.mrb[0].mxu0 %v2965
      %v3060 = vpop.f32.mrb[0].mxu0
      %v3061 = vadd.f32 %v2987, %v3060
      %v3062 = vpop.f32.mrb[0].mxu0
      %3063 = vdwg.mxu0
      %v3064 = vadd.f32 %v2854, %v3056
      %v3065 = vadd.f32 %v2855, %v3061
      %v3066 = vld [vmem:[%s797] sm:$0x1]
      %v3067 = vld [vmem:[%s800] sm:$0x1]
      %v3068 = vsel %vm901, %v3064, 0.0
      %3069 = vadd.xlane.f32.xlu0 %v3068
      %v3070 = vpop.xlane.xlu0 %3069
      %v3071 = vsel %vm901, %v3065, 0.0
      %3072 = vadd.xlane.f32.xlu0 %v3071
      %v3073 = vpop.xlane.xlu0 %3072
      %v3074 = vmul.f32 %v3070, %v2819
      %v3075 = vmul.f32 %v3073, %v2819
      %v3076 = vsub.f32 %v3064, %v3074
      %v3077 = vsub.f32 %v3065, %v3075
      %v3078 = vmul.f32 %v3076, %v3076
      %v3079 = vmul.f32 %v3077, %v3077
      %v3080 = vsel %vm901, %v3078, 0.0
      %3081 = vadd.xlane.f32.xlu0 %v3080
      %v3082 = vpop.xlane.xlu0 %3081
      %v3083 = vsel %vm901, %v3079, 0.0
      %3084 = vadd.xlane.f32.xlu0 %v3083
      %v3085 = vpop.xlane.xlu0 %3084
      %v3086 = vmul.f32 %v3082, %v2819
      %v3087 = vmul.f32 %v3085, %v2819
      %v3088 = vadd.f32 %v3086, 1e-05
      %v3089 = vadd.f32 %v3087, 1e-05
      %v3090 = vrsqrt.pop %v3088
      %v3091 = vrsqrt.pop %v3089
      %v3092 = vmul.f32 %v3076, %v3090
      %v3093 = vmul.f32 %v3077, %v3091
      %v3095 = vlaneseq
      %v3096 = vshrl.u32 %v3095, 7
      %v3097 = vsub.s32 0, %v3096
      %v3098 = vrot.slane %v3066, %v3097
      %v3100 = vmul.f32 %v3098, %v3092
      %v3101 = vmul.f32 %v3098, %v3093
      %v3103 = vlaneseq
      %v3104 = vshrl.u32 %v3103, 7
      %v3105 = vsub.s32 0, %v3104
      %v3106 = vrot.slane %v3067, %v3105
      %v3108 = vadd.f32 %v3100, %v3106
      %v3109 = vadd.f32 %v3101, %v3106
      %3110 = vst.msk [vmem:[#allocation2] sm:$0xff] %vm901, %v3108
      %3111 = vst.msk [vmem:[#allocation2 + $0x8] sm:$0xff] %vm901, %v3109
      %3112 = vst.msk [vmem:[%s805] sm:$0xff] %vm901, %v3108
      %3113 = vst.msk [vmem:[%s805 + $0x8] sm:$0xff] %vm901, %v3109
      %p3114 = scmp.eq.s32.totalorder %s32, 1
      // Predicated region
      $region101: #{elm_forward.1} parent=95 // pred_check
        %p3115 = pneg %p3114
      $region102: #{elm_forward.1} parent=95 // pred_check_branch
        %3117 = sbr.rel (%p3115) target = $region104
      $region103: #{elm_forward.1} parent=95 // pred_region
        %v3118 = vld [vmem:[%s13] sm:$0xff]
        %v3119 = vld [vmem:[%s13 + $0x8] sm:$0xff]
        %v3120 = vld [vmem:[%s13 + $0x10] sm:$0xff]
        %v3121 = vld [vmem:[%s13 + $0x18] sm:$0xff]
        %v3122 = vld [vmem:[%s14] sm:$0x3]
        %v3123 = vld [vmem:[%s16] sm:$0xff]
        %v3124 = vld [vmem:[%s16 + $0x8] sm:$0xff]
        %vm3125 = vcmask 130048
        %v3127 = vsel %vm3125, %v3122, 0
        %3129 = vmatprep.subr.mxu0 0.0
        %3130 = vmatpush1.msra.mxu0 %v3123
        %3131 = vmatprep.subr.mxu0 0.0
        %3132 = vmatpush1.msra.mxu0 %v3124
        %3133 = vmatprep.subr.mxu0 0.0
        %3134 = vmatpush1.msra.mxu0 0.0
        %3135 = vmatprep.subr.mxu0 0.0
        %3136 = vmatpush1.msra.mxu0 0.0
        %3137 = vmatprep.subr.mxu0 0.0
        %3138 = vmatpush1.msra.mxu0 0.0
        %3139 = vmatprep.subr.mxu0 0.0
        %3140 = vmatpush1.msra.mxu0 0.0
        %3141 = vmatprep.subr.mxu0 0.0
        %3142 = vmatpush1.msra.mxu0 0.0
        %3143 = vmatprep.subr.mxu0 0.0
        %3144 = vmatpush1.msra.mxu0 0.0
        %3145 = vmatprep.subr.mxu0 0.0
        %3146 = vmatpush1.msra.mxu0 0.0
        %3147 = vmatprep.subr.mxu0 0.0
        %3148 = vmatpush1.msra.mxu0 0.0
        %3149 = vmatprep.subr.mxu0 0.0
        %3150 = vmatpush1.msra.mxu0 0.0
        %3151 = vmatprep.subr.mxu0 0.0
        %3152 = vmatpush1.msra.mxu0 0.0
        %3153 = vmatprep.subr.mxu0 0.0
        %3154 = vmatpush1.msra.mxu0 0.0
        %3155 = vmatprep.subr.mxu0 0.0
        %3156 = vmatpush1.msra.mxu0 0.0
        %3157 = vmatprep.subr.mxu0 0.0
        %3158 = vmatpush1.msra.mxu0 0.0
        %3159 = vmatprep.subr.mxu0 0.0
        %3160 = vmatpush1.msra.mxu0 0.0
        %3161 = vmatprep.subr.mxu0 0.0
        %3162 = vmatpush1.msra.mxu0 0.0
        %3163 = vmatprep.subr.mxu0 0.0
        %3164 = vmatpush1.msra.mxu0 0.0
        %3165 = vmatprep.subr.mxu0 0.0
        %3166 = vmatpush1.msra.mxu0 0.0
        %3167 = vmatprep.subr.mxu0 0.0
        %3168 = vmatpush1.msra.mxu0 0.0
        %3169 = vmatprep.subr.mxu0 0.0
        %3170 = vmatpush1.msra.mxu0 0.0
        %3171 = vmatprep.subr.mxu0 0.0
        %3172 = vmatpush1.msra.mxu0 0.0
        %3173 = vmatprep.subr.mxu0 0.0
        %3174 = vmatpush1.msra.mxu0 0.0
        %3175 = vmatprep.subr.mxu0 0.0
        %3176 = vmatpush1.msra.mxu0 0.0
        %3177 = vmatprep.subr.mxu0 0.0
        %3178 = vmatpush1.msra.mxu0 0.0
        %3179 = vmatprep.subr.mxu0 0.0
        %3180 = vmatpush1.msra.mxu0 0.0
        %3181 = vmatprep.subr.mxu0 0.0
        %3182 = vmatpush1.msra.mxu0 0.0
        %3183 = vmatprep.subr.mxu0 0.0
        %3184 = vmatpush1.msra.mxu0 0.0
        %3185 = vmatprep.subr.mxu0 0.0
        %3186 = vmatpush1.msra.mxu0 0.0
        %3187 = vmatprep.subr.mxu0 0.0
        %3188 = vmatpush1.msra.mxu0 0.0
        %3189 = vmatprep.subr.mxu0 0.0
        %3190 = vmatpush1.msra.mxu0 0.0
        %3191 = vmatprep.subr.mxu0 0.0
        %3192 = vmatpush1.msra.mxu0 0.0
        %3193 = vmatprep.mubr.f32.mxu0 0.0
        %3194 = vmatmul.mubr.f32.gmra.mrb[0].mxu0 %v3127
        %v3195 = vpop.f32.mrb[0].mxu0
        %v3196 = vadd.f32 0.0, %v3195
        %v3197 = vpop.f32.mrb[0].mxu0
        %3198 = vdwg.mxu0
        %v3199 = vld [vmem:[%s15] sm:$0x3]
        %v3200 = vld [vmem:[%s17] sm:$0xff]
        %v3201 = vld [vmem:[%s17 + $0x8] sm:$0xff]
        %v3203 = vsel %vm3125, %v3199, 0
        %3205 = vmatprep.subr.mxu0 0.0
        %3206 = vmatpush1.msra.mxu0 %v3200
        %3207 = vmatprep.subr.mxu0 0.0
        %3208 = vmatpush1.msra.mxu0 %v3201
        %3209 = vmatprep.subr.mxu0 0.0
        %3210 = vmatpush1.msra.mxu0 0.0
        %3211 = vmatprep.subr.mxu0 0.0
        %3212 = vmatpush1.msra.mxu0 0.0
        %3213 = vmatprep.subr.mxu0 0.0
        %3214 = vmatpush1.msra.mxu0 0.0
        %3215 = vmatprep.subr.mxu0 0.0
        %3216 = vmatpush1.msra.mxu0 0.0
        %3217 = vmatprep.subr.mxu0 0.0
        %3218 = vmatpush1.msra.mxu0 0.0
        %3219 = vmatprep.subr.mxu0 0.0
        %3220 = vmatpush1.msra.mxu0 0.0
        %3221 = vmatprep.subr.mxu0 0.0
        %3222 = vmatpush1.msra.mxu0 0.0
        %3223 = vmatprep.subr.mxu0 0.0
        %3224 = vmatpush1.msra.mxu0 0.0
        %3225 = vmatprep.subr.mxu0 0.0
        %3226 = vmatpush1.msra.mxu0 0.0
        %3227 = vmatprep.subr.mxu0 0.0
        %3228 = vmatpush1.msra.mxu0 0.0
        %3229 = vmatprep.subr.mxu0 0.0
        %3230 = vmatpush1.msra.mxu0 0.0
        %3231 = vmatprep.subr.mxu0 0.0
        %3232 = vmatpush1.msra.mxu0 0.0
        %3233 = vmatprep.subr.mxu0 0.0
        %3234 = vmatpush1.msra.mxu0 0.0
        %3235 = vmatprep.subr.mxu0 0.0
        %3236 = vmatpush1.msra.mxu0 0.0
        %3237 = vmatprep.subr.mxu0 0.0
        %3238 = vmatpush1.msra.mxu0 0.0
        %3239 = vmatprep.subr.mxu0 0.0
        %3240 = vmatpush1.msra.mxu0 0.0
        %3241 = vmatprep.subr.mxu0 0.0
        %3242 = vmatpush1.msra.mxu0 0.0
        %3243 = vmatprep.subr.mxu0 0.0
        %3244 = vmatpush1.msra.mxu0 0.0
        %3245 = vmatprep.subr.mxu0 0.0
        %3246 = vmatpush1.msra.mxu0 0.0
        %3247 = vmatprep.subr.mxu0 0.0
        %3248 = vmatpush1.msra.mxu0 0.0
        %3249 = vmatprep.subr.mxu0 0.0
        %3250 = vmatpush1.msra.mxu0 0.0
        %3251 = vmatprep.subr.mxu0 0.0
        %3252 = vmatpush1.msra.mxu0 0.0
        %3253 = vmatprep.subr.mxu0 0.0
        %3254 = vmatpush1.msra.mxu0 0.0
        %3255 = vmatprep.subr.mxu0 0.0
        %3256 = vmatpush1.msra.mxu0 0.0
        %3257 = vmatprep.subr.mxu0 0.0
        %3258 = vmatpush1.msra.mxu0 0.0
        %3259 = vmatprep.subr.mxu0 0.0
        %3260 = vmatpush1.msra.mxu0 0.0
        %3261 = vmatprep.subr.mxu0 0.0
        %3262 = vmatpush1.msra.mxu0 0.0
        %3263 = vmatprep.subr.mxu0 0.0
        %3264 = vmatpush1.msra.mxu0 0.0
        %3265 = vmatprep.subr.mxu0 0.0
        %3266 = vmatpush1.msra.mxu0 0.0
        %3267 = vmatprep.subr.mxu0 0.0
        %3268 = vmatpush1.msra.mxu0 0.0
        %3269 = vmatprep.mubr.f32.mxu0 0.0
        %3270 = vmatmul.mubr.f32.gmra.mrb[0].mxu0 %v3203
        %v3271 = vpop.f32.mrb[0].mxu0
        %v3272 = vadd.f32 0.0, %v3271
        %v3273 = vpop.f32.mrb[0].mxu0
        %3274 = vdwg.mxu0
        %v3276 = vrot.slane %v3272, 6
        %vm3278 = vcmask 1041408
        %v3279 = vsel %vm3278, %v3196, %v3276
        %v3280 = vld [vmem:[%s18] sm:$0xff]
        %v3281 = vld [vmem:[%s18 + $0x8] sm:$0xff]
        %vm3282 = vcmask 31744
        %v3284 = vsel %vm3282, %v3280, 0
        %v3287 = vsel %vm3282, %v3281, 0
        %vm3289 = vcmask 1043456
        %v3291 = vsel %vm3289, %v3279, 0
        %3293 = vmatprep.subr.mxu0 0.0
        %3294 = vmatpush1.msra.mxu0 %v3291
        %3295 = vmatprep.subr.mxu0 0.0
        %3296 = vmatpush1.msra.mxu0 0.0
        %3297 = vmatprep.subr.mxu0 0.0
        %3298 = vmatpush1.msra.mxu0 0.0
        %3299 = vmatprep.subr.mxu0 0.0
        %3300 = vmatpush1.msra.mxu0 0.0
        %3301 = vmatprep.subr.mxu0 0.0
        %3302 = vmatpush1.msra.mxu0 0.0
        %3303 = vmatprep.subr.mxu0 0.0
        %3304 = vmatpush1.msra.mxu0 0.0
        %3305 = vmatprep.subr.mxu0 0.0
        %3306 = vmatpush1.msra.mxu0 0.0
        %3307 = vmatprep.subr.mxu0 0.0
        %3308 = vmatpush1.msra.mxu0 0.0
        %3309 = vmatprep.subr.mxu0 0.0
        %3310 = vmatpush1.msra.mxu0 0.0
        %3311 = vmatprep.subr.mxu0 0.0
        %3312 = vmatpush1.msra.mxu0 0.0
        %3313 = vmatprep.subr.mxu0 0.0
        %3314 = vmatpush1.msra.mxu0 0.0
        %3315 = vmatprep.subr.mxu0 0.0
        %3316 = vmatpush1.msra.mxu0 0.0
        %3317 = vmatprep.subr.mxu0 0.0
        %3318 = vmatpush1.msra.mxu0 0.0
        %3319 = vmatprep.subr.mxu0 0.0
        %3320 = vmatpush1.msra.mxu0 0.0
        %3321 = vmatprep.subr.mxu0 0.0
        %3322 = vmatpush1.msra.mxu0 0.0
        %3323 = vmatprep.subr.mxu0 0.0
        %3324 = vmatpush1.msra.mxu0 0.0
        %3325 = vmatprep.subr.mxu0 0.0
        %3326 = vmatpush1.msra.mxu0 0.0
        %3327 = vmatprep.subr.mxu0 0.0
        %3328 = vmatpush1.msra.mxu0 0.0
        %3329 = vmatprep.subr.mxu0 0.0
        %3330 = vmatpush1.msra.mxu0 0.0
        %3331 = vmatprep.subr.mxu0 0.0
        %3332 = vmatpush1.msra.mxu0 0.0
        %3333 = vmatprep.subr.mxu0 0.0
        %3334 = vmatpush1.msra.mxu0 0.0
        %3335 = vmatprep.subr.mxu0 0.0
        %3336 = vmatpush1.msra.mxu0 0.0
        %3337 = vmatprep.subr.mxu0 0.0
        %3338 = vmatpush1.msra.mxu0 0.0
        %3339 = vmatprep.subr.mxu0 0.0
        %3340 = vmatpush1.msra.mxu0 0.0
        %3341 = vmatprep.subr.mxu0 0.0
        %3342 = vmatpush1.msra.mxu0 0.0
        %3343 = vmatprep.subr.mxu0 0.0
        %3344 = vmatpush1.msra.mxu0 0.0
        %3345 = vmatprep.subr.mxu0 0.0
        %3346 = vmatpush1.msra.mxu0 0.0
        %3347 = vmatprep.subr.mxu0 0.0
        %3348 = vmatpush1.msra.mxu0 0.0
        %3349 = vmatprep.subr.mxu0 0.0
        %3350 = vmatpush1.msra.mxu0 0.0
        %3351 = vmatprep.subr.mxu0 0.0
        %3352 = vmatpush1.msra.mxu0 0.0
        %3353 = vmatprep.subr.mxu0 0.0
        %3354 = vmatpush1.msra.mxu0 0.0
        %3355 = vmatprep.subr.mxu0 0.0
        %3356 = vmatpush1.msra.mxu0 0.0
        %3357 = vmatprep.mubr.f32.mxu0 0.0
        %3358 = vmatmul.mubr.f32.gmra.mrb[0].mxu0 %v3284
        %v3359 = vpop.f32.mrb[0].mxu0
        %v3360 = vadd.f32 0.0, %v3359
        %v3361 = vpop.f32.mrb[0].mxu0
        %3362 = vmatprep.mubr.f32.mxu0 0.0
        %3363 = vmatmul.mubr.f32.gmra.mrb[0].mxu0 %v3287
        %v3364 = vpop.f32.mrb[0].mxu0
        %v3365 = vadd.f32 0.0, %v3364
        %v3366 = vpop.f32.mrb[0].mxu0
        %3367 = vdwg.mxu0
        %v3369 = vsel %vm901, %v3108, 0
        %v3372 = vsel %vm901, %v3109, 0
        %3374 = vmatprep.subr.mxu0 0.0
        %3375 = vmatpush1.msra.mxu0 %v3118
        %3376 = vmatprep.subr.mxu0 0.0
        %3377 = vmatpush1.msra.mxu0 %v3119
        %3378 = vmatprep.subr.mxu0 0.0
        %3379 = vmatpush1.msra.mxu0 %v3120
        %3380 = vmatprep.subr.mxu0 0.0
        %3381 = vmatpush1.msra.mxu0 %v3121
        %3382 = vmatprep.subr.mxu0 0.0
        %3383 = vmatpush1.msra.mxu0 0.0
        %3384 = vmatprep.subr.mxu0 0.0
        %3385 = vmatpush1.msra.mxu0 0.0
        %3386 = vmatprep.subr.mxu0 0.0
        %3387 = vmatpush1.msra.mxu0 0.0
        %3388 = vmatprep.subr.mxu0 0.0
        %3389 = vmatpush1.msra.mxu0 0.0
        %3390 = vmatprep.subr.mxu0 0.0
        %3391 = vmatpush1.msra.mxu0 0.0
        %3392 = vmatprep.subr.mxu0 0.0
        %3393 = vmatpush1.msra.mxu0 0.0
        %3394 = vmatprep.subr.mxu0 0.0
        %3395 = vmatpush1.msra.mxu0 0.0
        %3396 = vmatprep.subr.mxu0 0.0
        %3397 = vmatpush1.msra.mxu0 0.0
        %3398 = vmatprep.subr.mxu0 0.0
        %3399 = vmatpush1.msra.mxu0 0.0
        %3400 = vmatprep.subr.mxu0 0.0
        %3401 = vmatpush1.msra.mxu0 0.0
        %3402 = vmatprep.subr.mxu0 0.0
        %3403 = vmatpush1.msra.mxu0 0.0
        %3404 = vmatprep.subr.mxu0 0.0
        %3405 = vmatpush1.msra.mxu0 0.0
        %3406 = vmatprep.subr.mxu0 0.0
        %3407 = vmatpush1.msra.mxu0 0.0
        %3408 = vmatprep.subr.mxu0 0.0
        %3409 = vmatpush1.msra.mxu0 0.0
        %3410 = vmatprep.subr.mxu0 0.0
        %3411 = vmatpush1.msra.mxu0 0.0
        %3412 = vmatprep.subr.mxu0 0.0
        %3413 = vmatpush1.msra.mxu0 0.0
        %3414 = vmatprep.subr.mxu0 0.0
        %3415 = vmatpush1.msra.mxu0 0.0
        %3416 = vmatprep.subr.mxu0 0.0
        %3417 = vmatpush1.msra.mxu0 0.0
        %3418 = vmatprep.subr.mxu0 0.0
        %3419 = vmatpush1.msra.mxu0 0.0
        %3420 = vmatprep.subr.mxu0 0.0
        %3421 = vmatpush1.msra.mxu0 0.0
        %3422 = vmatprep.subr.mxu0 0.0
        %3423 = vmatpush1.msra.mxu0 0.0
        %3424 = vmatprep.subr.mxu0 0.0
        %3425 = vmatpush1.msra.mxu0 0.0
        %3426 = vmatprep.subr.mxu0 0.0
        %3427 = vmatpush1.msra.mxu0 0.0
        %3428 = vmatprep.subr.mxu0 0.0
        %3429 = vmatpush1.msra.mxu0 0.0
        %3430 = vmatprep.subr.mxu0 0.0
        %3431 = vmatpush1.msra.mxu0 0.0
        %3432 = vmatprep.subr.mxu0 0.0
        %3433 = vmatpush1.msra.mxu0 0.0
        %3434 = vmatprep.subr.mxu0 0.0
        %3435 = vmatpush1.msra.mxu0 0.0
        %3436 = vmatprep.subr.mxu0 0.0
        %3437 = vmatpush1.msra.mxu0 0.0
        %3438 = vmatprep.mubr.f32.mxu0 0.0
        %3439 = vmatmul.mubr.f32.gmra.mrb[0].mxu0 %v3369
        %v3440 = vpop.f32.mrb[0].mxu0
        %v3441 = vadd.f32 %v3360, %v3440
        %v3442 = vpop.f32.mrb[0].mxu0
        %3443 = vmatprep.mubr.f32.mxu0 0.0
        %3444 = vmatmul.mubr.f32.gmra.mrb[0].mxu0 %v3372
        %v3445 = vpop.f32.mrb[0].mxu0
        %v3446 = vadd.f32 %v3365, %v3445
        %v3447 = vpop.f32.mrb[0].mxu0
        %3448 = vdwg.mxu0
        %3449 = vst [vmem:[%s20] sm:$0xff] %v3441
        %3450 = vst [vmem:[%s20 + $0x8] sm:$0xff] %v3446
      $region104: #{elm_forward.1} parent=95 // pred_fallthru
        _
      %p3451 = scmp.lt.s32.totalorder %s32, 1
      %s3452 = scalar_select %p3451, %s32, 1
      %s3453 = smul.addr %s3452, 2
      %s3454 = smul.addr %s3453, 8
      %s3455 = scalar_lea.vmem %s19, %s3454
      // Predicated region
      $region105: #{elm_forward.1} parent=95 // pred_check
        %p3456 = pneg %p509
      $region106: #{elm_forward.1} parent=95 // pred_check_branch
        %3458 = sbr.rel (%p3456) target = $region108
      $region107: #{elm_forward.1} parent=95 // pred_region
        _
      $region108: #{elm_forward.1} parent=95 // pred_fallthru
        _
      // Predicated region
      $region109: #{elm_forward.1} parent=95 // pred_check
        %p3459 = pneg %p530
      $region110: #{elm_forward.1} parent=95 // pred_check_branch
        %3461 = sbr.rel (%p3459) target = $region112
      $region111: #{elm_forward.1} parent=95 // pred_region
        _
      $region112: #{elm_forward.1} parent=95 // pred_fallthru
        _
      // Predicated region
      $region113: #{elm_forward.1} parent=95 // pred_check
        %p3462 = pneg %p530
      $region114: #{elm_forward.1} parent=95 // pred_check_branch
        %3464 = sbr.rel (%p3462) target = $region116
      $region115: #{elm_forward.1} parent=95 // pred_region
        _
      $region116: #{elm_forward.1} parent=95 // pred_fallthru
        _
    $region96: #{elm_forward.1} parent=5 // pred_fallthru
      _
    %p3465 = scmp.le.s32.totalorder 2, %s27
    // Predicated region
    $region117: #{elm_forward.1} parent=5 // pred_check
      %p3466 = pneg %p3465
    $region118: #{elm_forward.1} parent=5 // pred_check_branch
      %3468 = sbr.rel (%p3466) target = $region120
    $region119: #{elm_forward.1} parent=5 // pred_region
      %s3469 = ssub.s32 %s27, 2
      // Predicated region
      $region121: #{elm_forward.1} parent=119 // pred_check
        %p3470 = pneg %p515
      $region122: #{elm_forward.1} parent=119 // pred_check_branch
        %3472 = sbr.rel (%p3470) target = $region124
      $region123: #{elm_forward.1} parent=119 // pred_region
        %p3473 = scmp.lt.s32.totalorder %s33, 1
        %s3474 = scalar_select %p3473, %s33, 1
        %s3475 = smul.addr %s3474, 2
        %s3476 = smul.addr %s3475, 8
        %s3477 = scalar_lea.vmem %s19, %s3476
      $region124: #{elm_forward.1} parent=119 // pred_fallthru
        _
    $region120: #{elm_forward.1} parent=5 // pred_fallthru
      _
  $region6: #{elm_forward.1} parent=0 // loop_footer
    %s31 = sadd.s32 1, %s27
  $region7: #{elm_forward.1} parent=0 // loop_footer_branch
    %26 = sbr.rel target = $region3
  $region8: #{elm_forward.1} parent=0 // loop_exit
    _

</llo_original>
